<compile_context>
chip_gen: v7x
topology: tpu7x:2x2x1
jax: 0.10.0
libtpu: 0.0.40
codegen_flags: <defaults>
</compile_context>

<pallas_src>
import functools

import jax
import jax.numpy as jnp
from jax import lax
from jax.experimental import pallas as pl
from jax.experimental.pallas import tpu as pltpu

B_BLK = 8  # sequences per grid block (f32 sublane width)


def _round_up(x, m):
    return (x + m - 1) // m * m


# --------------------------- fused forward kernel ----------------------------
def _fused_lstm_mlp_kernel(*refs, num_layers, seq_len, batch_blk, hidden_p):
    S, B, Hp = seq_len, batch_blk, hidden_p
    n_in = 1 + 3 * num_layers + 4
    x_ref = refs[0]                                   # (S*B, I) bf16, time-major rows
    layer_refs = refs[1:1 + 3 * num_layers]           # (w_ih, w_hh, b) per layer
    w1_ref, b1_ref, w2_ref, b2_ref = refs[1 + 3 * num_layers:n_in]
    o_ref = refs[n_in]                                # (B, O_pad) f32
    seq_scrs = [refs[n_in + 1], refs[n_in + 2]]       # ping/pong (S*B, Hp) f32
    xg_scr = refs[n_in + 3]                           # (S*B, 4*Hp) f32

    h = None
    for layer in range(num_layers):
        w_ih = layer_refs[3 * layer][...]             # (in, 4Hp) bf16
        w_hh = layer_refs[3 * layer + 1][...]         # (Hp, 4Hp) bf16
        b = layer_refs[3 * layer + 2][...]            # (1, 4Hp) f32 = b_ih + b_hh

        # Non-recurrent input projection for ALL timesteps in one bf16 MXU
        # matmul with f32 accumulation (M = S*B), instead of S tiny matmuls.
        if layer == 0:
            inp = x_ref[...]                                        # bf16
        else:
            inp = seq_scrs[(layer - 1) % 2][...].astype(jnp.bfloat16)
        xg_scr[...] = (jnp.dot(inp, w_ih, preferred_element_type=jnp.float32)
                       + b)                           # (S*B, 4Hp) f32

        write_seq = layer < num_layers - 1            # last layer only needs h_T
        out_buf = seq_scrs[layer % 2]

        def step(t, carry, w_hh=w_hh, write_seq=write_seq, out_buf=out_buf):
            h, c = carry                              # (B, Hp) f32 vreg carries
            row = pl.multiple_of(t * B, 8)            # sublane-aligned slab
            gates = (xg_scr[pl.ds(row, B), :]
                     + jnp.dot(h.astype(jnp.bfloat16), w_hh,
                               preferred_element_type=jnp.float32))
            # Each gate slice is a full 128-lane block (Hp multiple of 128).
            i = jax.nn.sigmoid(gates[:, 0 * Hp:1 * Hp])
            f = jax.nn.sigmoid(gates[:, 1 * Hp:2 * Hp])
            g = jnp.tanh(gates[:, 2 * Hp:3 * Hp])
            o = jax.nn.sigmoid(gates[:, 3 * Hp:4 * Hp])
            c_new = f * c + i * g
            h_new = o * jnp.tanh(c_new)
            if write_seq:
                out_buf[pl.ds(row, B), :] = h_new     # aligned, lane-dense store
            return h_new, c_new

        # Bounded unroll: full LLO visibility at small S without vreg blowup
        # once S grows.
        h, _ = lax.fori_loop(
            0, S, step,
            (jnp.zeros((B, Hp), jnp.float32), jnp.zeros((B, Hp), jnp.float32)),
            unroll=min(S, 8))
        # TODO(synk): nn.LSTM inter-layer dropout is train-only; identity here.

    # ---- MLP head on h_T of the last layer (== lstm_out[:, -1, :]) ----
    hid = (jnp.dot(h.astype(jnp.bfloat16), w1_ref[...],
                   preferred_element_type=jnp.float32) + b1_ref[...])
    hid = jnp.maximum(hid, 0.0)        # ReLU; Dropout is identity in eval mode
    o_ref[...] = (jnp.dot(hid.astype(jnp.bfloat16), w2_ref[...],
                          preferred_element_type=jnp.float32) + b2_ref[...])


# ------------------------------- host wrapper ---------------------------------
def _pad_gates(w, H, Hp):
    """(rows, 4H) i|f|g|o -> (rows, 4Hp) with each gate block zero-padded."""
    rows = w.shape[0]
    w4 = w.reshape(rows, 4, H)
    w4 = jnp.pad(w4, ((0, 0), (0, 0), (0, Hp - H)))
    return w4.reshape(rows, 4 * Hp)


def build_kernel_params(params, lane=128):
    """Lane-pad H / head dims (zeros => exact math), cast weights to bf16."""
    layers = params["lstm_layers"]
    H = layers[0][1].shape[0]
    Hp = _round_up(H, lane)
    klayers = []
    for li, (w_ih, w_hh, b) in enumerate(layers):
        w_ih_p = _pad_gates(w_ih, H, Hp)
        if li > 0:                                   # input dim is H for layer>0
            w_ih_p = jnp.pad(w_ih_p, ((0, Hp - H), (0, 0)))
        w_hh_p = jnp.pad(_pad_gates(w_hh, H, Hp), ((0, Hp - H), (0, 0)))
        b_p = _pad_gates(b, H, Hp)
        klayers.append((w_ih_p.astype(jnp.bfloat16),
                        w_hh_p.astype(jnp.bfloat16),
                        b_p.astype(jnp.float32)))

    w1, b1, w2, b2 = params["w1"], params["b1"], params["w2"], params["b2"]
    hid, out = w1.shape[1], w2.shape[1]
    hid_p, out_p = _round_up(hid, lane), _round_up(out, lane)
    return {
        "lstm_layers": klayers,
        "w1": jnp.pad(w1, ((0, Hp - H), (0, hid_p - hid))).astype(jnp.bfloat16),
        "b1": jnp.pad(b1, ((0, 0), (0, hid_p - hid))),
        "w2": jnp.pad(w2, ((0, hid_p - hid), (0, out_p - out))).astype(jnp.bfloat16),
        "b2": jnp.pad(b2, ((0, 0), (0, out_p - out))),
    }


@functools.partial(jax.jit, static_argnames=("output_size",))
def lstm_model_forward(kparams, x_bsi, *, output_size):
    """x_bsi: (B, S, I) batch-first, like the PyTorch module."""
    B, S, I = x_bsi.shape
    layers = kparams["lstm_layers"]
    num_layers = len(layers)
    Hp = layers[0][1].shape[0]               # padded hidden (multiple of 128)
    out_p = kparams["w2"].shape[1]
    B_pad = _round_up(B, B_BLK)
    n_blk = B_pad // B_BLK

    # Pad batch, pack as (batch_block, time-major rows, I), cast to bf16.
    x = jnp.pad(x_bsi, ((0, B_pad - B), (0, 0), (0, 0)))
    x = (x.reshape(n_blk, B_BLK, S, I)
          .transpose(0, 2, 1, 3)
          .reshape(n_blk, S * B_BLK, I)
          .astype(jnp.bfloat16))

    flat_w = []
    for (w_ih, w_hh, b) in layers:
        flat_w += [w_ih, w_hh, b]
    flat_w += [kparams["w1"], kparams["b1"], kparams["w2"], kparams["b2"]]
    w_specs = [pl.BlockSpec(w.shape, lambda bb: (0, 0)) for w in flat_w]

    grid_spec = pltpu.PrefetchScalarGridSpec(
        num_scalar_prefetch=0,
        grid=(n_blk,),                                 # batch blocks (parallel)
        in_specs=[pl.BlockSpec((None, S * B_BLK, I), lambda bb: (bb, 0, 0))]
                 + w_specs,
        out_specs=pl.BlockSpec((None, B_BLK, out_p), lambda bb: (bb, 0, 0)),
        scratch_shapes=[
            pltpu.VMEM((S * B_BLK, Hp), jnp.float32),      # layer output (ping)
            pltpu.VMEM((S * B_BLK, Hp), jnp.float32),      # layer output (pong)
            pltpu.VMEM((S * B_BLK, 4 * Hp), jnp.float32),  # precomputed x @ W_ih
        ],
    )

    out = pl.pallas_call(
        functools.partial(_fused_lstm_mlp_kernel, num_layers=num_layers,
                          seq_len=S, batch_blk=B_BLK, hidden_p=Hp),
        out_shape=jax.ShapeDtypeStruct((n_blk, B_BLK, out_p), jnp.float32),
        grid_spec=grid_spec,
        compiler_params=pltpu.CompilerParams(
            dimension_semantics=("parallel",),         # engages 2nd TC on v7x
            vmem_limit_bytes=48 * 1024 * 1024,         # safe on v5e/v6e/v7x
        ),
    )(x, *flat_w)

    out = out.reshape(B_pad, out_p)
    return out[:B, :output_size]


# ------------------------- deterministic parameter init -----------------------
def init_params(key, input_size, hidden, num_layers, output_size):
    ks = jax.random.split(key, num_layers * 4 + 4)
    ki = iter(ks)
    lstm_layers = []
    bound = 1.0 / jnp.sqrt(hidden)
    for layer in range(num_layers):
        in_sz = input_size if layer == 0 else hidden
        w_ih = jax.random.uniform(next(ki), (in_sz, 4 * hidden), jnp.float32,
                                  -bound, bound)
        w_hh = jax.random.uniform(next(ki), (hidden, 4 * hidden), jnp.float32,
                                  -bound, bound)
        b_ih = jax.random.uniform(next(ki), (1, 4 * hidden), jnp.float32,
                                  -bound, bound)
        b_hh = jax.random.uniform(next(ki), (1, 4 * hidden), jnp.float32,
                                  -bound, bound)
        lstm_layers.append((w_ih, w_hh, b_ih + b_hh))
    b1_bound = 1.0 / jnp.sqrt(hidden)
    w1 = jax.random.uniform(next(ki), (hidden, 1000), jnp.float32,
                            -b1_bound, b1_bound)
    b1 = jax.random.uniform(next(ki), (1, 1000), jnp.float32,
                            -b1_bound, b1_bound)
    b2_bound = 1.0 / jnp.sqrt(1000.0)
    w2 = jax.random.uniform(next(ki), (1000, output_size), jnp.float32,
                            -b2_bound, b2_bound)
    b2 = jax.random.uniform(next(ki), (1, output_size), jnp.float32,
                            -b2_bound, b2_bound)
    return {"lstm_layers": lstm_layers, "w1": w1, "b1": b1, "w2": w2, "b2": b2}


# ------------------------------ pure-JAX reference -----------------------------
def reference_forward(params, x_bsi):
    B, S, _ = x_bsi.shape
    x = jnp.transpose(x_bsi, (1, 0, 2))
    for (w_ih, w_hh, b) in params["lstm_layers"]:
        H = w_hh.shape[0]
        h = jnp.zeros((B, H), jnp.float32)
        c = jnp.zeros((B, H), jnp.float32)
        ys = []
        for t in range(S):
            gates = x[t] @ w_ih + h @ w_hh + b
            i = jax.nn.sigmoid(gates[:, 0 * H:1 * H])
            f = jax.nn.sigmoid(gates[:, 1 * H:2 * H])
            g = jnp.tanh(gates[:, 2 * H:3 * H])
            o = jax.nn.sigmoid(gates[:, 3 * H:4 * H])
            c = f * c + i * g
            h = o * jnp.tanh(c)
            ys.append(h)
        x = jnp.stack(ys, axis=0)
    last = x[-1]
    hid = jnp.maximum(last @ params["w1"] + params["b1"], 0.0)
    return hid @ params["w2"] + params["b2"]


if __name__ == "__main__":
    B, S = 2, 8               # batch, sequence length
    INPUT_SIZE = 16
    HIDDEN = 32
    NUM_LAYERS = 2
    OUTPUT_SIZE = 10

    key = jax.random.PRNGKey(0)
    pkey, xkey = jax.random.split(key)
    params = init_params(pkey, INPUT_SIZE, HIDDEN, NUM_LAYERS, OUTPUT_SIZE)
    kparams = build_kernel_params(params)
    x = jax.random.normal(xkey, (B, S, INPUT_SIZE), jnp.float32)

    out = lstm_model_forward(kparams, x, output_size=OUTPUT_SIZE)
    out = jax.block_until_ready(out)

    ref = reference_forward(params, x)
    assert out.shape == (B, OUTPUT_SIZE), out.shape
    # bf16 weights/activations with f32 accumulation: looser tolerance vs f32 ref.
    assert jnp.allclose(out, ref, atol=2e-2, rtol=2e-2), \
        float(jnp.max(jnp.abs(out - ref)))

    print("KERNEL_OK")
</pallas_src>

<mosaic_0001>
module attributes {stable_mosaic.version = 11 : i64} {
  func.func @_fused_lstm_mlp_kernel(%arg0: i32, %arg1: memref<1x64x16xbf16, #tpu.memory_space<vmem>>, %arg2: memref<16x512xbf16, #tpu.memory_space<vmem>>, %arg3: memref<128x512xbf16, #tpu.memory_space<vmem>>, %arg4: memref<1x512xf32, #tpu.memory_space<vmem>>, %arg5: memref<128x512xbf16, #tpu.memory_space<vmem>>, %arg6: memref<128x512xbf16, #tpu.memory_space<vmem>>, %arg7: memref<1x512xf32, #tpu.memory_space<vmem>>, %arg8: memref<128x1024xbf16, #tpu.memory_space<vmem>>, %arg9: memref<1x1024xf32, #tpu.memory_space<vmem>>, %arg10: memref<1024x128xbf16, #tpu.memory_space<vmem>>, %arg11: memref<1x128xf32, #tpu.memory_space<vmem>>, %arg12: memref<1x8x128xf32, #tpu.memory_space<vmem>>, %arg13: memref<64x128xf32, #tpu.memory_space<vmem>>, %arg14: memref<64x128xf32, #tpu.memory_space<vmem>>, %arg15: memref<64x512xf32, #tpu.memory_space<vmem>>) attributes {dimension_semantics = [#tpu.dimension_semantics<parallel>], iteration_bounds = array<i64: 1>, scalar_prefetch = 0 : i64, scratch_operands = 3 : i64, tpu.core_type = #tpu.core_type<tc>, window_params = [{transform_indices = @transform_0, window_bounds = array<i64: 1, 64, 16>}, {pipeline_mode = #tpu.pipeline_mode<synchronous>, transform_indices = @transform_1, window_bounds = array<i64: 16, 512>}, {pipeline_mode = #tpu.pipeline_mode<synchronous>, transform_indices = @transform_2, window_bounds = array<i64: 128, 512>}, {pipeline_mode = #tpu.pipeline_mode<synchronous>, transform_indices = @transform_3, window_bounds = array<i64: 1, 512>}, {pipeline_mode = #tpu.pipeline_mode<synchronous>, transform_indices = @transform_4, window_bounds = array<i64: 128, 512>}, {pipeline_mode = #tpu.pipeline_mode<synchronous>, transform_indices = @transform_5, window_bounds = array<i64: 128, 512>}, {pipeline_mode = #tpu.pipeline_mode<synchronous>, transform_indices = @transform_6, window_bounds = array<i64: 1, 512>}, {pipeline_mode = #tpu.pipeline_mode<synchronous>, transform_indices = @transform_7, window_bounds = array<i64: 128, 1024>}, {pipeline_mode = #tpu.pipeline_mode<synchronous>, transform_indices = @transform_8, window_bounds = array<i64: 1, 1024>}, {pipeline_mode = #tpu.pipeline_mode<synchronous>, transform_indices = @transform_9, window_bounds = array<i64: 1024, 128>}, {pipeline_mode = #tpu.pipeline_mode<synchronous>, transform_indices = @transform_10, window_bounds = array<i64: 1, 128>}, {transform_indices = @transform_11, window_bounds = array<i64: 1, 8, 128>}]} {
    %c0 = arith.constant 0 : index
    %c0_0 = arith.constant 0 : index
    %0 = vector.load %arg2[%c0, %c0_0] : memref<16x512xbf16, #tpu.memory_space<vmem>>, vector<16x512xbf16>
    %c0_1 = arith.constant 0 : index
    %c0_2 = arith.constant 0 : index
    %1 = vector.load %arg3[%c0_1, %c0_2] : memref<128x512xbf16, #tpu.memory_space<vmem>>, vector<128x512xbf16>
    %c0_3 = arith.constant 0 : index
    %c0_4 = arith.constant 0 : index
    %2 = vector.load %arg4[%c0_3, %c0_4] : memref<1x512xf32, #tpu.memory_space<vmem>>, vector<1x512xf32>
    %c0_5 = arith.constant 0 : index
    %c0_6 = arith.constant 0 : index
    %c0_7 = arith.constant 0 : index
    %3 = vector.load %arg1[%c0_5, %c0_6, %c0_7] : memref<1x64x16xbf16, #tpu.memory_space<vmem>>, vector<1x64x16xbf16>
    %4 = vector.shape_cast %3 : vector<1x64x16xbf16> to vector<64x16xbf16>
    %cst = arith.constant dense<0.000000e+00> : vector<64x512xf32>
    %5 = tpu.matmul %4, %0, %cst {dimension_numbers = #tpu.dot_dimension_numbers<[1], [0], [0], [1], [0, 0, 1, 1], [], []>} : vector<64x16xbf16>, vector<16x512xbf16>, vector<64x512xf32> -> vector<64x512xf32>
    %6 = vector.broadcast %2 : vector<1x512xf32> to vector<64x512xf32>
    %7 = arith.addf %5, %6 : vector<64x512xf32>
    %c0_8 = arith.constant 0 : index
    %c0_9 = arith.constant 0 : index
    %8 = vector.load %arg15[%c0_8, %c0_9] : memref<64x512xf32, #tpu.memory_space<vmem>>, vector<64x512xf32>
    tpu.vector_store %arg15[%c0_8, %c0_9], %7 {strides = array<i32>} : memref<64x512xf32, #tpu.memory_space<vmem>>, vector<64x512xf32>,
    %cst_10 = arith.constant 0.000000e+00 : f32
    %9 = vector.broadcast %cst_10 : f32 to vector<8x128xf32>
    %cst_11 = arith.constant 0.000000e+00 : f32
    %10 = vector.broadcast %cst_11 : f32 to vector<8x128xf32>
    %c0_i32 = arith.constant 0 : i32
    %c8_i32 = arith.constant 8 : i32
    %11 = arith.muli %c0_i32, %c8_i32 : i32
    %12 = tpu.assume_multiple %11, 8 : i32
    %13 = arith.index_cast %12 : i32 to index
    %c0_12 = arith.constant 0 : index
    %14 = vector.load %arg15[%13, %c0_12] : memref<64x512xf32, #tpu.memory_space<vmem>>, vector<8x512xf32>
    %15 = arith.truncf %9 : vector<8x128xf32> to vector<8x128xbf16>
    %cst_13 = arith.constant dense<0.000000e+00> : vector<8x512xf32>
    %16 = tpu.matmul %15, %1, %cst_13 {dimension_numbers = #tpu.dot_dimension_numbers<[1], [0], [0], [1], [0, 0, 1, 1], [], []>} : vector<8x128xbf16>, vector<128x512xbf16>, vector<8x512xf32> -> vector<8x512xf32>
    %17 = arith.addf %14, %16 : vector<8x512xf32>
    %18 = vector.extract_strided_slice %17 {offsets = [0, 0], sizes = [8, 128], strides = [1, 1]} : vector<8x512xf32> to vector<8x128xf32>
    %19 = arith.negf %18 : vector<8x128xf32>
    %20 = math.exp %19 : vector<8x128xf32>
    %cst_14 = arith.constant 1.000000e+00 : f32
    %21 = vector.broadcast %cst_14 : f32 to vector<8x128xf32>
    %22 = arith.addf %21, %20 : vector<8x128xf32>
    %23 = arith.divf %21, %22 : vector<8x128xf32>
    %24 = vector.extract_strided_slice %17 {offsets = [0, 128], sizes = [8, 128], strides = [1, 1]} : vector<8x512xf32> to vector<8x128xf32>
    %25 = arith.negf %24 : vector<8x128xf32>
    %26 = math.exp %25 : vector<8x128xf32>
    %cst_15 = arith.constant 1.000000e+00 : f32
    %27 = vector.broadcast %cst_15 : f32 to vector<8x128xf32>
    %28 = arith.addf %27, %26 : vector<8x128xf32>
    %29 = arith.divf %27, %28 : vector<8x128xf32>
    %30 = vector.extract_strided_slice %17 {offsets = [0, 256], sizes = [8, 128], strides = [1, 1]} : vector<8x512xf32> to vector<8x128xf32>
    %31 = math.tanh %30 : vector<8x128xf32>
    %32 = vector.extract_strided_slice %17 {offsets = [0, 384], sizes = [8, 128], strides = [1, 1]} : vector<8x512xf32> to vector<8x128xf32>
    %33 = arith.negf %32 : vector<8x128xf32>
    %34 = math.exp %33 : vector<8x128xf32>
    %cst_16 = arith.constant 1.000000e+00 : f32
    %35 = vector.broadcast %cst_16 : f32 to vector<8x128xf32>
    %36 = arith.addf %35, %34 : vector<8x128xf32>
    %37 = arith.divf %35, %36 : vector<8x128xf32>
    %38 = arith.mulf %29, %10 : vector<8x128xf32>
    %39 = arith.mulf %23, %31 : vector<8x128xf32>
    %40 = arith.addf %38, %39 : vector<8x128xf32>
    %41 = math.tanh %40 : vector<8x128xf32>
    %42 = arith.mulf %37, %41 : vector<8x128xf32>
    %43 = arith.index_cast %12 : i32 to index
    %c0_17 = arith.constant 0 : index
    %44 = vector.load %arg13[%43, %c0_17] : memref<64x128xf32, #tpu.memory_space<vmem>>, vector<8x128xf32>
    tpu.vector_store %arg13[%43, %c0_17], %42 {strides = array<i32>} : memref<64x128xf32, #tpu.memory_space<vmem>>, vector<8x128xf32>,
    %c1_i32 = arith.constant 1 : i32
    %c8_i32_18 = arith.constant 8 : i32
    %45 = arith.muli %c1_i32, %c8_i32_18 : i32
    %46 = tpu.assume_multiple %45, 8 : i32
    %47 = arith.index_cast %46 : i32 to index
    %c0_19 = arith.constant 0 : index
    %48 = vector.load %arg15[%47, %c0_19] : memref<64x512xf32, #tpu.memory_space<vmem>>, vector<8x512xf32>
    %49 = arith.truncf %42 : vector<8x128xf32> to vector<8x128xbf16>
    %cst_20 = arith.constant dense<0.000000e+00> : vector<8x512xf32>
    %50 = tpu.matmul %49, %1, %cst_20 {dimension_numbers = #tpu.dot_dimension_numbers<[1], [0], [0], [1], [0, 0, 1, 1], [], []>} : vector<8x128xbf16>, vector<128x512xbf16>, vector<8x512xf32> -> vector<8x512xf32>
    %51 = arith.addf %48, %50 : vector<8x512xf32>
    %52 = vector.extract_strided_slice %51 {offsets = [0, 0], sizes = [8, 128], strides = [1, 1]} : vector<8x512xf32> to vector<8x128xf32>
    %53 = arith.negf %52 : vector<8x128xf32>
    %54 = math.exp %53 : vector<8x128xf32>
    %cst_21 = arith.constant 1.000000e+00 : f32
    %55 = vector.broadcast %cst_21 : f32 to vector<8x128xf32>
    %56 = arith.addf %55, %54 : vector<8x128xf32>
    %57 = arith.divf %55, %56 : vector<8x128xf32>
    %58 = vector.extract_strided_slice %51 {offsets = [0, 128], sizes = [8, 128], strides = [1, 1]} : vector<8x512xf32> to vector<8x128xf32>
    %59 = arith.negf %58 : vector<8x128xf32>
    %60 = math.exp %59 : vector<8x128xf32>
    %cst_22 = arith.constant 1.000000e+00 : f32
    %61 = vector.broadcast %cst_22 : f32 to vector<8x128xf32>
    %62 = arith.addf %61, %60 : vector<8x128xf32>
    %63 = arith.divf %61, %62 : vector<8x128xf32>
    %64 = vector.extract_strided_slice %51 {offsets = [0, 256], sizes = [8, 128], strides = [1, 1]} : vector<8x512xf32> to vector<8x128xf32>
    %65 = math.tanh %64 : vector<8x128xf32>
    %66 = vector.extract_strided_slice %51 {offsets = [0, 384], sizes = [8, 128], strides = [1, 1]} : vector<8x512xf32> to vector<8x128xf32>
    %67 = arith.negf %66 : vector<8x128xf32>
    %68 = math.exp %67 : vector<8x128xf32>
    %cst_23 = arith.constant 1.000000e+00 : f32
    %69 = vector.broadcast %cst_23 : f32 to vector<8x128xf32>
    %70 = arith.addf %69, %68 : vector<8x128xf32>
    %71 = arith.divf %69, %70 : vector<8x128xf32>
    %72 = arith.mulf %63, %40 : vector<8x128xf32>
    %73 = arith.mulf %57, %65 : vector<8x128xf32>
    %74 = arith.addf %72, %73 : vector<8x128xf32>
    %75 = math.tanh %74 : vector<8x128xf32>
    %76 = arith.mulf %71, %75 : vector<8x128xf32>
    %77 = arith.index_cast %46 : i32 to index
    %c0_24 = arith.constant 0 : index
    %78 = vector.load %arg13[%77, %c0_24] : memref<64x128xf32, #tpu.memory_space<vmem>>, vector<8x128xf32>
    tpu.vector_store %arg13[%77, %c0_24], %76 {strides = array<i32>} : memref<64x128xf32, #tpu.memory_space<vmem>>, vector<8x128xf32>,
    %c2_i32 = arith.constant 2 : i32
    %c8_i32_25 = arith.constant 8 : i32
    %79 = arith.muli %c2_i32, %c8_i32_25 : i32
    %80 = tpu.assume_multiple %79, 8 : i32
    %81 = arith.index_cast %80 : i32 to index
    %c0_26 = arith.constant 0 : index
    %82 = vector.load %arg15[%81, %c0_26] : memref<64x512xf32, #tpu.memory_space<vmem>>, vector<8x512xf32>
    %83 = arith.truncf %76 : vector<8x128xf32> to vector<8x128xbf16>
    %cst_27 = arith.constant dense<0.000000e+00> : vector<8x512xf32>
    %84 = tpu.matmul %83, %1, %cst_27 {dimension_numbers = #tpu.dot_dimension_numbers<[1], [0], [0], [1], [0, 0, 1, 1], [], []>} : vector<8x128xbf16>, vector<128x512xbf16>, vector<8x512xf32> -> vector<8x512xf32>
    %85 = arith.addf %82, %84 : vector<8x512xf32>
    %86 = vector.extract_strided_slice %85 {offsets = [0, 0], sizes = [8, 128], strides = [1, 1]} : vector<8x512xf32> to vector<8x128xf32>
    %87 = arith.negf %86 : vector<8x128xf32>
    %88 = math.exp %87 : vector<8x128xf32>
    %cst_28 = arith.constant 1.000000e+00 : f32
    %89 = vector.broadcast %cst_28 : f32 to vector<8x128xf32>
    %90 = arith.addf %89, %88 : vector<8x128xf32>
    %91 = arith.divf %89, %90 : vector<8x128xf32>
    %92 = vector.extract_strided_slice %85 {offsets = [0, 128], sizes = [8, 128], strides = [1, 1]} : vector<8x512xf32> to vector<8x128xf32>
    %93 = arith.negf %92 : vector<8x128xf32>
    %94 = math.exp %93 : vector<8x128xf32>
    %cst_29 = arith.constant 1.000000e+00 : f32
    %95 = vector.broadcast %cst_29 : f32 to vector<8x128xf32>
    %96 = arith.addf %95, %94 : vector<8x128xf32>
    %97 = arith.divf %95, %96 : vector<8x128xf32>
    %98 = vector.extract_strided_slice %85 {offsets = [0, 256], sizes = [8, 128], strides = [1, 1]} : vector<8x512xf32> to vector<8x128xf32>
    %99 = math.tanh %98 : vector<8x128xf32>
    %100 = vector.extract_strided_slice %85 {offsets = [0, 384], sizes = [8, 128], strides = [1, 1]} : vector<8x512xf32> to vector<8x128xf32>
    %101 = arith.negf %100 : vector<8x128xf32>
    %102 = math.exp %101 : vector<8x128xf32>
    %cst_30 = arith.constant 1.000000e+00 : f32
    %103 = vector.broadcast %cst_30 : f32 to vector<8x128xf32>
    %104 = arith.addf %103, %102 : vector<8x128xf32>
    %105 = arith.divf %103, %104 : vector<8x128xf32>
    %106 = arith.mulf %97, %74 : vector<8x128xf32>
    %107 = arith.mulf %91, %99 : vector<8x128xf32>
    %108 = arith.addf %106, %107 : vector<8x128xf32>
    %109 = math.tanh %108 : vector<8x128xf32>
    %110 = arith.mulf %105, %109 : vector<8x128xf32>
    %111 = arith.index_cast %80 : i32 to index
    %c0_31 = arith.constant 0 : index
    %112 = vector.load %arg13[%111, %c0_31] : memref<64x128xf32, #tpu.memory_space<vmem>>, vector<8x128xf32>
    tpu.vector_store %arg13[%111, %c0_31], %110 {strides = array<i32>} : memref<64x128xf32, #tpu.memory_space<vmem>>, vector<8x128xf32>,
    %c3_i32 = arith.constant 3 : i32
    %c8_i32_32 = arith.constant 8 : i32
    %113 = arith.muli %c3_i32, %c8_i32_32 : i32
    %114 = tpu.assume_multiple %113, 8 : i32
    %115 = arith.index_cast %114 : i32 to index
    %c0_33 = arith.constant 0 : index
    %116 = vector.load %arg15[%115, %c0_33] : memref<64x512xf32, #tpu.memory_space<vmem>>, vector<8x512xf32>
    %117 = arith.truncf %110 : vector<8x128xf32> to vector<8x128xbf16>
    %cst_34 = arith.constant dense<0.000000e+00> : vector<8x512xf32>
    %118 = tpu.matmul %117, %1, %cst_34 {dimension_numbers = #tpu.dot_dimension_numbers<[1], [0], [0], [1], [0, 0, 1, 1], [], []>} : vector<8x128xbf16>, vector<128x512xbf16>, vector<8x512xf32> -> vector<8x512xf32>
    %119 = arith.addf %116, %118 : vector<8x512xf32>
    %120 = vector.extract_strided_slice %119 {offsets = [0, 0], sizes = [8, 128], strides = [1, 1]} : vector<8x512xf32> to vector<8x128xf32>
    %121 = arith.negf %120 : vector<8x128xf32>
    %122 = math.exp %121 : vector<8x128xf32>
    %cst_35 = arith.constant 1.000000e+00 : f32
    %123 = vector.broadcast %cst_35 : f32 to vector<8x128xf32>
    %124 = arith.addf %123, %122 : vector<8x128xf32>
    %125 = arith.divf %123, %124 : vector<8x128xf32>
    %126 = vector.extract_strided_slice %119 {offsets = [0, 128], sizes = [8, 128], strides = [1, 1]} : vector<8x512xf32> to vector<8x128xf32>
    %127 = arith.negf %126 : vector<8x128xf32>
    %128 = math.exp %127 : vector<8x128xf32>
    %cst_36 = arith.constant 1.000000e+00 : f32
    %129 = vector.broadcast %cst_36 : f32 to vector<8x128xf32>
    %130 = arith.addf %129, %128 : vector<8x128xf32>
    %131 = arith.divf %129, %130 : vector<8x128xf32>
    %132 = vector.extract_strided_slice %119 {offsets = [0, 256], sizes = [8, 128], strides = [1, 1]} : vector<8x512xf32> to vector<8x128xf32>
    %133 = math.tanh %132 : vector<8x128xf32>
    %134 = vector.extract_strided_slice %119 {offsets = [0, 384], sizes = [8, 128], strides = [1, 1]} : vector<8x512xf32> to vector<8x128xf32>
    %135 = arith.negf %134 : vector<8x128xf32>
    %136 = math.exp %135 : vector<8x128xf32>
    %cst_37 = arith.constant 1.000000e+00 : f32
    %137 = vector.broadcast %cst_37 : f32 to vector<8x128xf32>
    %138 = arith.addf %137, %136 : vector<8x128xf32>
    %139 = arith.divf %137, %138 : vector<8x128xf32>
    %140 = arith.mulf %131, %108 : vector<8x128xf32>
    %141 = arith.mulf %125, %133 : vector<8x128xf32>
    %142 = arith.addf %140, %141 : vector<8x128xf32>
    %143 = math.tanh %142 : vector<8x128xf32>
    %144 = arith.mulf %139, %143 : vector<8x128xf32>
    %145 = arith.index_cast %114 : i32 to index
    %c0_38 = arith.constant 0 : index
    %146 = vector.load %arg13[%145, %c0_38] : memref<64x128xf32, #tpu.memory_space<vmem>>, vector<8x128xf32>
    tpu.vector_store %arg13[%145, %c0_38], %144 {strides = array<i32>} : memref<64x128xf32, #tpu.memory_space<vmem>>, vector<8x128xf32>,
    %c4_i32 = arith.constant 4 : i32
    %c8_i32_39 = arith.constant 8 : i32
    %147 = arith.muli %c4_i32, %c8_i32_39 : i32
    %148 = tpu.assume_multiple %147, 8 : i32
    %149 = arith.index_cast %148 : i32 to index
    %c0_40 = arith.constant 0 : index
    %150 = vector.load %arg15[%149, %c0_40] : memref<64x512xf32, #tpu.memory_space<vmem>>, vector<8x512xf32>
    %151 = arith.truncf %144 : vector<8x128xf32> to vector<8x128xbf16>
    %cst_41 = arith.constant dense<0.000000e+00> : vector<8x512xf32>
    %152 = tpu.matmul %151, %1, %cst_41 {dimension_numbers = #tpu.dot_dimension_numbers<[1], [0], [0], [1], [0, 0, 1, 1], [], []>} : vector<8x128xbf16>, vector<128x512xbf16>, vector<8x512xf32> -> vector<8x512xf32>
    %153 = arith.addf %150, %152 : vector<8x512xf32>
    %154 = vector.extract_strided_slice %153 {offsets = [0, 0], sizes = [8, 128], strides = [1, 1]} : vector<8x512xf32> to vector<8x128xf32>
    %155 = arith.negf %154 : vector<8x128xf32>
    %156 = math.exp %155 : vector<8x128xf32>
    %cst_42 = arith.constant 1.000000e+00 : f32
    %157 = vector.broadcast %cst_42 : f32 to vector<8x128xf32>
    %158 = arith.addf %157, %156 : vector<8x128xf32>
    %159 = arith.divf %157, %158 : vector<8x128xf32>
    %160 = vector.extract_strided_slice %153 {offsets = [0, 128], sizes = [8, 128], strides = [1, 1]} : vector<8x512xf32> to vector<8x128xf32>
    %161 = arith.negf %160 : vector<8x128xf32>
    %162 = math.exp %161 : vector<8x128xf32>
    %cst_43 = arith.constant 1.000000e+00 : f32
    %163 = vector.broadcast %cst_43 : f32 to vector<8x128xf32>
    %164 = arith.addf %163, %162 : vector<8x128xf32>
    %165 = arith.divf %163, %164 : vector<8x128xf32>
    %166 = vector.extract_strided_slice %153 {offsets = [0, 256], sizes = [8, 128], strides = [1, 1]} : vector<8x512xf32> to vector<8x128xf32>
    %167 = math.tanh %166 : vector<8x128xf32>
    %168 = vector.extract_strided_slice %153 {offsets = [0, 384], sizes = [8, 128], strides = [1, 1]} : vector<8x512xf32> to vector<8x128xf32>
    %169 = arith.negf %168 : vector<8x128xf32>
    %170 = math.exp %169 : vector<8x128xf32>
    %cst_44 = arith.constant 1.000000e+00 : f32
    %171 = vector.broadcast %cst_44 : f32 to vector<8x128xf32>
    %172 = arith.addf %171, %170 : vector<8x128xf32>
    %173 = arith.divf %171, %172 : vector<8x128xf32>
    %174 = arith.mulf %165, %142 : vector<8x128xf32>
    %175 = arith.mulf %159, %167 : vector<8x128xf32>
    %176 = arith.addf %174, %175 : vector<8x128xf32>
    %177 = math.tanh %176 : vector<8x128xf32>
    %178 = arith.mulf %173, %177 : vector<8x128xf32>
    %179 = arith.index_cast %148 : i32 to index
    %c0_45 = arith.constant 0 : index
    %180 = vector.load %arg13[%179, %c0_45] : memref<64x128xf32, #tpu.memory_space<vmem>>, vector<8x128xf32>
    tpu.vector_store %arg13[%179, %c0_45], %178 {strides = array<i32>} : memref<64x128xf32, #tpu.memory_space<vmem>>, vector<8x128xf32>,
    %c5_i32 = arith.constant 5 : i32
    %c8_i32_46 = arith.constant 8 : i32
    %181 = arith.muli %c5_i32, %c8_i32_46 : i32
    %182 = tpu.assume_multiple %181, 8 : i32
    %183 = arith.index_cast %182 : i32 to index
    %c0_47 = arith.constant 0 : index
    %184 = vector.load %arg15[%183, %c0_47] : memref<64x512xf32, #tpu.memory_space<vmem>>, vector<8x512xf32>
    %185 = arith.truncf %178 : vector<8x128xf32> to vector<8x128xbf16>
    %cst_48 = arith.constant dense<0.000000e+00> : vector<8x512xf32>
    %186 = tpu.matmul %185, %1, %cst_48 {dimension_numbers = #tpu.dot_dimension_numbers<[1], [0], [0], [1], [0, 0, 1, 1], [], []>} : vector<8x128xbf16>, vector<128x512xbf16>, vector<8x512xf32> -> vector<8x512xf32>
    %187 = arith.addf %184, %186 : vector<8x512xf32>
    %188 = vector.extract_strided_slice %187 {offsets = [0, 0], sizes = [8, 128], strides = [1, 1]} : vector<8x512xf32> to vector<8x128xf32>
    %189 = arith.negf %188 : vector<8x128xf32>
    %190 = math.exp %189 : vector<8x128xf32>
    %cst_49 = arith.constant 1.000000e+00 : f32
    %191 = vector.broadcast %cst_49 : f32 to vector<8x128xf32>
    %192 = arith.addf %191, %190 : vector<8x128xf32>
    %193 = arith.divf %191, %192 : vector<8x128xf32>
    %194 = vector.extract_strided_slice %187 {offsets = [0, 128], sizes = [8, 128], strides = [1, 1]} : vector<8x512xf32> to vector<8x128xf32>
    %195 = arith.negf %194 : vector<8x128xf32>
    %196 = math.exp %195 : vector<8x128xf32>
    %cst_50 = arith.constant 1.000000e+00 : f32
    %197 = vector.broadcast %cst_50 : f32 to vector<8x128xf32>
    %198 = arith.addf %197, %196 : vector<8x128xf32>
    %199 = arith.divf %197, %198 : vector<8x128xf32>
    %200 = vector.extract_strided_slice %187 {offsets = [0, 256], sizes = [8, 128], strides = [1, 1]} : vector<8x512xf32> to vector<8x128xf32>
    %201 = math.tanh %200 : vector<8x128xf32>
    %202 = vector.extract_strided_slice %187 {offsets = [0, 384], sizes = [8, 128], strides = [1, 1]} : vector<8x512xf32> to vector<8x128xf32>
    %203 = arith.negf %202 : vector<8x128xf32>
    %204 = math.exp %203 : vector<8x128xf32>
    %cst_51 = arith.constant 1.000000e+00 : f32
    %205 = vector.broadcast %cst_51 : f32 to vector<8x128xf32>
    %206 = arith.addf %205, %204 : vector<8x128xf32>
    %207 = arith.divf %205, %206 : vector<8x128xf32>
    %208 = arith.mulf %199, %176 : vector<8x128xf32>
    %209 = arith.mulf %193, %201 : vector<8x128xf32>
    %210 = arith.addf %208, %209 : vector<8x128xf32>
    %211 = math.tanh %210 : vector<8x128xf32>
    %212 = arith.mulf %207, %211 : vector<8x128xf32>
    %213 = arith.index_cast %182 : i32 to index
    %c0_52 = arith.constant 0 : index
    %214 = vector.load %arg13[%213, %c0_52] : memref<64x128xf32, #tpu.memory_space<vmem>>, vector<8x128xf32>
    tpu.vector_store %arg13[%213, %c0_52], %212 {strides = array<i32>} : memref<64x128xf32, #tpu.memory_space<vmem>>, vector<8x128xf32>,
    %c6_i32 = arith.constant 6 : i32
    %c8_i32_53 = arith.constant 8 : i32
    %215 = arith.muli %c6_i32, %c8_i32_53 : i32
    %216 = tpu.assume_multiple %215, 8 : i32
    %217 = arith.index_cast %216 : i32 to index
    %c0_54 = arith.constant 0 : index
    %218 = vector.load %arg15[%217, %c0_54] : memref<64x512xf32, #tpu.memory_space<vmem>>, vector<8x512xf32>
    %219 = arith.truncf %212 : vector<8x128xf32> to vector<8x128xbf16>
    %cst_55 = arith.constant dense<0.000000e+00> : vector<8x512xf32>
    %220 = tpu.matmul %219, %1, %cst_55 {dimension_numbers = #tpu.dot_dimension_numbers<[1], [0], [0], [1], [0, 0, 1, 1], [], []>} : vector<8x128xbf16>, vector<128x512xbf16>, vector<8x512xf32> -> vector<8x512xf32>
    %221 = arith.addf %218, %220 : vector<8x512xf32>
    %222 = vector.extract_strided_slice %221 {offsets = [0, 0], sizes = [8, 128], strides = [1, 1]} : vector<8x512xf32> to vector<8x128xf32>
    %223 = arith.negf %222 : vector<8x128xf32>
    %224 = math.exp %223 : vector<8x128xf32>
    %cst_56 = arith.constant 1.000000e+00 : f32
    %225 = vector.broadcast %cst_56 : f32 to vector<8x128xf32>
    %226 = arith.addf %225, %224 : vector<8x128xf32>
    %227 = arith.divf %225, %226 : vector<8x128xf32>
    %228 = vector.extract_strided_slice %221 {offsets = [0, 128], sizes = [8, 128], strides = [1, 1]} : vector<8x512xf32> to vector<8x128xf32>
    %229 = arith.negf %228 : vector<8x128xf32>
    %230 = math.exp %229 : vector<8x128xf32>
    %cst_57 = arith.constant 1.000000e+00 : f32
    %231 = vector.broadcast %cst_57 : f32 to vector<8x128xf32>
    %232 = arith.addf %231, %230 : vector<8x128xf32>
    %233 = arith.divf %231, %232 : vector<8x128xf32>
    %234 = vector.extract_strided_slice %221 {offsets = [0, 256], sizes = [8, 128], strides = [1, 1]} : vector<8x512xf32> to vector<8x128xf32>
    %235 = math.tanh %234 : vector<8x128xf32>
    %236 = vector.extract_strided_slice %221 {offsets = [0, 384], sizes = [8, 128], strides = [1, 1]} : vector<8x512xf32> to vector<8x128xf32>
    %237 = arith.negf %236 : vector<8x128xf32>
    %238 = math.exp %237 : vector<8x128xf32>
    %cst_58 = arith.constant 1.000000e+00 : f32
    %239 = vector.broadcast %cst_58 : f32 to vector<8x128xf32>
    %240 = arith.addf %239, %238 : vector<8x128xf32>
    %241 = arith.divf %239, %240 : vector<8x128xf32>
    %242 = arith.mulf %233, %210 : vector<8x128xf32>
    %243 = arith.mulf %227, %235 : vector<8x128xf32>
    %244 = arith.addf %242, %243 : vector<8x128xf32>
    %245 = math.tanh %244 : vector<8x128xf32>
    %246 = arith.mulf %241, %245 : vector<8x128xf32>
    %247 = arith.index_cast %216 : i32 to index
    %c0_59 = arith.constant 0 : index
    %248 = vector.load %arg13[%247, %c0_59] : memref<64x128xf32, #tpu.memory_space<vmem>>, vector<8x128xf32>
    tpu.vector_store %arg13[%247, %c0_59], %246 {strides = array<i32>} : memref<64x128xf32, #tpu.memory_space<vmem>>, vector<8x128xf32>,
    %c7_i32 = arith.constant 7 : i32
    %c8_i32_60 = arith.constant 8 : i32
    %249 = arith.muli %c7_i32, %c8_i32_60 : i32
    %250 = tpu.assume_multiple %249, 8 : i32
    %251 = arith.index_cast %250 : i32 to index
    %c0_61 = arith.constant 0 : index
    %252 = vector.load %arg15[%251, %c0_61] : memref<64x512xf32, #tpu.memory_space<vmem>>, vector<8x512xf32>
    %253 = arith.truncf %246 : vector<8x128xf32> to vector<8x128xbf16>
    %cst_62 = arith.constant dense<0.000000e+00> : vector<8x512xf32>
    %254 = tpu.matmul %253, %1, %cst_62 {dimension_numbers = #tpu.dot_dimension_numbers<[1], [0], [0], [1], [0, 0, 1, 1], [], []>} : vector<8x128xbf16>, vector<128x512xbf16>, vector<8x512xf32> -> vector<8x512xf32>
    %255 = arith.addf %252, %254 : vector<8x512xf32>
    %256 = vector.extract_strided_slice %255 {offsets = [0, 0], sizes = [8, 128], strides = [1, 1]} : vector<8x512xf32> to vector<8x128xf32>
    %257 = arith.negf %256 : vector<8x128xf32>
    %258 = math.exp %257 : vector<8x128xf32>
    %cst_63 = arith.constant 1.000000e+00 : f32
    %259 = vector.broadcast %cst_63 : f32 to vector<8x128xf32>
    %260 = arith.addf %259, %258 : vector<8x128xf32>
    %261 = arith.divf %259, %260 : vector<8x128xf32>
    %262 = vector.extract_strided_slice %255 {offsets = [0, 128], sizes = [8, 128], strides = [1, 1]} : vector<8x512xf32> to vector<8x128xf32>
    %263 = arith.negf %262 : vector<8x128xf32>
    %264 = math.exp %263 : vector<8x128xf32>
    %cst_64 = arith.constant 1.000000e+00 : f32
    %265 = vector.broadcast %cst_64 : f32 to vector<8x128xf32>
    %266 = arith.addf %265, %264 : vector<8x128xf32>
    %267 = arith.divf %265, %266 : vector<8x128xf32>
    %268 = vector.extract_strided_slice %255 {offsets = [0, 256], sizes = [8, 128], strides = [1, 1]} : vector<8x512xf32> to vector<8x128xf32>
    %269 = math.tanh %268 : vector<8x128xf32>
    %270 = vector.extract_strided_slice %255 {offsets = [0, 384], sizes = [8, 128], strides = [1, 1]} : vector<8x512xf32> to vector<8x128xf32>
    %271 = arith.negf %270 : vector<8x128xf32>
    %272 = math.exp %271 : vector<8x128xf32>
    %cst_65 = arith.constant 1.000000e+00 : f32
    %273 = vector.broadcast %cst_65 : f32 to vector<8x128xf32>
    %274 = arith.addf %273, %272 : vector<8x128xf32>
    %275 = arith.divf %273, %274 : vector<8x128xf32>
    %276 = arith.mulf %267, %244 : vector<8x128xf32>
    %277 = arith.mulf %261, %269 : vector<8x128xf32>
    %278 = arith.addf %276, %277 : vector<8x128xf32>
    %279 = math.tanh %278 : vector<8x128xf32>
    %280 = arith.mulf %275, %279 : vector<8x128xf32>
    %281 = arith.index_cast %250 : i32 to index
    %c0_66 = arith.constant 0 : index
    %282 = vector.load %arg13[%281, %c0_66] : memref<64x128xf32, #tpu.memory_space<vmem>>, vector<8x128xf32>
    tpu.vector_store %arg13[%281, %c0_66], %280 {strides = array<i32>} : memref<64x128xf32, #tpu.memory_space<vmem>>, vector<8x128xf32>,
    %c8_i32_67 = arith.constant 8 : i32
    %c0_68 = arith.constant 0 : index
    %c0_69 = arith.constant 0 : index
    %283 = vector.load %arg5[%c0_68, %c0_69] : memref<128x512xbf16, #tpu.memory_space<vmem>>, vector<128x512xbf16>
    %c0_70 = arith.constant 0 : index
    %c0_71 = arith.constant 0 : index
    %284 = vector.load %arg6[%c0_70, %c0_71] : memref<128x512xbf16, #tpu.memory_space<vmem>>, vector<128x512xbf16>
    %c0_72 = arith.constant 0 : index
    %c0_73 = arith.constant 0 : index
    %285 = vector.load %arg7[%c0_72, %c0_73] : memref<1x512xf32, #tpu.memory_space<vmem>>, vector<1x512xf32>
    %c0_74 = arith.constant 0 : index
    %c0_75 = arith.constant 0 : index
    %286 = vector.load %arg13[%c0_74, %c0_75] : memref<64x128xf32, #tpu.memory_space<vmem>>, vector<64x128xf32>
    %287 = arith.truncf %286 : vector<64x128xf32> to vector<64x128xbf16>
    %cst_76 = arith.constant dense<0.000000e+00> : vector<64x512xf32>
    %288 = tpu.matmul %287, %283, %cst_76 {dimension_numbers = #tpu.dot_dimension_numbers<[1], [0], [0], [1], [0, 0, 1, 1], [], []>} : vector<64x128xbf16>, vector<128x512xbf16>, vector<64x512xf32> -> vector<64x512xf32>
    %289 = vector.broadcast %285 : vector<1x512xf32> to vector<64x512xf32>
    %290 = arith.addf %288, %289 : vector<64x512xf32>
    %c0_77 = arith.constant 0 : index
    %c0_78 = arith.constant 0 : index
    %291 = vector.load %arg15[%c0_77, %c0_78] : memref<64x512xf32, #tpu.memory_space<vmem>>, vector<64x512xf32>
    tpu.vector_store %arg15[%c0_77, %c0_78], %290 {strides = array<i32>} : memref<64x512xf32, #tpu.memory_space<vmem>>, vector<64x512xf32>,
    %cst_79 = arith.constant 0.000000e+00 : f32
    %292 = vector.broadcast %cst_79 : f32 to vector<8x128xf32>
    %cst_80 = arith.constant 0.000000e+00 : f32
    %293 = vector.broadcast %cst_80 : f32 to vector<8x128xf32>
    %c0_i32_81 = arith.constant 0 : i32
    %c8_i32_82 = arith.constant 8 : i32
    %294 = arith.muli %c0_i32_81, %c8_i32_82 : i32
    %295 = tpu.assume_multiple %294, 8 : i32
    %296 = arith.index_cast %295 : i32 to index
    %c0_83 = arith.constant 0 : index
    %297 = vector.load %arg15[%296, %c0_83] : memref<64x512xf32, #tpu.memory_space<vmem>>, vector<8x512xf32>
    %298 = arith.truncf %292 : vector<8x128xf32> to vector<8x128xbf16>
    %cst_84 = arith.constant dense<0.000000e+00> : vector<8x512xf32>
    %299 = tpu.matmul %298, %284, %cst_84 {dimension_numbers = #tpu.dot_dimension_numbers<[1], [0], [0], [1], [0, 0, 1, 1], [], []>} : vector<8x128xbf16>, vector<128x512xbf16>, vector<8x512xf32> -> vector<8x512xf32>
    %300 = arith.addf %297, %299 : vector<8x512xf32>
    %301 = vector.extract_strided_slice %300 {offsets = [0, 0], sizes = [8, 128], strides = [1, 1]} : vector<8x512xf32> to vector<8x128xf32>
    %302 = arith.negf %301 : vector<8x128xf32>
    %303 = math.exp %302 : vector<8x128xf32>
    %cst_85 = arith.constant 1.000000e+00 : f32
    %304 = vector.broadcast %cst_85 : f32 to vector<8x128xf32>
    %305 = arith.addf %304, %303 : vector<8x128xf32>
    %306 = arith.divf %304, %305 : vector<8x128xf32>
    %307 = vector.extract_strided_slice %300 {offsets = [0, 128], sizes = [8, 128], strides = [1, 1]} : vector<8x512xf32> to vector<8x128xf32>
    %308 = arith.negf %307 : vector<8x128xf32>
    %309 = math.exp %308 : vector<8x128xf32>
    %cst_86 = arith.constant 1.000000e+00 : f32
    %310 = vector.broadcast %cst_86 : f32 to vector<8x128xf32>
    %311 = arith.addf %310, %309 : vector<8x128xf32>
    %312 = arith.divf %310, %311 : vector<8x128xf32>
    %313 = vector.extract_strided_slice %300 {offsets = [0, 256], sizes = [8, 128], strides = [1, 1]} : vector<8x512xf32> to vector<8x128xf32>
    %314 = math.tanh %313 : vector<8x128xf32>
    %315 = vector.extract_strided_slice %300 {offsets = [0, 384], sizes = [8, 128], strides = [1, 1]} : vector<8x512xf32> to vector<8x128xf32>
    %316 = arith.negf %315 : vector<8x128xf32>
    %317 = math.exp %316 : vector<8x128xf32>
    %cst_87 = arith.constant 1.000000e+00 : f32
    %318 = vector.broadcast %cst_87 : f32 to vector<8x128xf32>
    %319 = arith.addf %318, %317 : vector<8x128xf32>
    %320 = arith.divf %318, %319 : vector<8x128xf32>
    %321 = arith.mulf %312, %293 : vector<8x128xf32>
    %322 = arith.mulf %306, %314 : vector<8x128xf32>
    %323 = arith.addf %321, %322 : vector<8x128xf32>
    %324 = math.tanh %323 : vector<8x128xf32>
    %325 = arith.mulf %320, %324 : vector<8x128xf32>
    %c1_i32_88 = arith.constant 1 : i32
    %c8_i32_89 = arith.constant 8 : i32
    %326 = arith.muli %c1_i32_88, %c8_i32_89 : i32
    %327 = tpu.assume_multiple %326, 8 : i32
    %328 = arith.index_cast %327 : i32 to index
    %c0_90 = arith.constant 0 : index
    %329 = vector.load %arg15[%328, %c0_90] : memref<64x512xf32, #tpu.memory_space<vmem>>, vector<8x512xf32>
    %330 = arith.truncf %325 : vector<8x128xf32> to vector<8x128xbf16>
    %cst_91 = arith.constant dense<0.000000e+00> : vector<8x512xf32>
    %331 = tpu.matmul %330, %284, %cst_91 {dimension_numbers = #tpu.dot_dimension_numbers<[1], [0], [0], [1], [0, 0, 1, 1], [], []>} : vector<8x128xbf16>, vector<128x512xbf16>, vector<8x512xf32> -> vector<8x512xf32>
    %332 = arith.addf %329, %331 : vector<8x512xf32>
    %333 = vector.extract_strided_slice %332 {offsets = [0, 0], sizes = [8, 128], strides = [1, 1]} : vector<8x512xf32> to vector<8x128xf32>
    %334 = arith.negf %333 : vector<8x128xf32>
    %335 = math.exp %334 : vector<8x128xf32>
    %cst_92 = arith.constant 1.000000e+00 : f32
    %336 = vector.broadcast %cst_92 : f32 to vector<8x128xf32>
    %337 = arith.addf %336, %335 : vector<8x128xf32>
    %338 = arith.divf %336, %337 : vector<8x128xf32>
    %339 = vector.extract_strided_slice %332 {offsets = [0, 128], sizes = [8, 128], strides = [1, 1]} : vector<8x512xf32> to vector<8x128xf32>
    %340 = arith.negf %339 : vector<8x128xf32>
    %341 = math.exp %340 : vector<8x128xf32>
    %cst_93 = arith.constant 1.000000e+00 : f32
    %342 = vector.broadcast %cst_93 : f32 to vector<8x128xf32>
    %343 = arith.addf %342, %341 : vector<8x128xf32>
    %344 = arith.divf %342, %343 : vector<8x128xf32>
    %345 = vector.extract_strided_slice %332 {offsets = [0, 256], sizes = [8, 128], strides = [1, 1]} : vector<8x512xf32> to vector<8x128xf32>
    %346 = math.tanh %345 : vector<8x128xf32>
    %347 = vector.extract_strided_slice %332 {offsets = [0, 384], sizes = [8, 128], strides = [1, 1]} : vector<8x512xf32> to vector<8x128xf32>
    %348 = arith.negf %347 : vector<8x128xf32>
    %349 = math.exp %348 : vector<8x128xf32>
    %cst_94 = arith.constant 1.000000e+00 : f32
    %350 = vector.broadcast %cst_94 : f32 to vector<8x128xf32>
    %351 = arith.addf %350, %349 : vector<8x128xf32>
    %352 = arith.divf %350, %351 : vector<8x128xf32>
    %353 = arith.mulf %344, %323 : vector<8x128xf32>
    %354 = arith.mulf %338, %346 : vector<8x128xf32>
    %355 = arith.addf %353, %354 : vector<8x128xf32>
    %356 = math.tanh %355 : vector<8x128xf32>
    %357 = arith.mulf %352, %356 : vector<8x128xf32>
    %c2_i32_95 = arith.constant 2 : i32
    %c8_i32_96 = arith.constant 8 : i32
    %358 = arith.muli %c2_i32_95, %c8_i32_96 : i32
    %359 = tpu.assume_multiple %358, 8 : i32
    %360 = arith.index_cast %359 : i32 to index
    %c0_97 = arith.constant 0 : index
    %361 = vector.load %arg15[%360, %c0_97] : memref<64x512xf32, #tpu.memory_space<vmem>>, vector<8x512xf32>
    %362 = arith.truncf %357 : vector<8x128xf32> to vector<8x128xbf16>
    %cst_98 = arith.constant dense<0.000000e+00> : vector<8x512xf32>
    %363 = tpu.matmul %362, %284, %cst_98 {dimension_numbers = #tpu.dot_dimension_numbers<[1], [0], [0], [1], [0, 0, 1, 1], [], []>} : vector<8x128xbf16>, vector<128x512xbf16>, vector<8x512xf32> -> vector<8x512xf32>
    %364 = arith.addf %361, %363 : vector<8x512xf32>
    %365 = vector.extract_strided_slice %364 {offsets = [0, 0], sizes = [8, 128], strides = [1, 1]} : vector<8x512xf32> to vector<8x128xf32>
    %366 = arith.negf %365 : vector<8x128xf32>
    %367 = math.exp %366 : vector<8x128xf32>
    %cst_99 = arith.constant 1.000000e+00 : f32
    %368 = vector.broadcast %cst_99 : f32 to vector<8x128xf32>
    %369 = arith.addf %368, %367 : vector<8x128xf32>
    %370 = arith.divf %368, %369 : vector<8x128xf32>
    %371 = vector.extract_strided_slice %364 {offsets = [0, 128], sizes = [8, 128], strides = [1, 1]} : vector<8x512xf32> to vector<8x128xf32>
    %372 = arith.negf %371 : vector<8x128xf32>
    %373 = math.exp %372 : vector<8x128xf32>
    %cst_100 = arith.constant 1.000000e+00 : f32
    %374 = vector.broadcast %cst_100 : f32 to vector<8x128xf32>
    %375 = arith.addf %374, %373 : vector<8x128xf32>
    %376 = arith.divf %374, %375 : vector<8x128xf32>
    %377 = vector.extract_strided_slice %364 {offsets = [0, 256], sizes = [8, 128], strides = [1, 1]} : vector<8x512xf32> to vector<8x128xf32>
    %378 = math.tanh %377 : vector<8x128xf32>
    %379 = vector.extract_strided_slice %364 {offsets = [0, 384], sizes = [8, 128], strides = [1, 1]} : vector<8x512xf32> to vector<8x128xf32>
    %380 = arith.negf %379 : vector<8x128xf32>
    %381 = math.exp %380 : vector<8x128xf32>
    %cst_101 = arith.constant 1.000000e+00 : f32
    %382 = vector.broadcast %cst_101 : f32 to vector<8x128xf32>
    %383 = arith.addf %382, %381 : vector<8x128xf32>
    %384 = arith.divf %382, %383 : vector<8x128xf32>
    %385 = arith.mulf %376, %355 : vector<8x128xf32>
    %386 = arith.mulf %370, %378 : vector<8x128xf32>
    %387 = arith.addf %385, %386 : vector<8x128xf32>
    %388 = math.tanh %387 : vector<8x128xf32>
    %389 = arith.mulf %384, %388 : vector<8x128xf32>
    %c3_i32_102 = arith.constant 3 : i32
    %c8_i32_103 = arith.constant 8 : i32
    %390 = arith.muli %c3_i32_102, %c8_i32_103 : i32
    %391 = tpu.assume_multiple %390, 8 : i32
    %392 = arith.index_cast %391 : i32 to index
    %c0_104 = arith.constant 0 : index
    %393 = vector.load %arg15[%392, %c0_104] : memref<64x512xf32, #tpu.memory_space<vmem>>, vector<8x512xf32>
    %394 = arith.truncf %389 : vector<8x128xf32> to vector<8x128xbf16>
    %cst_105 = arith.constant dense<0.000000e+00> : vector<8x512xf32>
    %395 = tpu.matmul %394, %284, %cst_105 {dimension_numbers = #tpu.dot_dimension_numbers<[1], [0], [0], [1], [0, 0, 1, 1], [], []>} : vector<8x128xbf16>, vector<128x512xbf16>, vector<8x512xf32> -> vector<8x512xf32>
    %396 = arith.addf %393, %395 : vector<8x512xf32>
    %397 = vector.extract_strided_slice %396 {offsets = [0, 0], sizes = [8, 128], strides = [1, 1]} : vector<8x512xf32> to vector<8x128xf32>
    %398 = arith.negf %397 : vector<8x128xf32>
    %399 = math.exp %398 : vector<8x128xf32>
    %cst_106 = arith.constant 1.000000e+00 : f32
    %400 = vector.broadcast %cst_106 : f32 to vector<8x128xf32>
    %401 = arith.addf %400, %399 : vector<8x128xf32>
    %402 = arith.divf %400, %401 : vector<8x128xf32>
    %403 = vector.extract_strided_slice %396 {offsets = [0, 128], sizes = [8, 128], strides = [1, 1]} : vector<8x512xf32> to vector<8x128xf32>
    %404 = arith.negf %403 : vector<8x128xf32>
    %405 = math.exp %404 : vector<8x128xf32>
    %cst_107 = arith.constant 1.000000e+00 : f32
    %406 = vector.broadcast %cst_107 : f32 to vector<8x128xf32>
    %407 = arith.addf %406, %405 : vector<8x128xf32>
    %408 = arith.divf %406, %407 : vector<8x128xf32>
    %409 = vector.extract_strided_slice %396 {offsets = [0, 256], sizes = [8, 128], strides = [1, 1]} : vector<8x512xf32> to vector<8x128xf32>
    %410 = math.tanh %409 : vector<8x128xf32>
    %411 = vector.extract_strided_slice %396 {offsets = [0, 384], sizes = [8, 128], strides = [1, 1]} : vector<8x512xf32> to vector<8x128xf32>
    %412 = arith.negf %411 : vector<8x128xf32>
    %413 = math.exp %412 : vector<8x128xf32>
    %cst_108 = arith.constant 1.000000e+00 : f32
    %414 = vector.broadcast %cst_108 : f32 to vector<8x128xf32>
    %415 = arith.addf %414, %413 : vector<8x128xf32>
    %416 = arith.divf %414, %415 : vector<8x128xf32>
    %417 = arith.mulf %408, %387 : vector<8x128xf32>
    %418 = arith.mulf %402, %410 : vector<8x128xf32>
    %419 = arith.addf %417, %418 : vector<8x128xf32>
    %420 = math.tanh %419 : vector<8x128xf32>
    %421 = arith.mulf %416, %420 : vector<8x128xf32>
    %c4_i32_109 = arith.constant 4 : i32
    %c8_i32_110 = arith.constant 8 : i32
    %422 = arith.muli %c4_i32_109, %c8_i32_110 : i32
    %423 = tpu.assume_multiple %422, 8 : i32
    %424 = arith.index_cast %423 : i32 to index
    %c0_111 = arith.constant 0 : index
    %425 = vector.load %arg15[%424, %c0_111] : memref<64x512xf32, #tpu.memory_space<vmem>>, vector<8x512xf32>
    %426 = arith.truncf %421 : vector<8x128xf32> to vector<8x128xbf16>
    %cst_112 = arith.constant dense<0.000000e+00> : vector<8x512xf32>
    %427 = tpu.matmul %426, %284, %cst_112 {dimension_numbers = #tpu.dot_dimension_numbers<[1], [0], [0], [1], [0, 0, 1, 1], [], []>} : vector<8x128xbf16>, vector<128x512xbf16>, vector<8x512xf32> -> vector<8x512xf32>
    %428 = arith.addf %425, %427 : vector<8x512xf32>
    %429 = vector.extract_strided_slice %428 {offsets = [0, 0], sizes = [8, 128], strides = [1, 1]} : vector<8x512xf32> to vector<8x128xf32>
    %430 = arith.negf %429 : vector<8x128xf32>
    %431 = math.exp %430 : vector<8x128xf32>
    %cst_113 = arith.constant 1.000000e+00 : f32
    %432 = vector.broadcast %cst_113 : f32 to vector<8x128xf32>
    %433 = arith.addf %432, %431 : vector<8x128xf32>
    %434 = arith.divf %432, %433 : vector<8x128xf32>
    %435 = vector.extract_strided_slice %428 {offsets = [0, 128], sizes = [8, 128], strides = [1, 1]} : vector<8x512xf32> to vector<8x128xf32>
    %436 = arith.negf %435 : vector<8x128xf32>
    %437 = math.exp %436 : vector<8x128xf32>
    %cst_114 = arith.constant 1.000000e+00 : f32
    %438 = vector.broadcast %cst_114 : f32 to vector<8x128xf32>
    %439 = arith.addf %438, %437 : vector<8x128xf32>
    %440 = arith.divf %438, %439 : vector<8x128xf32>
    %441 = vector.extract_strided_slice %428 {offsets = [0, 256], sizes = [8, 128], strides = [1, 1]} : vector<8x512xf32> to vector<8x128xf32>
    %442 = math.tanh %441 : vector<8x128xf32>
    %443 = vector.extract_strided_slice %428 {offsets = [0, 384], sizes = [8, 128], strides = [1, 1]} : vector<8x512xf32> to vector<8x128xf32>
    %444 = arith.negf %443 : vector<8x128xf32>
    %445 = math.exp %444 : vector<8x128xf32>
    %cst_115 = arith.constant 1.000000e+00 : f32
    %446 = vector.broadcast %cst_115 : f32 to vector<8x128xf32>
    %447 = arith.addf %446, %445 : vector<8x128xf32>
    %448 = arith.divf %446, %447 : vector<8x128xf32>
    %449 = arith.mulf %440, %419 : vector<8x128xf32>
    %450 = arith.mulf %434, %442 : vector<8x128xf32>
    %451 = arith.addf %449, %450 : vector<8x128xf32>
    %452 = math.tanh %451 : vector<8x128xf32>
    %453 = arith.mulf %448, %452 : vector<8x128xf32>
    %c5_i32_116 = arith.constant 5 : i32
    %c8_i32_117 = arith.constant 8 : i32
    %454 = arith.muli %c5_i32_116, %c8_i32_117 : i32
    %455 = tpu.assume_multiple %454, 8 : i32
    %456 = arith.index_cast %455 : i32 to index
    %c0_118 = arith.constant 0 : index
    %457 = vector.load %arg15[%456, %c0_118] : memref<64x512xf32, #tpu.memory_space<vmem>>, vector<8x512xf32>
    %458 = arith.truncf %453 : vector<8x128xf32> to vector<8x128xbf16>
    %cst_119 = arith.constant dense<0.000000e+00> : vector<8x512xf32>
    %459 = tpu.matmul %458, %284, %cst_119 {dimension_numbers = #tpu.dot_dimension_numbers<[1], [0], [0], [1], [0, 0, 1, 1], [], []>} : vector<8x128xbf16>, vector<128x512xbf16>, vector<8x512xf32> -> vector<8x512xf32>
    %460 = arith.addf %457, %459 : vector<8x512xf32>
    %461 = vector.extract_strided_slice %460 {offsets = [0, 0], sizes = [8, 128], strides = [1, 1]} : vector<8x512xf32> to vector<8x128xf32>
    %462 = arith.negf %461 : vector<8x128xf32>
    %463 = math.exp %462 : vector<8x128xf32>
    %cst_120 = arith.constant 1.000000e+00 : f32
    %464 = vector.broadcast %cst_120 : f32 to vector<8x128xf32>
    %465 = arith.addf %464, %463 : vector<8x128xf32>
    %466 = arith.divf %464, %465 : vector<8x128xf32>
    %467 = vector.extract_strided_slice %460 {offsets = [0, 128], sizes = [8, 128], strides = [1, 1]} : vector<8x512xf32> to vector<8x128xf32>
    %468 = arith.negf %467 : vector<8x128xf32>
    %469 = math.exp %468 : vector<8x128xf32>
    %cst_121 = arith.constant 1.000000e+00 : f32
    %470 = vector.broadcast %cst_121 : f32 to vector<8x128xf32>
    %471 = arith.addf %470, %469 : vector<8x128xf32>
    %472 = arith.divf %470, %471 : vector<8x128xf32>
    %473 = vector.extract_strided_slice %460 {offsets = [0, 256], sizes = [8, 128], strides = [1, 1]} : vector<8x512xf32> to vector<8x128xf32>
    %474 = math.tanh %473 : vector<8x128xf32>
    %475 = vector.extract_strided_slice %460 {offsets = [0, 384], sizes = [8, 128], strides = [1, 1]} : vector<8x512xf32> to vector<8x128xf32>
    %476 = arith.negf %475 : vector<8x128xf32>
    %477 = math.exp %476 : vector<8x128xf32>
    %cst_122 = arith.constant 1.000000e+00 : f32
    %478 = vector.broadcast %cst_122 : f32 to vector<8x128xf32>
    %479 = arith.addf %478, %477 : vector<8x128xf32>
    %480 = arith.divf %478, %479 : vector<8x128xf32>
    %481 = arith.mulf %472, %451 : vector<8x128xf32>
    %482 = arith.mulf %466, %474 : vector<8x128xf32>
    %483 = arith.addf %481, %482 : vector<8x128xf32>
    %484 = math.tanh %483 : vector<8x128xf32>
    %485 = arith.mulf %480, %484 : vector<8x128xf32>
    %c6_i32_123 = arith.constant 6 : i32
    %c8_i32_124 = arith.constant 8 : i32
    %486 = arith.muli %c6_i32_123, %c8_i32_124 : i32
    %487 = tpu.assume_multiple %486, 8 : i32
    %488 = arith.index_cast %487 : i32 to index
    %c0_125 = arith.constant 0 : index
    %489 = vector.load %arg15[%488, %c0_125] : memref<64x512xf32, #tpu.memory_space<vmem>>, vector<8x512xf32>
    %490 = arith.truncf %485 : vector<8x128xf32> to vector<8x128xbf16>
    %cst_126 = arith.constant dense<0.000000e+00> : vector<8x512xf32>
    %491 = tpu.matmul %490, %284, %cst_126 {dimension_numbers = #tpu.dot_dimension_numbers<[1], [0], [0], [1], [0, 0, 1, 1], [], []>} : vector<8x128xbf16>, vector<128x512xbf16>, vector<8x512xf32> -> vector<8x512xf32>
    %492 = arith.addf %489, %491 : vector<8x512xf32>
    %493 = vector.extract_strided_slice %492 {offsets = [0, 0], sizes = [8, 128], strides = [1, 1]} : vector<8x512xf32> to vector<8x128xf32>
    %494 = arith.negf %493 : vector<8x128xf32>
    %495 = math.exp %494 : vector<8x128xf32>
    %cst_127 = arith.constant 1.000000e+00 : f32
    %496 = vector.broadcast %cst_127 : f32 to vector<8x128xf32>
    %497 = arith.addf %496, %495 : vector<8x128xf32>
    %498 = arith.divf %496, %497 : vector<8x128xf32>
    %499 = vector.extract_strided_slice %492 {offsets = [0, 128], sizes = [8, 128], strides = [1, 1]} : vector<8x512xf32> to vector<8x128xf32>
    %500 = arith.negf %499 : vector<8x128xf32>
    %501 = math.exp %500 : vector<8x128xf32>
    %cst_128 = arith.constant 1.000000e+00 : f32
    %502 = vector.broadcast %cst_128 : f32 to vector<8x128xf32>
    %503 = arith.addf %502, %501 : vector<8x128xf32>
    %504 = arith.divf %502, %503 : vector<8x128xf32>
    %505 = vector.extract_strided_slice %492 {offsets = [0, 256], sizes = [8, 128], strides = [1, 1]} : vector<8x512xf32> to vector<8x128xf32>
    %506 = math.tanh %505 : vector<8x128xf32>
    %507 = vector.extract_strided_slice %492 {offsets = [0, 384], sizes = [8, 128], strides = [1, 1]} : vector<8x512xf32> to vector<8x128xf32>
    %508 = arith.negf %507 : vector<8x128xf32>
    %509 = math.exp %508 : vector<8x128xf32>
    %cst_129 = arith.constant 1.000000e+00 : f32
    %510 = vector.broadcast %cst_129 : f32 to vector<8x128xf32>
    %511 = arith.addf %510, %509 : vector<8x128xf32>
    %512 = arith.divf %510, %511 : vector<8x128xf32>
    %513 = arith.mulf %504, %483 : vector<8x128xf32>
    %514 = arith.mulf %498, %506 : vector<8x128xf32>
    %515 = arith.addf %513, %514 : vector<8x128xf32>
    %516 = math.tanh %515 : vector<8x128xf32>
    %517 = arith.mulf %512, %516 : vector<8x128xf32>
    %c7_i32_130 = arith.constant 7 : i32
    %c8_i32_131 = arith.constant 8 : i32
    %518 = arith.muli %c7_i32_130, %c8_i32_131 : i32
    %519 = tpu.assume_multiple %518, 8 : i32
    %520 = arith.index_cast %519 : i32 to index
    %c0_132 = arith.constant 0 : index
    %521 = vector.load %arg15[%520, %c0_132] : memref<64x512xf32, #tpu.memory_space<vmem>>, vector<8x512xf32>
    %522 = arith.truncf %517 : vector<8x128xf32> to vector<8x128xbf16>
    %cst_133 = arith.constant dense<0.000000e+00> : vector<8x512xf32>
    %523 = tpu.matmul %522, %284, %cst_133 {dimension_numbers = #tpu.dot_dimension_numbers<[1], [0], [0], [1], [0, 0, 1, 1], [], []>} : vector<8x128xbf16>, vector<128x512xbf16>, vector<8x512xf32> -> vector<8x512xf32>
    %524 = arith.addf %521, %523 : vector<8x512xf32>
    %525 = vector.extract_strided_slice %524 {offsets = [0, 0], sizes = [8, 128], strides = [1, 1]} : vector<8x512xf32> to vector<8x128xf32>
    %526 = arith.negf %525 : vector<8x128xf32>
    %527 = math.exp %526 : vector<8x128xf32>
    %cst_134 = arith.constant 1.000000e+00 : f32
    %528 = vector.broadcast %cst_134 : f32 to vector<8x128xf32>
    %529 = arith.addf %528, %527 : vector<8x128xf32>
    %530 = arith.divf %528, %529 : vector<8x128xf32>
    %531 = vector.extract_strided_slice %524 {offsets = [0, 128], sizes = [8, 128], strides = [1, 1]} : vector<8x512xf32> to vector<8x128xf32>
    %532 = arith.negf %531 : vector<8x128xf32>
    %533 = math.exp %532 : vector<8x128xf32>
    %cst_135 = arith.constant 1.000000e+00 : f32
    %534 = vector.broadcast %cst_135 : f32 to vector<8x128xf32>
    %535 = arith.addf %534, %533 : vector<8x128xf32>
    %536 = arith.divf %534, %535 : vector<8x128xf32>
    %537 = vector.extract_strided_slice %524 {offsets = [0, 256], sizes = [8, 128], strides = [1, 1]} : vector<8x512xf32> to vector<8x128xf32>
    %538 = math.tanh %537 : vector<8x128xf32>
    %539 = vector.extract_strided_slice %524 {offsets = [0, 384], sizes = [8, 128], strides = [1, 1]} : vector<8x512xf32> to vector<8x128xf32>
    %540 = arith.negf %539 : vector<8x128xf32>
    %541 = math.exp %540 : vector<8x128xf32>
    %cst_136 = arith.constant 1.000000e+00 : f32
    %542 = vector.broadcast %cst_136 : f32 to vector<8x128xf32>
    %543 = arith.addf %542, %541 : vector<8x128xf32>
    %544 = arith.divf %542, %543 : vector<8x128xf32>
    %545 = arith.mulf %536, %515 : vector<8x128xf32>
    %546 = arith.mulf %530, %538 : vector<8x128xf32>
    %547 = arith.addf %545, %546 : vector<8x128xf32>
    %548 = math.tanh %547 : vector<8x128xf32>
    %549 = arith.mulf %544, %548 : vector<8x128xf32>
    %c8_i32_137 = arith.constant 8 : i32
    %550 = arith.truncf %549 : vector<8x128xf32> to vector<8x128xbf16>
    %c0_138 = arith.constant 0 : index
    %c0_139 = arith.constant 0 : index
    %551 = vector.load %arg8[%c0_138, %c0_139] : memref<128x1024xbf16, #tpu.memory_space<vmem>>, vector<128x1024xbf16>
    %cst_140 = arith.constant dense<0.000000e+00> : vector<8x1024xf32>
    %552 = tpu.matmul %550, %551, %cst_140 {dimension_numbers = #tpu.dot_dimension_numbers<[1], [0], [0], [1], [0, 0, 1, 1], [], []>} : vector<8x128xbf16>, vector<128x1024xbf16>, vector<8x1024xf32> -> vector<8x1024xf32>
    %c0_141 = arith.constant 0 : index
    %c0_142 = arith.constant 0 : index
    %553 = vector.load %arg9[%c0_141, %c0_142] : memref<1x1024xf32, #tpu.memory_space<vmem>>, vector<1x1024xf32>
    %554 = vector.broadcast %553 : vector<1x1024xf32> to vector<8x1024xf32>
    %555 = arith.addf %552, %554 : vector<8x1024xf32>
    %cst_143 = arith.constant 0.000000e+00 : f32
    %556 = vector.broadcast %cst_143 : f32 to vector<8x1024xf32>
    %557 = arith.maximumf %555, %556 : vector<8x1024xf32>
    %558 = arith.truncf %557 : vector<8x1024xf32> to vector<8x1024xbf16>
    %c0_144 = arith.constant 0 : index
    %c0_145 = arith.constant 0 : index
    %559 = vector.load %arg10[%c0_144, %c0_145] : memref<1024x128xbf16, #tpu.memory_space<vmem>>, vector<1024x128xbf16>
    %cst_146 = arith.constant dense<0.000000e+00> : vector<8x128xf32>
    %560 = tpu.matmul %558, %559, %cst_146 {dimension_numbers = #tpu.dot_dimension_numbers<[1], [0], [0], [1], [0, 0, 1, 1], [], []>} : vector<8x1024xbf16>, vector<1024x128xbf16>, vector<8x128xf32> -> vector<8x128xf32>
    %c0_147 = arith.constant 0 : index
    %c0_148 = arith.constant 0 : index
    %561 = vector.load %arg11[%c0_147, %c0_148] : memref<1x128xf32, #tpu.memory_space<vmem>>, vector<1x128xf32>
    %562 = vector.broadcast %561 : vector<1x128xf32> to vector<8x128xf32>
    %563 = arith.addf %560, %562 : vector<8x128xf32>
    %c0_149 = arith.constant 0 : index
    %c0_150 = arith.constant 0 : index
    %c0_151 = arith.constant 0 : index
    %564 = vector.load %arg12[%c0_149, %c0_150, %c0_151] : memref<1x8x128xf32, #tpu.memory_space<vmem>>, vector<1x8x128xf32>
    %565 = vector.shape_cast %564 : vector<1x8x128xf32> to vector<8x128xf32>
    %566 = vector.shape_cast %563 : vector<8x128xf32> to vector<1x8x128xf32>
    tpu.vector_store %arg12[%c0_149, %c0_150, %c0_151], %566 {strides = array<i32>} : memref<1x8x128xf32, #tpu.memory_space<vmem>>, vector<1x8x128xf32>,
    return
  }
  func.func @transform_0(%arg0: i32) -> (i32, i32, i32) {
    %c0_i32 = arith.constant 0 : i32
    %c0_i32_0 = arith.constant 0 : i32
    %c0_i32_1 = arith.constant 0 : i32
    return %arg0, %c0_i32, %c0_i32_0 : i32, i32, i32
  }
  func.func @transform_1(%arg0: i32) -> (i32, i32) {
    %c0_i32 = arith.constant 0 : i32
    %c0_i32_0 = arith.constant 0 : i32
    %c0_i32_1 = arith.constant 0 : i32
    return %c0_i32, %c0_i32_0 : i32, i32
  }
  func.func @transform_2(%arg0: i32) -> (i32, i32) {
    %c0_i32 = arith.constant 0 : i32
    %c0_i32_0 = arith.constant 0 : i32
    %c0_i32_1 = arith.constant 0 : i32
    return %c0_i32, %c0_i32_0 : i32, i32
  }
  func.func @transform_3(%arg0: i32) -> (i32, i32) {
    %c0_i32 = arith.constant 0 : i32
    %c0_i32_0 = arith.constant 0 : i32
    %c0_i32_1 = arith.constant 0 : i32
    return %c0_i32, %c0_i32_0 : i32, i32
  }
  func.func @transform_4(%arg0: i32) -> (i32, i32) {
    %c0_i32 = arith.constant 0 : i32
    %c0_i32_0 = arith.constant 0 : i32
    %c0_i32_1 = arith.constant 0 : i32
    return %c0_i32, %c0_i32_0 : i32, i32
  }
  func.func @transform_5(%arg0: i32) -> (i32, i32) {
    %c0_i32 = arith.constant 0 : i32
    %c0_i32_0 = arith.constant 0 : i32
    %c0_i32_1 = arith.constant 0 : i32
    return %c0_i32, %c0_i32_0 : i32, i32
  }
  func.func @transform_6(%arg0: i32) -> (i32, i32) {
    %c0_i32 = arith.constant 0 : i32
    %c0_i32_0 = arith.constant 0 : i32
    %c0_i32_1 = arith.constant 0 : i32
    return %c0_i32, %c0_i32_0 : i32, i32
  }
  func.func @transform_7(%arg0: i32) -> (i32, i32) {
    %c0_i32 = arith.constant 0 : i32
    %c0_i32_0 = arith.constant 0 : i32
    %c0_i32_1 = arith.constant 0 : i32
    return %c0_i32, %c0_i32_0 : i32, i32
  }
  func.func @transform_8(%arg0: i32) -> (i32, i32) {
    %c0_i32 = arith.constant 0 : i32
    %c0_i32_0 = arith.constant 0 : i32
    %c0_i32_1 = arith.constant 0 : i32
    return %c0_i32, %c0_i32_0 : i32, i32
  }
  func.func @transform_9(%arg0: i32) -> (i32, i32) {
    %c0_i32 = arith.constant 0 : i32
    %c0_i32_0 = arith.constant 0 : i32
    %c0_i32_1 = arith.constant 0 : i32
    return %c0_i32, %c0_i32_0 : i32, i32
  }
  func.func @transform_10(%arg0: i32) -> (i32, i32) {
    %c0_i32 = arith.constant 0 : i32
    %c0_i32_0 = arith.constant 0 : i32
    %c0_i32_1 = arith.constant 0 : i32
    return %c0_i32, %c0_i32_0 : i32, i32
  }
  func.func @transform_11(%arg0: i32) -> (i32, i32, i32) {
    %c0_i32 = arith.constant 0 : i32
    %c0_i32_0 = arith.constant 0 : i32
    %c0_i32_1 = arith.constant 0 : i32
    return %arg0, %c0_i32, %c0_i32_0 : i32, i32, i32
  }
}

</mosaic_0001>

<llo_original>
// kernel: lstm_model_forward.1
$region0: #{lstm_model_forward.1}
  #allocation0 [shape = 'u32[]', space=smem, size = 0x4, offset = 0x4, fixed_abs, tag = 'smem constant byte address 0x4 - core index']
  #allocation1 [shape = 'u32[144,128]{1,0:T(1,128)}', space=vmem, size = 0x12000, scoped, tag = 'internal scratch']
  #allocation2 [shape = 'f32[64,128]{1,0:T(8,128)}', space=vmem, size = 0x8000, scoped, tag = 'scratch operand']
  #allocation3 [shape = 'f32[64,128]{1,0:T(8,128)}', space=vmem, size = 0x8000, scoped, tag = 'scratch operand']
  #allocation4 [shape = 'f32[64,512]{1,0:T(8,128)}', space=vmem, size = 0x20000, scoped, tag = 'scratch operand']
  %s0 = inlined_call_operand.vmem [shape: bf16[1,64,16], index: 0, kind: input, shape index: {}]
  %s1 = inlined_call_operand.vmem [shape: bf16[16,512], index: 1, kind: input, shape index: {}]
  %s2 = inlined_call_operand.hbm [shape: bf16[128,512], index: 2, kind: input, shape index: {}]
  %s3 = inlined_call_operand.vmem [shape: f32[1,512], index: 3, kind: input, shape index: {}]
  %s4 = inlined_call_operand.hbm [shape: bf16[128,512], index: 4, kind: input, shape index: {}]
  %s5 = inlined_call_operand.hbm [shape: bf16[128,512], index: 5, kind: input, shape index: {}]
  %s6 = inlined_call_operand.vmem [shape: f32[1,512], index: 6, kind: input, shape index: {}]
  %s7 = inlined_call_operand.hbm [shape: bf16[128,1024], index: 7, kind: input, shape index: {}]
  %s8 = inlined_call_operand.vmem [shape: f32[1,1024], index: 8, kind: input, shape index: {}]
  %s9 = inlined_call_operand.hbm [shape: bf16[1024,128], index: 9, kind: input, shape index: {}]
  %s10 = inlined_call_operand.vmem [shape: f32[1,128], index: 10, kind: input, shape index: {}]
  %s11 = inlined_call_operand.vmem [shape: f32[1,8,128], index: 11, kind: output, shape index: {}]
  %s12 = sld [smem:[#allocation0]]
  $region74: #{lstm_model_forward.1} parent=0
    _
  %s14 = ssub.s32 1, %s12
  %s15 = scalar_select 0, %s14, %s12
  $region1: #{lstm_model_forward.1} parent=0
    #allocation5 [shape = 'u8[131072]{0}', space=vmem, size = 0x20000, scoped, tag = 'input window, operand 2, single buffered']
    #allocation6 [shape = 's32[1]{0}', space=sflag, size = 0x4, scoped, tag = 'scoped memory for lstm_model_forward.1']
    #allocation7 [shape = 'u8[131072]{0}', space=vmem, size = 0x20000, scoped, tag = 'input window, operand 4, single buffered']
    #allocation8 [shape = 's32[1]{0}', space=sflag, size = 0x4, scoped, tag = 'scoped memory for lstm_model_forward.1']
    #allocation9 [shape = 'u8[131072]{0}', space=vmem, size = 0x20000, scoped, tag = 'input window, operand 5, single buffered']
    #allocation10 [shape = 'u8[262144]{0}', space=vmem, size = 0x40000, scoped, tag = 'input window, operand 7, single buffered']
    #allocation11 [shape = 's32[1]{0}', space=sflag, size = 0x4, scoped, tag = 'scoped memory for lstm_model_forward.1']
    #allocation12 [shape = 'u8[262144]{0}', space=vmem, size = 0x40000, scoped, tag = 'input window, operand 9, single buffered']
    %16 = vsyncpa [#allocation6], 0
    %17 = vsyncpa [#allocation8], 0
    %18 = vsyncpa [#allocation11], 0
    // Predicated region
    $region2: #{lstm_model_forward.1} parent=1 // pred_check
      _
    $region3: #{lstm_model_forward.1} parent=1 // pred_check_branch
      %20 = sbr.rel (0) target = $region5
    $region4: #{lstm_model_forward.1} parent=1 // pred_region
      _
    $region5: #{lstm_model_forward.1} parent=1 // pred_fallthru
      _
    // Predicated region
    $region6: #{lstm_model_forward.1} parent=1 // pred_check
      _
    $region7: #{lstm_model_forward.1} parent=1 // pred_check_branch
      %22 = sbr.rel (0) target = $region9
    $region8: #{lstm_model_forward.1} parent=1 // pred_region
      _
    $region9: #{lstm_model_forward.1} parent=1 // pred_fallthru
      _
    // Predicated region
    $region10: #{lstm_model_forward.1} parent=1 // pred_check
      _
    $region11: #{lstm_model_forward.1} parent=1 // pred_check_branch
      %24 = sbr.rel (0) target = $region13
    $region12: #{lstm_model_forward.1} parent=1 // pred_region
      %s26 = ssub.s32 4096, 4096
      %27 = vsyncadd [#allocation6], %s26
      %s28 = sshll.u32 [#allocation5], 4
      %s29 = int_to_ptr.vmem [resolvable:$true] %s28
      %34 = dma.hbm_to_vmem [thread:$0]  %s2, 4096, %s29, [#allocation6], 256, 256, 16
    $region13: #{lstm_model_forward.1} parent=1 // pred_fallthru
      _
    // Predicated region
    $region14: #{lstm_model_forward.1} parent=1 // pred_check
      _
    $region15: #{lstm_model_forward.1} parent=1 // pred_check_branch
      %36 = sbr.rel (0) target = $region17
    $region16: #{lstm_model_forward.1} parent=1 // pred_region
      _
    $region17: #{lstm_model_forward.1} parent=1 // pred_fallthru
      _
    // Predicated region
    $region18: #{lstm_model_forward.1} parent=1 // pred_check
      _
    $region19: #{lstm_model_forward.1} parent=1 // pred_check_branch
      %38 = sbr.rel (0) target = $region21
    $region20: #{lstm_model_forward.1} parent=1 // pred_region
      %s40 = ssub.s32 4096, 4096
      %41 = vsyncadd [#allocation8], %s40
      %s42 = sshll.u32 [#allocation7], 4
      %s43 = int_to_ptr.vmem [resolvable:$true] %s42
      %48 = dma.hbm_to_vmem [thread:$0]  %s4, 4096, %s43, [#allocation8], 256, 256, 16
    $region21: #{lstm_model_forward.1} parent=1 // pred_fallthru
      _
    // Predicated region
    $region22: #{lstm_model_forward.1} parent=1 // pred_check
      _
    $region23: #{lstm_model_forward.1} parent=1 // pred_check_branch
      %50 = sbr.rel (0) target = $region25
    $region24: #{lstm_model_forward.1} parent=1 // pred_region
      %s52 = ssub.s32 4096, 4096
      %53 = vsyncadd [#allocation8], %s52
      %s54 = sshll.u32 [#allocation9], 4
      %s55 = int_to_ptr.vmem [resolvable:$true] %s54
      %60 = dma.hbm_to_vmem [thread:$0]  %s5, 4096, %s55, [#allocation8], 256, 256, 16
    $region25: #{lstm_model_forward.1} parent=1 // pred_fallthru
      _
    // Predicated region
    $region26: #{lstm_model_forward.1} parent=1 // pred_check
      _
    $region27: #{lstm_model_forward.1} parent=1 // pred_check_branch
      %62 = sbr.rel (0) target = $region29
    $region28: #{lstm_model_forward.1} parent=1 // pred_region
      _
    $region29: #{lstm_model_forward.1} parent=1 // pred_fallthru
      _
    // Predicated region
    $region30: #{lstm_model_forward.1} parent=1 // pred_check
      _
    $region31: #{lstm_model_forward.1} parent=1 // pred_check_branch
      %64 = sbr.rel (0) target = $region33
    $region32: #{lstm_model_forward.1} parent=1 // pred_region
      %s66 = ssub.s32 8192, 8192
      %67 = vsyncadd [#allocation11], %s66
      %s68 = sshll.u32 [#allocation10], 4
      %s69 = int_to_ptr.vmem [resolvable:$true] %s68
      %74 = dma.hbm_to_vmem [thread:$0]  %s7, 8192, %s69, [#allocation11], 512, 512, 32
    $region33: #{lstm_model_forward.1} parent=1 // pred_fallthru
      _
    // Predicated region
    $region34: #{lstm_model_forward.1} parent=1 // pred_check
      _
    $region35: #{lstm_model_forward.1} parent=1 // pred_check_branch
      %76 = sbr.rel (0) target = $region37
    $region36: #{lstm_model_forward.1} parent=1 // pred_region
      _
    $region37: #{lstm_model_forward.1} parent=1 // pred_fallthru
      _
    // Predicated region
    $region38: #{lstm_model_forward.1} parent=1 // pred_check
      _
    $region39: #{lstm_model_forward.1} parent=1 // pred_check_branch
      %78 = sbr.rel (0) target = $region41
    $region40: #{lstm_model_forward.1} parent=1 // pred_region
      %s80 = ssub.s32 8192, 8192
      %81 = vsyncadd [#allocation11], %s80
      %s82 = sshll.u32 [#allocation12], 4
      %s83 = int_to_ptr.vmem [resolvable:$true] %s82
      %88 = dma.hbm_to_vmem [thread:$0]  %s9, 8192, %s83, [#allocation11], 64, 64, 4
    $region41: #{lstm_model_forward.1} parent=1 // pred_fallthru
      _
    // Predicated region
    $region42: #{lstm_model_forward.1} parent=1 // pred_check
      _
    $region43: #{lstm_model_forward.1} parent=1 // pred_check_branch
      %90 = sbr.rel (0) target = $region45
    $region44: #{lstm_model_forward.1} parent=1 // pred_region
      _
    $region45: #{lstm_model_forward.1} parent=1 // pred_fallthru
      _
    // Predicated region
    $region46: #{lstm_model_forward.1} parent=1 // pred_check
      _
    $region47: #{lstm_model_forward.1} parent=1 // pred_check_branch
      %92 = sbr.rel (0) target = $region49
    $region48: #{lstm_model_forward.1} parent=1 // pred_region
      %93 = dma.done [#allocation6], 4096
    $region49: #{lstm_model_forward.1} parent=1 // pred_fallthru
      _
    // Predicated region
    $region50: #{lstm_model_forward.1} parent=1 // pred_check
      _
    $region51: #{lstm_model_forward.1} parent=1 // pred_check_branch
      %95 = sbr.rel (0) target = $region53
    $region52: #{lstm_model_forward.1} parent=1 // pred_region
      %96 = dma.done [#allocation8], 4096
    $region53: #{lstm_model_forward.1} parent=1 // pred_fallthru
      _
    // Predicated region
    $region54: #{lstm_model_forward.1} parent=1 // pred_check
      _
    $region55: #{lstm_model_forward.1} parent=1 // pred_check_branch
      %98 = sbr.rel (0) target = $region57
    $region56: #{lstm_model_forward.1} parent=1 // pred_region
      %99 = dma.done [#allocation8], 4096
    $region57: #{lstm_model_forward.1} parent=1 // pred_fallthru
      _
    // Predicated region
    $region58: #{lstm_model_forward.1} parent=1 // pred_check
      _
    $region59: #{lstm_model_forward.1} parent=1 // pred_check_branch
      %101 = sbr.rel (0) target = $region61
    $region60: #{lstm_model_forward.1} parent=1 // pred_region
      %102 = dma.done [#allocation11], 8192
    $region61: #{lstm_model_forward.1} parent=1 // pred_fallthru
      _
    // Predicated region
    $region62: #{lstm_model_forward.1} parent=1 // pred_check
      _
    $region63: #{lstm_model_forward.1} parent=1 // pred_check_branch
      %104 = sbr.rel (0) target = $region65
    $region64: #{lstm_model_forward.1} parent=1 // pred_region
      %105 = dma.done [#allocation11], 8192
    $region65: #{lstm_model_forward.1} parent=1 // pred_fallthru
      _
    %v107 = vld [vmem:[%s1] sm:$0xff]
    %v108 = vld [vmem:[%s1 + $0x8] sm:$0xff]
    %v109 = vld [vmem:[%s1 + $0x10] sm:$0xff]
    %v110 = vld [vmem:[%s1 + $0x18] sm:$0xff]
    %v111 = vld [vmem:[#allocation5] sm:$0xff]
    %v112 = vld [vmem:[#allocation5 + $0x8] sm:$0xff]
    %v113 = vld [vmem:[#allocation5 + $0x10] sm:$0xff]
    %v114 = vld [vmem:[#allocation5 + $0x18] sm:$0xff]
    %v115 = vld [vmem:[#allocation5 + $0x20] sm:$0xff]
    %v116 = vld [vmem:[#allocation5 + $0x28] sm:$0xff]
    %v117 = vld [vmem:[#allocation5 + $0x30] sm:$0xff]
    %v118 = vld [vmem:[#allocation5 + $0x38] sm:$0xff]
    %v119 = vld [vmem:[#allocation5 + $0x40] sm:$0xff]
    %v120 = vld [vmem:[#allocation5 + $0x48] sm:$0xff]
    %v121 = vld [vmem:[#allocation5 + $0x50] sm:$0xff]
    %v122 = vld [vmem:[#allocation5 + $0x58] sm:$0xff]
    %v123 = vld [vmem:[#allocation5 + $0x60] sm:$0xff]
    %v124 = vld [vmem:[#allocation5 + $0x68] sm:$0xff]
    %v125 = vld [vmem:[#allocation5 + $0x70] sm:$0xff]
    %v126 = vld [vmem:[#allocation5 + $0x78] sm:$0xff]
    %v127 = vld [vmem:[#allocation5 + $0x80] sm:$0xff]
    %v128 = vld [vmem:[#allocation5 + $0x88] sm:$0xff]
    %v129 = vld [vmem:[#allocation5 + $0x90] sm:$0xff]
    %v130 = vld [vmem:[#allocation5 + $0x98] sm:$0xff]
    %v131 = vld [vmem:[#allocation5 + $0xa0] sm:$0xff]
    %v132 = vld [vmem:[#allocation5 + $0xa8] sm:$0xff]
    %v133 = vld [vmem:[#allocation5 + $0xb0] sm:$0xff]
    %v134 = vld [vmem:[#allocation5 + $0xb8] sm:$0xff]
    %v135 = vld [vmem:[#allocation5 + $0xc0] sm:$0xff]
    %v136 = vld [vmem:[#allocation5 + $0xc8] sm:$0xff]
    %v137 = vld [vmem:[#allocation5 + $0xd0] sm:$0xff]
    %v138 = vld [vmem:[#allocation5 + $0xd8] sm:$0xff]
    %v139 = vld [vmem:[#allocation5 + $0xe0] sm:$0xff]
    %v140 = vld [vmem:[#allocation5 + $0xe8] sm:$0xff]
    %v141 = vld [vmem:[#allocation5 + $0xf0] sm:$0xff]
    %v142 = vld [vmem:[#allocation5 + $0xf8] sm:$0xff]
    %v143 = vld [vmem:[%s3] sm:$0xf]
    %v144 = vld [vmem:[%s0] sm:$0xf]
    %v145 = vld [vmem:[%s0 + $0x4] sm:$0xf]
    %v146 = vld [vmem:[%s0 + $0x8] sm:$0xf]
    %v147 = vld [vmem:[%s0 + $0xc] sm:$0xf]
    %v148 = vld [vmem:[%s0 + $0x10] sm:$0xf]
    %v149 = vld [vmem:[%s0 + $0x14] sm:$0xf]
    %v150 = vld [vmem:[%s0 + $0x18] sm:$0xf]
    %v151 = vld [vmem:[%s0 + $0x1c] sm:$0xf]
    %v153 = vlaneseq
    %v154 = vshrl.u32 %v153, 7
    %v155 = vsub.s32 0, %v154
    %v156 = vrot.slane %v143, %v155
    %v157 = vlaneseq
    %v158 = vshrl.u32 %v157, 7
    %v159 = vsub.s32 1, %v158
    %v160 = vrot.slane %v143, %v159
    %v161 = vlaneseq
    %v162 = vshrl.u32 %v161, 7
    %v163 = vsub.s32 2, %v162
    %v164 = vrot.slane %v143, %v163
    %v165 = vlaneseq
    %v166 = vshrl.u32 %v165, 7
    %v167 = vsub.s32 3, %v166
    %v168 = vrot.slane %v143, %v167
    %v181 = vunpack.c.l.b16 %v144
    %v182 = vunpack.c.l.b16 %v145
    %v183 = vunpack.c.l.b16 %v146
    %v184 = vunpack.c.l.b16 %v147
    %v185 = vunpack.c.l.b16 %v148
    %v186 = vunpack.c.l.b16 %v149
    %v187 = vunpack.c.l.b16 %v150
    %v188 = vunpack.c.l.b16 %v151
    %v189 = vpack.c.b16 %v182, %v181
    %v190 = vpack.c.b16 %v184, %v183
    %v191 = vpack.c.b16 %v186, %v185
    %v192 = vpack.c.b16 %v188, %v187
    %v197 = vunpack.c.l.b16 %v107
    %v198 = vunpack.c.h.b16 %v107
    %v199 = vunpack.c.l.b16 %v108
    %v200 = vunpack.c.h.b16 %v108
    %v201 = vunpack.c.l.b16 %v109
    %v202 = vunpack.c.h.b16 %v109
    %v203 = vunpack.c.l.b16 %v110
    %v204 = vunpack.c.h.b16 %v110
    %v205 = vpack.c.b16 %v201, %v197
    %v206 = vpack.c.b16 %v202, %v198
    %v207 = vpack.c.b16 %v203, %v199
    %v208 = vpack.c.b16 %v204, %v200
    %vm213 = vcmask 130048
    %v215 = vsel %vm213, %v189, 0
    %v218 = vsel %vm213, %v190, 0
    %v221 = vsel %vm213, %v191, 0
    %v224 = vsel %vm213, %v192, 0
    %226 = vmatprep.subr.bf16.mxu0 %v206
    %227 = vmatpush1.bf16.msra.mxu0 %v205
    %228 = vmatprep.subr.bf16.mxu0 0
    %229 = vmatpush1.bf16.msra.mxu0 0
    %230 = vmatprep.subr.bf16.mxu0 0
    %231 = vmatpush1.bf16.msra.mxu0 0
    %232 = vmatprep.subr.bf16.mxu0 0
    %233 = vmatpush1.bf16.msra.mxu0 0
    %234 = vmatprep.subr.bf16.mxu0 0
    %235 = vmatpush1.bf16.msra.mxu0 0
    %236 = vmatprep.subr.bf16.mxu0 0
    %237 = vmatpush1.bf16.msra.mxu0 0
    %238 = vmatprep.subr.bf16.mxu0 0
    %239 = vmatpush1.bf16.msra.mxu0 0
    %240 = vmatprep.subr.bf16.mxu0 0
    %241 = vmatpush1.bf16.msra.mxu0 0
    %242 = vmatprep.subr.bf16.mxu0 0
    %243 = vmatpush1.bf16.msra.mxu0 0
    %244 = vmatprep.subr.bf16.mxu0 0
    %245 = vmatpush1.bf16.msra.mxu0 0
    %246 = vmatprep.subr.bf16.mxu0 0
    %247 = vmatpush1.bf16.msra.mxu0 0
    %248 = vmatprep.subr.bf16.mxu0 0
    %249 = vmatpush1.bf16.msra.mxu0 0
    %250 = vmatprep.subr.bf16.mxu0 0
    %251 = vmatpush1.bf16.msra.mxu0 0
    %252 = vmatprep.subr.bf16.mxu0 0
    %253 = vmatpush1.bf16.msra.mxu0 0
    %254 = vmatprep.subr.bf16.mxu0 0
    %255 = vmatpush1.bf16.msra.mxu0 0
    %256 = vmatprep.subr.bf16.mxu0 0
    %257 = vmatpush1.bf16.msra.mxu0 0
    %258 = vmatprep.mubr.bf16.mxu0 0
    %259 = vmatmul.mubr.bf16.gmra.mrb[0].mxu0 %v215
    %v260 = vpop.f32.mrb[0].mxu0
    %v261 = vadd.f32 %v156, %v260
    %v262 = vpop.f32.mrb[0].mxu0
    %v263 = vadd.f32 %v160, %v262
    %v264 = vpop.f32.mrb[0].mxu0
    %v265 = vadd.f32 %v156, %v264
    %v266 = vpop.f32.mrb[0].mxu0
    %v267 = vadd.f32 %v160, %v266
    %268 = vmatprep.mubr.bf16.mxu0 0
    %269 = vmatmul.mubr.bf16.gmra.mrb[0].mxu0 %v218
    %v270 = vpop.f32.mrb[0].mxu0
    %v271 = vadd.f32 %v156, %v270
    %v272 = vpop.f32.mrb[0].mxu0
    %v273 = vadd.f32 %v160, %v272
    %v274 = vpop.f32.mrb[0].mxu0
    %v275 = vadd.f32 %v156, %v274
    %v276 = vpop.f32.mrb[0].mxu0
    %v277 = vadd.f32 %v160, %v276
    %278 = vmatprep.mubr.bf16.mxu0 0
    %279 = vmatmul.mubr.bf16.gmra.mrb[0].mxu0 %v221
    %v280 = vpop.f32.mrb[0].mxu0
    %v281 = vadd.f32 %v156, %v280
    %v282 = vpop.f32.mrb[0].mxu0
    %v283 = vadd.f32 %v160, %v282
    %v284 = vpop.f32.mrb[0].mxu0
    %v285 = vadd.f32 %v156, %v284
    %v286 = vpop.f32.mrb[0].mxu0
    %v287 = vadd.f32 %v160, %v286
    %288 = vmatprep.mubr.bf16.mxu0 0
    %289 = vmatmul.mubr.bf16.gmra.mrb[0].mxu0 %v224
    %v290 = vpop.f32.mrb[0].mxu0
    %v291 = vadd.f32 %v156, %v290
    %v292 = vpop.f32.mrb[0].mxu0
    %v293 = vadd.f32 %v160, %v292
    %v294 = vpop.f32.mrb[0].mxu0
    %v295 = vadd.f32 %v156, %v294
    %v296 = vpop.f32.mrb[0].mxu0
    %v297 = vadd.f32 %v160, %v296
    %298 = vdwg.mxu0
    %299 = vmatprep.subr.bf16.mxu0 %v208
    %300 = vmatpush1.bf16.msra.mxu0 %v207
    %301 = vmatprep.subr.bf16.mxu0 0
    %302 = vmatpush1.bf16.msra.mxu0 0
    %303 = vmatprep.subr.bf16.mxu0 0
    %304 = vmatpush1.bf16.msra.mxu0 0
    %305 = vmatprep.subr.bf16.mxu0 0
    %306 = vmatpush1.bf16.msra.mxu0 0
    %307 = vmatprep.subr.bf16.mxu0 0
    %308 = vmatpush1.bf16.msra.mxu0 0
    %309 = vmatprep.subr.bf16.mxu0 0
    %310 = vmatpush1.bf16.msra.mxu0 0
    %311 = vmatprep.subr.bf16.mxu0 0
    %312 = vmatpush1.bf16.msra.mxu0 0
    %313 = vmatprep.subr.bf16.mxu0 0
    %314 = vmatpush1.bf16.msra.mxu0 0
    %315 = vmatprep.subr.bf16.mxu0 0
    %316 = vmatpush1.bf16.msra.mxu0 0
    %317 = vmatprep.subr.bf16.mxu0 0
    %318 = vmatpush1.bf16.msra.mxu0 0
    %319 = vmatprep.subr.bf16.mxu0 0
    %320 = vmatpush1.bf16.msra.mxu0 0
    %321 = vmatprep.subr.bf16.mxu0 0
    %322 = vmatpush1.bf16.msra.mxu0 0
    %323 = vmatprep.subr.bf16.mxu0 0
    %324 = vmatpush1.bf16.msra.mxu0 0
    %325 = vmatprep.subr.bf16.mxu0 0
    %326 = vmatpush1.bf16.msra.mxu0 0
    %327 = vmatprep.subr.bf16.mxu0 0
    %328 = vmatpush1.bf16.msra.mxu0 0
    %329 = vmatprep.subr.bf16.mxu0 0
    %330 = vmatpush1.bf16.msra.mxu0 0
    %331 = vmatprep.mubr.bf16.mxu0 0
    %332 = vmatmul.mubr.bf16.gmra.mrb[0].mxu0 %v215
    %v333 = vpop.f32.mrb[0].mxu0
    %v334 = vadd.f32 %v164, %v333
    %v335 = vpop.f32.mrb[0].mxu0
    %v336 = vadd.f32 %v168, %v335
    %v337 = vpop.f32.mrb[0].mxu0
    %v338 = vadd.f32 %v164, %v337
    %v339 = vpop.f32.mrb[0].mxu0
    %v340 = vadd.f32 %v168, %v339
    %341 = vmatprep.mubr.bf16.mxu0 0
    %342 = vmatmul.mubr.bf16.gmra.mrb[0].mxu0 %v218
    %v343 = vpop.f32.mrb[0].mxu0
    %v344 = vadd.f32 %v164, %v343
    %v345 = vpop.f32.mrb[0].mxu0
    %v346 = vadd.f32 %v168, %v345
    %v347 = vpop.f32.mrb[0].mxu0
    %v348 = vadd.f32 %v164, %v347
    %v349 = vpop.f32.mrb[0].mxu0
    %v350 = vadd.f32 %v168, %v349
    %351 = vmatprep.mubr.bf16.mxu0 0
    %352 = vmatmul.mubr.bf16.gmra.mrb[0].mxu0 %v221
    %v353 = vpop.f32.mrb[0].mxu0
    %v354 = vadd.f32 %v164, %v353
    %v355 = vpop.f32.mrb[0].mxu0
    %v356 = vadd.f32 %v168, %v355
    %v357 = vpop.f32.mrb[0].mxu0
    %v358 = vadd.f32 %v164, %v357
    %v359 = vpop.f32.mrb[0].mxu0
    %v360 = vadd.f32 %v168, %v359
    %361 = vmatprep.mubr.bf16.mxu0 0
    %362 = vmatmul.mubr.bf16.gmra.mrb[0].mxu0 %v224
    %v363 = vpop.f32.mrb[0].mxu0
    %v364 = vadd.f32 %v164, %v363
    %v365 = vpop.f32.mrb[0].mxu0
    %v366 = vadd.f32 %v168, %v365
    %v367 = vpop.f32.mrb[0].mxu0
    %v368 = vadd.f32 %v164, %v367
    %v369 = vpop.f32.mrb[0].mxu0
    %v370 = vadd.f32 %v168, %v369
    %371 = vdwg.mxu0
    %372 = vst [vmem:[#allocation4] sm:$0xff] %v261
    %373 = vst [vmem:[#allocation4 + $0x8] sm:$0xff] %v263
    %374 = vst [vmem:[#allocation4 + $0x10] sm:$0xff] %v334
    %375 = vst [vmem:[#allocation4 + $0x18] sm:$0xff] %v336
    %376 = vst [vmem:[#allocation4 + $0x20] sm:$0xff] %v265
    %377 = vst [vmem:[#allocation4 + $0x28] sm:$0xff] %v267
    %378 = vst [vmem:[#allocation4 + $0x30] sm:$0xff] %v338
    %379 = vst [vmem:[#allocation4 + $0x38] sm:$0xff] %v340
    %380 = vst [vmem:[#allocation4 + $0x40] sm:$0xff] %v271
    %381 = vst [vmem:[#allocation4 + $0x48] sm:$0xff] %v273
    %382 = vst [vmem:[#allocation4 + $0x50] sm:$0xff] %v344
    %383 = vst [vmem:[#allocation4 + $0x58] sm:$0xff] %v346
    %384 = vst [vmem:[#allocation4 + $0x60] sm:$0xff] %v275
    %385 = vst [vmem:[#allocation4 + $0x68] sm:$0xff] %v277
    %386 = vst [vmem:[#allocation4 + $0x70] sm:$0xff] %v348
    %387 = vst [vmem:[#allocation4 + $0x78] sm:$0xff] %v350
    %388 = vst [vmem:[#allocation4 + $0x80] sm:$0xff] %v281
    %389 = vst [vmem:[#allocation4 + $0x88] sm:$0xff] %v283
    %390 = vst [vmem:[#allocation4 + $0x90] sm:$0xff] %v354
    %391 = vst [vmem:[#allocation4 + $0x98] sm:$0xff] %v356
    %392 = vst [vmem:[#allocation4 + $0xa0] sm:$0xff] %v285
    %393 = vst [vmem:[#allocation4 + $0xa8] sm:$0xff] %v287
    %394 = vst [vmem:[#allocation4 + $0xb0] sm:$0xff] %v358
    %395 = vst [vmem:[#allocation4 + $0xb8] sm:$0xff] %v360
    %396 = vst [vmem:[#allocation4 + $0xc0] sm:$0xff] %v291
    %397 = vst [vmem:[#allocation4 + $0xc8] sm:$0xff] %v293
    %398 = vst [vmem:[#allocation4 + $0xd0] sm:$0xff] %v364
    %399 = vst [vmem:[#allocation4 + $0xd8] sm:$0xff] %v366
    %400 = vst [vmem:[#allocation4 + $0xe0] sm:$0xff] %v295
    %401 = vst [vmem:[#allocation4 + $0xe8] sm:$0xff] %v297
    %402 = vst [vmem:[#allocation4 + $0xf0] sm:$0xff] %v368
    %403 = vst [vmem:[#allocation4 + $0xf8] sm:$0xff] %v370
    %s404 = smul.u32 0, 4
    %s405 = smul.addr %s404, 8
    %s406 = scalar_lea.vmem [#allocation4], %s405
    %v407 = vld [vmem:[%s406] sm:$0xff]
    %v408 = vld [vmem:[%s406 + $0x8] sm:$0xff]
    %v409 = vld [vmem:[%s406 + $0x10] sm:$0xff]
    %v410 = vld [vmem:[%s406 + $0x18] sm:$0xff]
    %v443 = vunpack.c.l.b16 %v111
    %v444 = vunpack.c.h.b16 %v111
    %v445 = vunpack.c.l.b16 %v112
    %v446 = vunpack.c.h.b16 %v112
    %v447 = vunpack.c.l.b16 %v113
    %v448 = vunpack.c.h.b16 %v113
    %v449 = vunpack.c.l.b16 %v114
    %v450 = vunpack.c.h.b16 %v114
    %v451 = vunpack.c.l.b16 %v115
    %v452 = vunpack.c.h.b16 %v115
    %v453 = vunpack.c.l.b16 %v116
    %v454 = vunpack.c.h.b16 %v116
    %v455 = vunpack.c.l.b16 %v117
    %v456 = vunpack.c.h.b16 %v117
    %v457 = vunpack.c.l.b16 %v118
    %v458 = vunpack.c.h.b16 %v118
    %v459 = vunpack.c.l.b16 %v119
    %v460 = vunpack.c.h.b16 %v119
    %v461 = vunpack.c.l.b16 %v120
    %v462 = vunpack.c.h.b16 %v120
    %v463 = vunpack.c.l.b16 %v121
    %v464 = vunpack.c.h.b16 %v121
    %v465 = vunpack.c.l.b16 %v122
    %v466 = vunpack.c.h.b16 %v122
    %v467 = vunpack.c.l.b16 %v123
    %v468 = vunpack.c.h.b16 %v123
    %v469 = vunpack.c.l.b16 %v124
    %v470 = vunpack.c.h.b16 %v124
    %v471 = vunpack.c.l.b16 %v125
    %v472 = vunpack.c.h.b16 %v125
    %v473 = vunpack.c.l.b16 %v126
    %v474 = vunpack.c.h.b16 %v126
    %v475 = vunpack.c.l.b16 %v127
    %v476 = vunpack.c.h.b16 %v127
    %v477 = vunpack.c.l.b16 %v128
    %v478 = vunpack.c.h.b16 %v128
    %v479 = vunpack.c.l.b16 %v129
    %v480 = vunpack.c.h.b16 %v129
    %v481 = vunpack.c.l.b16 %v130
    %v482 = vunpack.c.h.b16 %v130
    %v483 = vunpack.c.l.b16 %v131
    %v484 = vunpack.c.h.b16 %v131
    %v485 = vunpack.c.l.b16 %v132
    %v486 = vunpack.c.h.b16 %v132
    %v487 = vunpack.c.l.b16 %v133
    %v488 = vunpack.c.h.b16 %v133
    %v489 = vunpack.c.l.b16 %v134
    %v490 = vunpack.c.h.b16 %v134
    %v491 = vunpack.c.l.b16 %v135
    %v492 = vunpack.c.h.b16 %v135
    %v493 = vunpack.c.l.b16 %v136
    %v494 = vunpack.c.h.b16 %v136
    %v495 = vunpack.c.l.b16 %v137
    %v496 = vunpack.c.h.b16 %v137
    %v497 = vunpack.c.l.b16 %v138
    %v498 = vunpack.c.h.b16 %v138
    %v499 = vunpack.c.l.b16 %v139
    %v500 = vunpack.c.h.b16 %v139
    %v501 = vunpack.c.l.b16 %v140
    %v502 = vunpack.c.h.b16 %v140
    %v503 = vunpack.c.l.b16 %v141
    %v504 = vunpack.c.h.b16 %v141
    %v505 = vunpack.c.l.b16 %v142
    %v506 = vunpack.c.h.b16 %v142
    %v507 = vpack.c.b16 %v447, %v443
    %v508 = vpack.c.b16 %v448, %v444
    %v509 = vpack.c.b16 %v449, %v445
    %v510 = vpack.c.b16 %v450, %v446
    %v511 = vpack.c.b16 %v455, %v451
    %v512 = vpack.c.b16 %v456, %v452
    %v513 = vpack.c.b16 %v457, %v453
    %v514 = vpack.c.b16 %v458, %v454
    %v515 = vpack.c.b16 %v463, %v459
    %v516 = vpack.c.b16 %v464, %v460
    %v517 = vpack.c.b16 %v465, %v461
    %v518 = vpack.c.b16 %v466, %v462
    %v519 = vpack.c.b16 %v471, %v467
    %v520 = vpack.c.b16 %v472, %v468
    %v521 = vpack.c.b16 %v473, %v469
    %v522 = vpack.c.b16 %v474, %v470
    %v523 = vpack.c.b16 %v479, %v475
    %v524 = vpack.c.b16 %v480, %v476
    %v525 = vpack.c.b16 %v481, %v477
    %v526 = vpack.c.b16 %v482, %v478
    %v527 = vpack.c.b16 %v487, %v483
    %v528 = vpack.c.b16 %v488, %v484
    %v529 = vpack.c.b16 %v489, %v485
    %v530 = vpack.c.b16 %v490, %v486
    %v531 = vpack.c.b16 %v495, %v491
    %v532 = vpack.c.b16 %v496, %v492
    %v533 = vpack.c.b16 %v497, %v493
    %v534 = vpack.c.b16 %v498, %v494
    %v535 = vpack.c.b16 %v503, %v499
    %v536 = vpack.c.b16 %v504, %v500
    %v537 = vpack.c.b16 %v505, %v501
    %v538 = vpack.c.b16 %v506, %v502
    %571 = vmatprep.subr.bf16.mxu0 %v508
    %572 = vmatpush1.bf16.msra.mxu0 %v507
    %573 = vmatprep.subr.bf16.mxu0 %v512
    %574 = vmatpush1.bf16.msra.mxu0 %v511
    %575 = vmatprep.subr.bf16.mxu0 %v516
    %576 = vmatpush1.bf16.msra.mxu0 %v515
    %577 = vmatprep.subr.bf16.mxu0 %v520
    %578 = vmatpush1.bf16.msra.mxu0 %v519
    %579 = vmatprep.subr.bf16.mxu0 %v524
    %580 = vmatpush1.bf16.msra.mxu0 %v523
    %581 = vmatprep.subr.bf16.mxu0 %v528
    %582 = vmatpush1.bf16.msra.mxu0 %v527
    %583 = vmatprep.subr.bf16.mxu0 %v532
    %584 = vmatpush1.bf16.msra.mxu0 %v531
    %585 = vmatprep.subr.bf16.mxu0 %v536
    %586 = vmatpush1.bf16.msra.mxu0 %v535
    %587 = vmatprep.subr.bf16.mxu0 0
    %588 = vmatpush1.bf16.msra.mxu0 0
    %589 = vmatprep.subr.bf16.mxu0 0
    %590 = vmatpush1.bf16.msra.mxu0 0
    %591 = vmatprep.subr.bf16.mxu0 0
    %592 = vmatpush1.bf16.msra.mxu0 0
    %593 = vmatprep.subr.bf16.mxu0 0
    %594 = vmatpush1.bf16.msra.mxu0 0
    %595 = vmatprep.subr.bf16.mxu0 0
    %596 = vmatpush1.bf16.msra.mxu0 0
    %597 = vmatprep.subr.bf16.mxu0 0
    %598 = vmatpush1.bf16.msra.mxu0 0
    %599 = vmatprep.subr.bf16.mxu0 0
    %600 = vmatpush1.bf16.msra.mxu0 0
    %601 = vmatprep.subr.bf16.mxu0 0
    %602 = vmatpush1.bf16.msra.mxu0 0
    %603 = vmatprep.mubr.bf16.mxu0 0
    %604 = vmatmul.mubr.bf16.gmra.mrb[0].mxu0 0
    %v605 = vpop.f32.mrb[0].mxu0
    %v606 = vadd.f32 0.0, %v605
    %v607 = vpop.f32.mrb[0].mxu0
    %v608 = vadd.f32 0.0, %v607
    %v609 = vpop.f32.mrb[0].mxu0
    %v610 = vpop.f32.mrb[0].mxu0
    %611 = vdwg.mxu0
    %612 = vmatprep.subr.bf16.mxu0 %v510
    %613 = vmatpush1.bf16.msra.mxu0 %v509
    %614 = vmatprep.subr.bf16.mxu0 %v514
    %615 = vmatpush1.bf16.msra.mxu0 %v513
    %616 = vmatprep.subr.bf16.mxu0 %v518
    %617 = vmatpush1.bf16.msra.mxu0 %v517
    %618 = vmatprep.subr.bf16.mxu0 %v522
    %619 = vmatpush1.bf16.msra.mxu0 %v521
    %620 = vmatprep.subr.bf16.mxu0 %v526
    %621 = vmatpush1.bf16.msra.mxu0 %v525
    %622 = vmatprep.subr.bf16.mxu0 %v530
    %623 = vmatpush1.bf16.msra.mxu0 %v529
    %624 = vmatprep.subr.bf16.mxu0 %v534
    %625 = vmatpush1.bf16.msra.mxu0 %v533
    %626 = vmatprep.subr.bf16.mxu0 %v538
    %627 = vmatpush1.bf16.msra.mxu0 %v537
    %628 = vmatprep.subr.bf16.mxu0 0
    %629 = vmatpush1.bf16.msra.mxu0 0
    %630 = vmatprep.subr.bf16.mxu0 0
    %631 = vmatpush1.bf16.msra.mxu0 0
    %632 = vmatprep.subr.bf16.mxu0 0
    %633 = vmatpush1.bf16.msra.mxu0 0
    %634 = vmatprep.subr.bf16.mxu0 0
    %635 = vmatpush1.bf16.msra.mxu0 0
    %636 = vmatprep.subr.bf16.mxu0 0
    %637 = vmatpush1.bf16.msra.mxu0 0
    %638 = vmatprep.subr.bf16.mxu0 0
    %639 = vmatpush1.bf16.msra.mxu0 0
    %640 = vmatprep.subr.bf16.mxu0 0
    %641 = vmatpush1.bf16.msra.mxu0 0
    %642 = vmatprep.subr.bf16.mxu0 0
    %643 = vmatpush1.bf16.msra.mxu0 0
    %644 = vmatprep.mubr.bf16.mxu0 0
    %645 = vmatmul.mubr.bf16.gmra.mrb[0].mxu0 0
    %v646 = vpop.f32.mrb[0].mxu0
    %v647 = vadd.f32 0.0, %v646
    %v648 = vpop.f32.mrb[0].mxu0
    %v649 = vadd.f32 0.0, %v648
    %v650 = vpop.f32.mrb[0].mxu0
    %v651 = vpop.f32.mrb[0].mxu0
    %652 = vdwg.mxu0
    %v653 = vadd.f32 %v407, %v606
    %v654 = vadd.f32 %v408, %v608
    %v655 = vadd.f32 %v409, %v647
    %v656 = vadd.f32 %v410, %v649
    %v657 = vxor.u32 %v653, 2147483648
    %v658 = vmul.f32 %v657, 1.442695
    %v659 = vpow.pop %v658
    %v660 = vadd.f32 %v659, 1.0
    %v661 = vrcp.pop %v660
    %v662 = vmul.f32 1.0, %v661
    %v663 = vxor.u32 %v654, 2147483648
    %v664 = vmul.f32 %v663, 1.442695
    %v665 = vpow.pop %v664
    %v666 = vadd.f32 %v665, 1.0
    %v667 = vrcp.pop %v666
    %v668 = vmul.f32 1.0, %v667
    %v669 = vtanh.pop %v655
    %v670 = vxor.u32 %v656, 2147483648
    %v671 = vmul.f32 %v670, 1.442695
    %v672 = vpow.pop %v671
    %v673 = vadd.f32 %v672, 1.0
    %v674 = vrcp.pop %v673
    %v675 = vmul.f32 1.0, %v674
    %v676 = vmul.f32 %v668, 0.0
    %v677 = vmul.f32 %v662, %v669
    %v678 = vadd.f32 %v676, %v677
    %v679 = vtanh.pop %v678
    %v680 = vmul.f32 %v675, %v679
    %681 = vst [vmem:[#allocation2] sm:$0xff] %v680
    %s682 = smul.u32 1, 4
    %s683 = smul.addr %s682, 8
    %s684 = scalar_lea.vmem [#allocation4], %s683
    %v685 = vld [vmem:[%s684] sm:$0xff]
    %v686 = vld [vmem:[%s684 + $0x8] sm:$0xff]
    %v687 = vld [vmem:[%s684 + $0x10] sm:$0xff]
    %v688 = vld [vmem:[%s684 + $0x18] sm:$0xff]
    %v689 = vpack.c.bf16 %v680, %v680
    %690 = vmatprep.subr.bf16.mxu0 %v508
    %691 = vmatpush1.bf16.msra.mxu0 %v507
    %692 = vmatprep.subr.bf16.mxu0 %v512
    %693 = vmatpush1.bf16.msra.mxu0 %v511
    %694 = vmatprep.subr.bf16.mxu0 %v516
    %695 = vmatpush1.bf16.msra.mxu0 %v515
    %696 = vmatprep.subr.bf16.mxu0 %v520
    %697 = vmatpush1.bf16.msra.mxu0 %v519
    %698 = vmatprep.subr.bf16.mxu0 %v524
    %699 = vmatpush1.bf16.msra.mxu0 %v523
    %700 = vmatprep.subr.bf16.mxu0 %v528
    %701 = vmatpush1.bf16.msra.mxu0 %v527
    %702 = vmatprep.subr.bf16.mxu0 %v532
    %703 = vmatpush1.bf16.msra.mxu0 %v531
    %704 = vmatprep.subr.bf16.mxu0 %v536
    %705 = vmatpush1.bf16.msra.mxu0 %v535
    %706 = vmatprep.subr.bf16.mxu0 0
    %707 = vmatpush1.bf16.msra.mxu0 0
    %708 = vmatprep.subr.bf16.mxu0 0
    %709 = vmatpush1.bf16.msra.mxu0 0
    %710 = vmatprep.subr.bf16.mxu0 0
    %711 = vmatpush1.bf16.msra.mxu0 0
    %712 = vmatprep.subr.bf16.mxu0 0
    %713 = vmatpush1.bf16.msra.mxu0 0
    %714 = vmatprep.subr.bf16.mxu0 0
    %715 = vmatpush1.bf16.msra.mxu0 0
    %716 = vmatprep.subr.bf16.mxu0 0
    %717 = vmatpush1.bf16.msra.mxu0 0
    %718 = vmatprep.subr.bf16.mxu0 0
    %719 = vmatpush1.bf16.msra.mxu0 0
    %720 = vmatprep.subr.bf16.mxu0 0
    %721 = vmatpush1.bf16.msra.mxu0 0
    %722 = vmatprep.mubr.bf16.mxu0 0
    %723 = vmatmul.mubr.bf16.gmra.mrb[0].mxu0 %v689
    %v724 = vpop.f32.mrb[0].mxu0
    %v725 = vadd.f32 0.0, %v724
    %v726 = vpop.f32.mrb[0].mxu0
    %v727 = vadd.f32 0.0, %v726
    %v728 = vpop.f32.mrb[0].mxu0
    %v729 = vpop.f32.mrb[0].mxu0
    %730 = vdwg.mxu0
    %731 = vmatprep.subr.bf16.mxu0 %v510
    %732 = vmatpush1.bf16.msra.mxu0 %v509
    %733 = vmatprep.subr.bf16.mxu0 %v514
    %734 = vmatpush1.bf16.msra.mxu0 %v513
    %735 = vmatprep.subr.bf16.mxu0 %v518
    %736 = vmatpush1.bf16.msra.mxu0 %v517
    %737 = vmatprep.subr.bf16.mxu0 %v522
    %738 = vmatpush1.bf16.msra.mxu0 %v521
    %739 = vmatprep.subr.bf16.mxu0 %v526
    %740 = vmatpush1.bf16.msra.mxu0 %v525
    %741 = vmatprep.subr.bf16.mxu0 %v530
    %742 = vmatpush1.bf16.msra.mxu0 %v529
    %743 = vmatprep.subr.bf16.mxu0 %v534
    %744 = vmatpush1.bf16.msra.mxu0 %v533
    %745 = vmatprep.subr.bf16.mxu0 %v538
    %746 = vmatpush1.bf16.msra.mxu0 %v537
    %747 = vmatprep.subr.bf16.mxu0 0
    %748 = vmatpush1.bf16.msra.mxu0 0
    %749 = vmatprep.subr.bf16.mxu0 0
    %750 = vmatpush1.bf16.msra.mxu0 0
    %751 = vmatprep.subr.bf16.mxu0 0
    %752 = vmatpush1.bf16.msra.mxu0 0
    %753 = vmatprep.subr.bf16.mxu0 0
    %754 = vmatpush1.bf16.msra.mxu0 0
    %755 = vmatprep.subr.bf16.mxu0 0
    %756 = vmatpush1.bf16.msra.mxu0 0
    %757 = vmatprep.subr.bf16.mxu0 0
    %758 = vmatpush1.bf16.msra.mxu0 0
    %759 = vmatprep.subr.bf16.mxu0 0
    %760 = vmatpush1.bf16.msra.mxu0 0
    %761 = vmatprep.subr.bf16.mxu0 0
    %762 = vmatpush1.bf16.msra.mxu0 0
    %763 = vmatprep.mubr.bf16.mxu0 0
    %764 = vmatmul.mubr.bf16.gmra.mrb[0].mxu0 %v689
    %v765 = vpop.f32.mrb[0].mxu0
    %v766 = vadd.f32 0.0, %v765
    %v767 = vpop.f32.mrb[0].mxu0
    %v768 = vadd.f32 0.0, %v767
    %v769 = vpop.f32.mrb[0].mxu0
    %v770 = vpop.f32.mrb[0].mxu0
    %771 = vdwg.mxu0
    %v772 = vadd.f32 %v685, %v725
    %v773 = vadd.f32 %v686, %v727
    %v774 = vadd.f32 %v687, %v766
    %v775 = vadd.f32 %v688, %v768
    %v776 = vxor.u32 %v772, 2147483648
    %v777 = vmul.f32 %v776, 1.442695
    %v778 = vpow.pop %v777
    %v779 = vadd.f32 %v778, 1.0
    %v780 = vrcp.pop %v779
    %v781 = vmul.f32 1.0, %v780
    %v782 = vxor.u32 %v773, 2147483648
    %v783 = vmul.f32 %v782, 1.442695
    %v784 = vpow.pop %v783
    %v785 = vadd.f32 %v784, 1.0
    %v786 = vrcp.pop %v785
    %v787 = vmul.f32 1.0, %v786
    %v788 = vtanh.pop %v774
    %v789 = vxor.u32 %v775, 2147483648
    %v790 = vmul.f32 %v789, 1.442695
    %v791 = vpow.pop %v790
    %v792 = vadd.f32 %v791, 1.0
    %v793 = vrcp.pop %v792
    %v794 = vmul.f32 1.0, %v793
    %v795 = vmul.f32 %v787, %v678
    %v796 = vmul.f32 %v781, %v788
    %v797 = vadd.f32 %v795, %v796
    %v798 = vtanh.pop %v797
    %v799 = vmul.f32 %v794, %v798
    %s800 = scalar_lea.vmem [#allocation2], 8
    %801 = vst [vmem:[%s800] sm:$0xff] %v799
    %s802 = smul.u32 2, 4
    %s803 = smul.addr %s802, 8
    %s804 = scalar_lea.vmem [#allocation4], %s803
    %v805 = vld [vmem:[%s804] sm:$0xff]
    %v806 = vld [vmem:[%s804 + $0x8] sm:$0xff]
    %v807 = vld [vmem:[%s804 + $0x10] sm:$0xff]
    %v808 = vld [vmem:[%s804 + $0x18] sm:$0xff]
    %v809 = vpack.c.bf16 %v799, %v799
    %810 = vmatprep.subr.bf16.mxu0 %v508
    %811 = vmatpush1.bf16.msra.mxu0 %v507
    %812 = vmatprep.subr.bf16.mxu0 %v512
    %813 = vmatpush1.bf16.msra.mxu0 %v511
    %814 = vmatprep.subr.bf16.mxu0 %v516
    %815 = vmatpush1.bf16.msra.mxu0 %v515
    %816 = vmatprep.subr.bf16.mxu0 %v520
    %817 = vmatpush1.bf16.msra.mxu0 %v519
    %818 = vmatprep.subr.bf16.mxu0 %v524
    %819 = vmatpush1.bf16.msra.mxu0 %v523
    %820 = vmatprep.subr.bf16.mxu0 %v528
    %821 = vmatpush1.bf16.msra.mxu0 %v527
    %822 = vmatprep.subr.bf16.mxu0 %v532
    %823 = vmatpush1.bf16.msra.mxu0 %v531
    %824 = vmatprep.subr.bf16.mxu0 %v536
    %825 = vmatpush1.bf16.msra.mxu0 %v535
    %826 = vmatprep.subr.bf16.mxu0 0
    %827 = vmatpush1.bf16.msra.mxu0 0
    %828 = vmatprep.subr.bf16.mxu0 0
    %829 = vmatpush1.bf16.msra.mxu0 0
    %830 = vmatprep.subr.bf16.mxu0 0
    %831 = vmatpush1.bf16.msra.mxu0 0
    %832 = vmatprep.subr.bf16.mxu0 0
    %833 = vmatpush1.bf16.msra.mxu0 0
    %834 = vmatprep.subr.bf16.mxu0 0
    %835 = vmatpush1.bf16.msra.mxu0 0
    %836 = vmatprep.subr.bf16.mxu0 0
    %837 = vmatpush1.bf16.msra.mxu0 0
    %838 = vmatprep.subr.bf16.mxu0 0
    %839 = vmatpush1.bf16.msra.mxu0 0
    %840 = vmatprep.subr.bf16.mxu0 0
    %841 = vmatpush1.bf16.msra.mxu0 0
    %842 = vmatprep.mubr.bf16.mxu0 0
    %843 = vmatmul.mubr.bf16.gmra.mrb[0].mxu0 %v809
    %v844 = vpop.f32.mrb[0].mxu0
    %v845 = vadd.f32 0.0, %v844
    %v846 = vpop.f32.mrb[0].mxu0
    %v847 = vadd.f32 0.0, %v846
    %v848 = vpop.f32.mrb[0].mxu0
    %v849 = vpop.f32.mrb[0].mxu0
    %850 = vdwg.mxu0
    %851 = vmatprep.subr.bf16.mxu0 %v510
    %852 = vmatpush1.bf16.msra.mxu0 %v509
    %853 = vmatprep.subr.bf16.mxu0 %v514
    %854 = vmatpush1.bf16.msra.mxu0 %v513
    %855 = vmatprep.subr.bf16.mxu0 %v518
    %856 = vmatpush1.bf16.msra.mxu0 %v517
    %857 = vmatprep.subr.bf16.mxu0 %v522
    %858 = vmatpush1.bf16.msra.mxu0 %v521
    %859 = vmatprep.subr.bf16.mxu0 %v526
    %860 = vmatpush1.bf16.msra.mxu0 %v525
    %861 = vmatprep.subr.bf16.mxu0 %v530
    %862 = vmatpush1.bf16.msra.mxu0 %v529
    %863 = vmatprep.subr.bf16.mxu0 %v534
    %864 = vmatpush1.bf16.msra.mxu0 %v533
    %865 = vmatprep.subr.bf16.mxu0 %v538
    %866 = vmatpush1.bf16.msra.mxu0 %v537
    %867 = vmatprep.subr.bf16.mxu0 0
    %868 = vmatpush1.bf16.msra.mxu0 0
    %869 = vmatprep.subr.bf16.mxu0 0
    %870 = vmatpush1.bf16.msra.mxu0 0
    %871 = vmatprep.subr.bf16.mxu0 0
    %872 = vmatpush1.bf16.msra.mxu0 0
    %873 = vmatprep.subr.bf16.mxu0 0
    %874 = vmatpush1.bf16.msra.mxu0 0
    %875 = vmatprep.subr.bf16.mxu0 0
    %876 = vmatpush1.bf16.msra.mxu0 0
    %877 = vmatprep.subr.bf16.mxu0 0
    %878 = vmatpush1.bf16.msra.mxu0 0
    %879 = vmatprep.subr.bf16.mxu0 0
    %880 = vmatpush1.bf16.msra.mxu0 0
    %881 = vmatprep.subr.bf16.mxu0 0
    %882 = vmatpush1.bf16.msra.mxu0 0
    %883 = vmatprep.mubr.bf16.mxu0 0
    %884 = vmatmul.mubr.bf16.gmra.mrb[0].mxu0 %v809
    %v885 = vpop.f32.mrb[0].mxu0
    %v886 = vadd.f32 0.0, %v885
    %v887 = vpop.f32.mrb[0].mxu0
    %v888 = vadd.f32 0.0, %v887
    %v889 = vpop.f32.mrb[0].mxu0
    %v890 = vpop.f32.mrb[0].mxu0
    %891 = vdwg.mxu0
    %v892 = vadd.f32 %v805, %v845
    %v893 = vadd.f32 %v806, %v847
    %v894 = vadd.f32 %v807, %v886
    %v895 = vadd.f32 %v808, %v888
    %v896 = vxor.u32 %v892, 2147483648
    %v897 = vmul.f32 %v896, 1.442695
    %v898 = vpow.pop %v897
    %v899 = vadd.f32 %v898, 1.0
    %v900 = vrcp.pop %v899
    %v901 = vmul.f32 1.0, %v900
    %v902 = vxor.u32 %v893, 2147483648
    %v903 = vmul.f32 %v902, 1.442695
    %v904 = vpow.pop %v903
    %v905 = vadd.f32 %v904, 1.0
    %v906 = vrcp.pop %v905
    %v907 = vmul.f32 1.0, %v906
    %v908 = vtanh.pop %v894
    %v909 = vxor.u32 %v895, 2147483648
    %v910 = vmul.f32 %v909, 1.442695
    %v911 = vpow.pop %v910
    %v912 = vadd.f32 %v911, 1.0
    %v913 = vrcp.pop %v912
    %v914 = vmul.f32 1.0, %v913
    %v915 = vmul.f32 %v907, %v797
    %v916 = vmul.f32 %v901, %v908
    %v917 = vadd.f32 %v915, %v916
    %v918 = vtanh.pop %v917
    %v919 = vmul.f32 %v914, %v918
    %s920 = scalar_lea.vmem [#allocation2], 16
    %921 = vst [vmem:[%s920] sm:$0xff] %v919
    %s922 = smul.u32 3, 4
    %s923 = smul.addr %s922, 8
    %s924 = scalar_lea.vmem [#allocation4], %s923
    %v925 = vld [vmem:[%s924] sm:$0xff]
    %v926 = vld [vmem:[%s924 + $0x8] sm:$0xff]
    %v927 = vld [vmem:[%s924 + $0x10] sm:$0xff]
    %v928 = vld [vmem:[%s924 + $0x18] sm:$0xff]
    %v929 = vpack.c.bf16 %v919, %v919
    %930 = vmatprep.subr.bf16.mxu0 %v508
    %931 = vmatpush1.bf16.msra.mxu0 %v507
    %932 = vmatprep.subr.bf16.mxu0 %v512
    %933 = vmatpush1.bf16.msra.mxu0 %v511
    %934 = vmatprep.subr.bf16.mxu0 %v516
    %935 = vmatpush1.bf16.msra.mxu0 %v515
    %936 = vmatprep.subr.bf16.mxu0 %v520
    %937 = vmatpush1.bf16.msra.mxu0 %v519
    %938 = vmatprep.subr.bf16.mxu0 %v524
    %939 = vmatpush1.bf16.msra.mxu0 %v523
    %940 = vmatprep.subr.bf16.mxu0 %v528
    %941 = vmatpush1.bf16.msra.mxu0 %v527
    %942 = vmatprep.subr.bf16.mxu0 %v532
    %943 = vmatpush1.bf16.msra.mxu0 %v531
    %944 = vmatprep.subr.bf16.mxu0 %v536
    %945 = vmatpush1.bf16.msra.mxu0 %v535
    %946 = vmatprep.subr.bf16.mxu0 0
    %947 = vmatpush1.bf16.msra.mxu0 0
    %948 = vmatprep.subr.bf16.mxu0 0
    %949 = vmatpush1.bf16.msra.mxu0 0
    %950 = vmatprep.subr.bf16.mxu0 0
    %951 = vmatpush1.bf16.msra.mxu0 0
    %952 = vmatprep.subr.bf16.mxu0 0
    %953 = vmatpush1.bf16.msra.mxu0 0
    %954 = vmatprep.subr.bf16.mxu0 0
    %955 = vmatpush1.bf16.msra.mxu0 0
    %956 = vmatprep.subr.bf16.mxu0 0
    %957 = vmatpush1.bf16.msra.mxu0 0
    %958 = vmatprep.subr.bf16.mxu0 0
    %959 = vmatpush1.bf16.msra.mxu0 0
    %960 = vmatprep.subr.bf16.mxu0 0
    %961 = vmatpush1.bf16.msra.mxu0 0
    %962 = vmatprep.mubr.bf16.mxu0 0
    %963 = vmatmul.mubr.bf16.gmra.mrb[0].mxu0 %v929
    %v964 = vpop.f32.mrb[0].mxu0
    %v965 = vadd.f32 0.0, %v964
    %v966 = vpop.f32.mrb[0].mxu0
    %v967 = vadd.f32 0.0, %v966
    %v968 = vpop.f32.mrb[0].mxu0
    %v969 = vpop.f32.mrb[0].mxu0
    %970 = vdwg.mxu0
    %971 = vmatprep.subr.bf16.mxu0 %v510
    %972 = vmatpush1.bf16.msra.mxu0 %v509
    %973 = vmatprep.subr.bf16.mxu0 %v514
    %974 = vmatpush1.bf16.msra.mxu0 %v513
    %975 = vmatprep.subr.bf16.mxu0 %v518
    %976 = vmatpush1.bf16.msra.mxu0 %v517
    %977 = vmatprep.subr.bf16.mxu0 %v522
    %978 = vmatpush1.bf16.msra.mxu0 %v521
    %979 = vmatprep.subr.bf16.mxu0 %v526
    %980 = vmatpush1.bf16.msra.mxu0 %v525
    %981 = vmatprep.subr.bf16.mxu0 %v530
    %982 = vmatpush1.bf16.msra.mxu0 %v529
    %983 = vmatprep.subr.bf16.mxu0 %v534
    %984 = vmatpush1.bf16.msra.mxu0 %v533
    %985 = vmatprep.subr.bf16.mxu0 %v538
    %986 = vmatpush1.bf16.msra.mxu0 %v537
    %987 = vmatprep.subr.bf16.mxu0 0
    %988 = vmatpush1.bf16.msra.mxu0 0
    %989 = vmatprep.subr.bf16.mxu0 0
    %990 = vmatpush1.bf16.msra.mxu0 0
    %991 = vmatprep.subr.bf16.mxu0 0
    %992 = vmatpush1.bf16.msra.mxu0 0
    %993 = vmatprep.subr.bf16.mxu0 0
    %994 = vmatpush1.bf16.msra.mxu0 0
    %995 = vmatprep.subr.bf16.mxu0 0
    %996 = vmatpush1.bf16.msra.mxu0 0
    %997 = vmatprep.subr.bf16.mxu0 0
    %998 = vmatpush1.bf16.msra.mxu0 0
    %999 = vmatprep.subr.bf16.mxu0 0
    %1000 = vmatpush1.bf16.msra.mxu0 0
    %1001 = vmatprep.subr.bf16.mxu0 0
    %1002 = vmatpush1.bf16.msra.mxu0 0
    %1003 = vmatprep.mubr.bf16.mxu0 0
    %1004 = vmatmul.mubr.bf16.gmra.mrb[0].mxu0 %v929
    %v1005 = vpop.f32.mrb[0].mxu0
    %v1006 = vadd.f32 0.0, %v1005
    %v1007 = vpop.f32.mrb[0].mxu0
    %v1008 = vadd.f32 0.0, %v1007
    %v1009 = vpop.f32.mrb[0].mxu0
    %v1010 = vpop.f32.mrb[0].mxu0
    %1011 = vdwg.mxu0
    %v1012 = vadd.f32 %v925, %v965
    %v1013 = vadd.f32 %v926, %v967
    %v1014 = vadd.f32 %v927, %v1006
    %v1015 = vadd.f32 %v928, %v1008
    %v1016 = vxor.u32 %v1012, 2147483648
    %v1017 = vmul.f32 %v1016, 1.442695
    %v1018 = vpow.pop %v1017
    %v1019 = vadd.f32 %v1018, 1.0
    %v1020 = vrcp.pop %v1019
    %v1021 = vmul.f32 1.0, %v1020
    %v1022 = vxor.u32 %v1013, 2147483648
    %v1023 = vmul.f32 %v1022, 1.442695
    %v1024 = vpow.pop %v1023
    %v1025 = vadd.f32 %v1024, 1.0
    %v1026 = vrcp.pop %v1025
    %v1027 = vmul.f32 1.0, %v1026
    %v1028 = vtanh.pop %v1014
    %v1029 = vxor.u32 %v1015, 2147483648
    %v1030 = vmul.f32 %v1029, 1.442695
    %v1031 = vpow.pop %v1030
    %v1032 = vadd.f32 %v1031, 1.0
    %v1033 = vrcp.pop %v1032
    %v1034 = vmul.f32 1.0, %v1033
    %v1035 = vmul.f32 %v1027, %v917
    %v1036 = vmul.f32 %v1021, %v1028
    %v1037 = vadd.f32 %v1035, %v1036
    %v1038 = vtanh.pop %v1037
    %v1039 = vmul.f32 %v1034, %v1038
    %s1040 = scalar_lea.vmem [#allocation2], 24
    %1041 = vst [vmem:[%s1040] sm:$0xff] %v1039
    %s1042 = smul.u32 4, 4
    %s1043 = smul.addr %s1042, 8
    %s1044 = scalar_lea.vmem [#allocation4], %s1043
    %v1045 = vld [vmem:[%s1044] sm:$0xff]
    %v1046 = vld [vmem:[%s1044 + $0x8] sm:$0xff]
    %v1047 = vld [vmem:[%s1044 + $0x10] sm:$0xff]
    %v1048 = vld [vmem:[%s1044 + $0x18] sm:$0xff]
    %v1049 = vpack.c.bf16 %v1039, %v1039
    %1050 = vmatprep.subr.bf16.mxu0 %v508
    %1051 = vmatpush1.bf16.msra.mxu0 %v507
    %1052 = vmatprep.subr.bf16.mxu0 %v512
    %1053 = vmatpush1.bf16.msra.mxu0 %v511
    %1054 = vmatprep.subr.bf16.mxu0 %v516
    %1055 = vmatpush1.bf16.msra.mxu0 %v515
    %1056 = vmatprep.subr.bf16.mxu0 %v520
    %1057 = vmatpush1.bf16.msra.mxu0 %v519
    %1058 = vmatprep.subr.bf16.mxu0 %v524
    %1059 = vmatpush1.bf16.msra.mxu0 %v523
    %1060 = vmatprep.subr.bf16.mxu0 %v528
    %1061 = vmatpush1.bf16.msra.mxu0 %v527
    %1062 = vmatprep.subr.bf16.mxu0 %v532
    %1063 = vmatpush1.bf16.msra.mxu0 %v531
    %1064 = vmatprep.subr.bf16.mxu0 %v536
    %1065 = vmatpush1.bf16.msra.mxu0 %v535
    %1066 = vmatprep.subr.bf16.mxu0 0
    %1067 = vmatpush1.bf16.msra.mxu0 0
    %1068 = vmatprep.subr.bf16.mxu0 0
    %1069 = vmatpush1.bf16.msra.mxu0 0
    %1070 = vmatprep.subr.bf16.mxu0 0
    %1071 = vmatpush1.bf16.msra.mxu0 0
    %1072 = vmatprep.subr.bf16.mxu0 0
    %1073 = vmatpush1.bf16.msra.mxu0 0
    %1074 = vmatprep.subr.bf16.mxu0 0
    %1075 = vmatpush1.bf16.msra.mxu0 0
    %1076 = vmatprep.subr.bf16.mxu0 0
    %1077 = vmatpush1.bf16.msra.mxu0 0
    %1078 = vmatprep.subr.bf16.mxu0 0
    %1079 = vmatpush1.bf16.msra.mxu0 0
    %1080 = vmatprep.subr.bf16.mxu0 0
    %1081 = vmatpush1.bf16.msra.mxu0 0
    %1082 = vmatprep.mubr.bf16.mxu0 0
    %1083 = vmatmul.mubr.bf16.gmra.mrb[0].mxu0 %v1049
    %v1084 = vpop.f32.mrb[0].mxu0
    %v1085 = vadd.f32 0.0, %v1084
    %v1086 = vpop.f32.mrb[0].mxu0
    %v1087 = vadd.f32 0.0, %v1086
    %v1088 = vpop.f32.mrb[0].mxu0
    %v1089 = vpop.f32.mrb[0].mxu0
    %1090 = vdwg.mxu0
    %1091 = vmatprep.subr.bf16.mxu0 %v510
    %1092 = vmatpush1.bf16.msra.mxu0 %v509
    %1093 = vmatprep.subr.bf16.mxu0 %v514
    %1094 = vmatpush1.bf16.msra.mxu0 %v513
    %1095 = vmatprep.subr.bf16.mxu0 %v518
    %1096 = vmatpush1.bf16.msra.mxu0 %v517
    %1097 = vmatprep.subr.bf16.mxu0 %v522
    %1098 = vmatpush1.bf16.msra.mxu0 %v521
    %1099 = vmatprep.subr.bf16.mxu0 %v526
    %1100 = vmatpush1.bf16.msra.mxu0 %v525
    %1101 = vmatprep.subr.bf16.mxu0 %v530
    %1102 = vmatpush1.bf16.msra.mxu0 %v529
    %1103 = vmatprep.subr.bf16.mxu0 %v534
    %1104 = vmatpush1.bf16.msra.mxu0 %v533
    %1105 = vmatprep.subr.bf16.mxu0 %v538
    %1106 = vmatpush1.bf16.msra.mxu0 %v537
    %1107 = vmatprep.subr.bf16.mxu0 0
    %1108 = vmatpush1.bf16.msra.mxu0 0
    %1109 = vmatprep.subr.bf16.mxu0 0
    %1110 = vmatpush1.bf16.msra.mxu0 0
    %1111 = vmatprep.subr.bf16.mxu0 0
    %1112 = vmatpush1.bf16.msra.mxu0 0
    %1113 = vmatprep.subr.bf16.mxu0 0
    %1114 = vmatpush1.bf16.msra.mxu0 0
    %1115 = vmatprep.subr.bf16.mxu0 0
    %1116 = vmatpush1.bf16.msra.mxu0 0
    %1117 = vmatprep.subr.bf16.mxu0 0
    %1118 = vmatpush1.bf16.msra.mxu0 0
    %1119 = vmatprep.subr.bf16.mxu0 0
    %1120 = vmatpush1.bf16.msra.mxu0 0
    %1121 = vmatprep.subr.bf16.mxu0 0
    %1122 = vmatpush1.bf16.msra.mxu0 0
    %1123 = vmatprep.mubr.bf16.mxu0 0
    %1124 = vmatmul.mubr.bf16.gmra.mrb[0].mxu0 %v1049
    %v1125 = vpop.f32.mrb[0].mxu0
    %v1126 = vadd.f32 0.0, %v1125
    %v1127 = vpop.f32.mrb[0].mxu0
    %v1128 = vadd.f32 0.0, %v1127
    %v1129 = vpop.f32.mrb[0].mxu0
    %v1130 = vpop.f32.mrb[0].mxu0
    %1131 = vdwg.mxu0
    %v1132 = vadd.f32 %v1045, %v1085
    %v1133 = vadd.f32 %v1046, %v1087
    %v1134 = vadd.f32 %v1047, %v1126
    %v1135 = vadd.f32 %v1048, %v1128
    %v1136 = vxor.u32 %v1132, 2147483648
    %v1137 = vmul.f32 %v1136, 1.442695
    %v1138 = vpow.pop %v1137
    %v1139 = vadd.f32 %v1138, 1.0
    %v1140 = vrcp.pop %v1139
    %v1141 = vmul.f32 1.0, %v1140
    %v1142 = vxor.u32 %v1133, 2147483648
    %v1143 = vmul.f32 %v1142, 1.442695
    %v1144 = vpow.pop %v1143
    %v1145 = vadd.f32 %v1144, 1.0
    %v1146 = vrcp.pop %v1145
    %v1147 = vmul.f32 1.0, %v1146
    %v1148 = vtanh.pop %v1134
    %v1149 = vxor.u32 %v1135, 2147483648
    %v1150 = vmul.f32 %v1149, 1.442695
    %v1151 = vpow.pop %v1150
    %v1152 = vadd.f32 %v1151, 1.0
    %v1153 = vrcp.pop %v1152
    %v1154 = vmul.f32 1.0, %v1153
    %v1155 = vmul.f32 %v1147, %v1037
    %v1156 = vmul.f32 %v1141, %v1148
    %v1157 = vadd.f32 %v1155, %v1156
    %v1158 = vtanh.pop %v1157
    %v1159 = vmul.f32 %v1154, %v1158
    %s1160 = scalar_lea.vmem [#allocation2], 32
    %1161 = vst [vmem:[%s1160] sm:$0xff] %v1159
    %s1162 = smul.u32 5, 4
    %s1163 = smul.addr %s1162, 8
    %s1164 = scalar_lea.vmem [#allocation4], %s1163
    %v1165 = vld [vmem:[%s1164] sm:$0xff]
    %v1166 = vld [vmem:[%s1164 + $0x8] sm:$0xff]
    %v1167 = vld [vmem:[%s1164 + $0x10] sm:$0xff]
    %v1168 = vld [vmem:[%s1164 + $0x18] sm:$0xff]
    %v1169 = vpack.c.bf16 %v1159, %v1159
    %1170 = vmatprep.subr.bf16.mxu0 %v508
    %1171 = vmatpush1.bf16.msra.mxu0 %v507
    %1172 = vmatprep.subr.bf16.mxu0 %v512
    %1173 = vmatpush1.bf16.msra.mxu0 %v511
    %1174 = vmatprep.subr.bf16.mxu0 %v516
    %1175 = vmatpush1.bf16.msra.mxu0 %v515
    %1176 = vmatprep.subr.bf16.mxu0 %v520
    %1177 = vmatpush1.bf16.msra.mxu0 %v519
    %1178 = vmatprep.subr.bf16.mxu0 %v524
    %1179 = vmatpush1.bf16.msra.mxu0 %v523
    %1180 = vmatprep.subr.bf16.mxu0 %v528
    %1181 = vmatpush1.bf16.msra.mxu0 %v527
    %1182 = vmatprep.subr.bf16.mxu0 %v532
    %1183 = vmatpush1.bf16.msra.mxu0 %v531
    %1184 = vmatprep.subr.bf16.mxu0 %v536
    %1185 = vmatpush1.bf16.msra.mxu0 %v535
    %1186 = vmatprep.subr.bf16.mxu0 0
    %1187 = vmatpush1.bf16.msra.mxu0 0
    %1188 = vmatprep.subr.bf16.mxu0 0
    %1189 = vmatpush1.bf16.msra.mxu0 0
    %1190 = vmatprep.subr.bf16.mxu0 0
    %1191 = vmatpush1.bf16.msra.mxu0 0
    %1192 = vmatprep.subr.bf16.mxu0 0
    %1193 = vmatpush1.bf16.msra.mxu0 0
    %1194 = vmatprep.subr.bf16.mxu0 0
    %1195 = vmatpush1.bf16.msra.mxu0 0
    %1196 = vmatprep.subr.bf16.mxu0 0
    %1197 = vmatpush1.bf16.msra.mxu0 0
    %1198 = vmatprep.subr.bf16.mxu0 0
    %1199 = vmatpush1.bf16.msra.mxu0 0
    %1200 = vmatprep.subr.bf16.mxu0 0
    %1201 = vmatpush1.bf16.msra.mxu0 0
    %1202 = vmatprep.mubr.bf16.mxu0 0
    %1203 = vmatmul.mubr.bf16.gmra.mrb[0].mxu0 %v1169
    %v1204 = vpop.f32.mrb[0].mxu0
    %v1205 = vadd.f32 0.0, %v1204
    %v1206 = vpop.f32.mrb[0].mxu0
    %v1207 = vadd.f32 0.0, %v1206
    %v1208 = vpop.f32.mrb[0].mxu0
    %v1209 = vpop.f32.mrb[0].mxu0
    %1210 = vdwg.mxu0
    %1211 = vmatprep.subr.bf16.mxu0 %v510
    %1212 = vmatpush1.bf16.msra.mxu0 %v509
    %1213 = vmatprep.subr.bf16.mxu0 %v514
    %1214 = vmatpush1.bf16.msra.mxu0 %v513
    %1215 = vmatprep.subr.bf16.mxu0 %v518
    %1216 = vmatpush1.bf16.msra.mxu0 %v517
    %1217 = vmatprep.subr.bf16.mxu0 %v522
    %1218 = vmatpush1.bf16.msra.mxu0 %v521
    %1219 = vmatprep.subr.bf16.mxu0 %v526
    %1220 = vmatpush1.bf16.msra.mxu0 %v525
    %1221 = vmatprep.subr.bf16.mxu0 %v530
    %1222 = vmatpush1.bf16.msra.mxu0 %v529
    %1223 = vmatprep.subr.bf16.mxu0 %v534
    %1224 = vmatpush1.bf16.msra.mxu0 %v533
    %1225 = vmatprep.subr.bf16.mxu0 %v538
    %1226 = vmatpush1.bf16.msra.mxu0 %v537
    %1227 = vmatprep.subr.bf16.mxu0 0
    %1228 = vmatpush1.bf16.msra.mxu0 0
    %1229 = vmatprep.subr.bf16.mxu0 0
    %1230 = vmatpush1.bf16.msra.mxu0 0
    %1231 = vmatprep.subr.bf16.mxu0 0
    %1232 = vmatpush1.bf16.msra.mxu0 0
    %1233 = vmatprep.subr.bf16.mxu0 0
    %1234 = vmatpush1.bf16.msra.mxu0 0
    %1235 = vmatprep.subr.bf16.mxu0 0
    %1236 = vmatpush1.bf16.msra.mxu0 0
    %1237 = vmatprep.subr.bf16.mxu0 0
    %1238 = vmatpush1.bf16.msra.mxu0 0
    %1239 = vmatprep.subr.bf16.mxu0 0
    %1240 = vmatpush1.bf16.msra.mxu0 0
    %1241 = vmatprep.subr.bf16.mxu0 0
    %1242 = vmatpush1.bf16.msra.mxu0 0
    %1243 = vmatprep.mubr.bf16.mxu0 0
    %1244 = vmatmul.mubr.bf16.gmra.mrb[0].mxu0 %v1169
    %v1245 = vpop.f32.mrb[0].mxu0
    %v1246 = vadd.f32 0.0, %v1245
    %v1247 = vpop.f32.mrb[0].mxu0
    %v1248 = vadd.f32 0.0, %v1247
    %v1249 = vpop.f32.mrb[0].mxu0
    %v1250 = vpop.f32.mrb[0].mxu0
    %1251 = vdwg.mxu0
    %v1252 = vadd.f32 %v1165, %v1205
    %v1253 = vadd.f32 %v1166, %v1207
    %v1254 = vadd.f32 %v1167, %v1246
    %v1255 = vadd.f32 %v1168, %v1248
    %v1256 = vxor.u32 %v1252, 2147483648
    %v1257 = vmul.f32 %v1256, 1.442695
    %v1258 = vpow.pop %v1257
    %v1259 = vadd.f32 %v1258, 1.0
    %v1260 = vrcp.pop %v1259
    %v1261 = vmul.f32 1.0, %v1260
    %v1262 = vxor.u32 %v1253, 2147483648
    %v1263 = vmul.f32 %v1262, 1.442695
    %v1264 = vpow.pop %v1263
    %v1265 = vadd.f32 %v1264, 1.0
    %v1266 = vrcp.pop %v1265
    %v1267 = vmul.f32 1.0, %v1266
    %v1268 = vtanh.pop %v1254
    %v1269 = vxor.u32 %v1255, 2147483648
    %v1270 = vmul.f32 %v1269, 1.442695
    %v1271 = vpow.pop %v1270
    %v1272 = vadd.f32 %v1271, 1.0
    %v1273 = vrcp.pop %v1272
    %v1274 = vmul.f32 1.0, %v1273
    %v1275 = vmul.f32 %v1267, %v1157
    %v1276 = vmul.f32 %v1261, %v1268
    %v1277 = vadd.f32 %v1275, %v1276
    %v1278 = vtanh.pop %v1277
    %v1279 = vmul.f32 %v1274, %v1278
    %s1280 = scalar_lea.vmem [#allocation2], 40
    %1281 = vst [vmem:[%s1280] sm:$0xff] %v1279
    %s1282 = smul.u32 6, 4
    %s1283 = smul.addr %s1282, 8
    %s1284 = scalar_lea.vmem [#allocation4], %s1283
    %v1285 = vld [vmem:[%s1284] sm:$0xff]
    %v1286 = vld [vmem:[%s1284 + $0x8] sm:$0xff]
    %v1287 = vld [vmem:[%s1284 + $0x10] sm:$0xff]
    %v1288 = vld [vmem:[%s1284 + $0x18] sm:$0xff]
    %v1289 = vpack.c.bf16 %v1279, %v1279
    %1290 = vmatprep.subr.bf16.mxu0 %v508
    %1291 = vmatpush1.bf16.msra.mxu0 %v507
    %1292 = vmatprep.subr.bf16.mxu0 %v512
    %1293 = vmatpush1.bf16.msra.mxu0 %v511
    %1294 = vmatprep.subr.bf16.mxu0 %v516
    %1295 = vmatpush1.bf16.msra.mxu0 %v515
    %1296 = vmatprep.subr.bf16.mxu0 %v520
    %1297 = vmatpush1.bf16.msra.mxu0 %v519
    %1298 = vmatprep.subr.bf16.mxu0 %v524
    %1299 = vmatpush1.bf16.msra.mxu0 %v523
    %1300 = vmatprep.subr.bf16.mxu0 %v528
    %1301 = vmatpush1.bf16.msra.mxu0 %v527
    %1302 = vmatprep.subr.bf16.mxu0 %v532
    %1303 = vmatpush1.bf16.msra.mxu0 %v531
    %1304 = vmatprep.subr.bf16.mxu0 %v536
    %1305 = vmatpush1.bf16.msra.mxu0 %v535
    %1306 = vmatprep.subr.bf16.mxu0 0
    %1307 = vmatpush1.bf16.msra.mxu0 0
    %1308 = vmatprep.subr.bf16.mxu0 0
    %1309 = vmatpush1.bf16.msra.mxu0 0
    %1310 = vmatprep.subr.bf16.mxu0 0
    %1311 = vmatpush1.bf16.msra.mxu0 0
    %1312 = vmatprep.subr.bf16.mxu0 0
    %1313 = vmatpush1.bf16.msra.mxu0 0
    %1314 = vmatprep.subr.bf16.mxu0 0
    %1315 = vmatpush1.bf16.msra.mxu0 0
    %1316 = vmatprep.subr.bf16.mxu0 0
    %1317 = vmatpush1.bf16.msra.mxu0 0
    %1318 = vmatprep.subr.bf16.mxu0 0
    %1319 = vmatpush1.bf16.msra.mxu0 0
    %1320 = vmatprep.subr.bf16.mxu0 0
    %1321 = vmatpush1.bf16.msra.mxu0 0
    %1322 = vmatprep.mubr.bf16.mxu0 0
    %1323 = vmatmul.mubr.bf16.gmra.mrb[0].mxu0 %v1289
    %v1324 = vpop.f32.mrb[0].mxu0
    %v1325 = vadd.f32 0.0, %v1324
    %v1326 = vpop.f32.mrb[0].mxu0
    %v1327 = vadd.f32 0.0, %v1326
    %v1328 = vpop.f32.mrb[0].mxu0
    %v1329 = vpop.f32.mrb[0].mxu0
    %1330 = vdwg.mxu0
    %1331 = vmatprep.subr.bf16.mxu0 %v510
    %1332 = vmatpush1.bf16.msra.mxu0 %v509
    %1333 = vmatprep.subr.bf16.mxu0 %v514
    %1334 = vmatpush1.bf16.msra.mxu0 %v513
    %1335 = vmatprep.subr.bf16.mxu0 %v518
    %1336 = vmatpush1.bf16.msra.mxu0 %v517
    %1337 = vmatprep.subr.bf16.mxu0 %v522
    %1338 = vmatpush1.bf16.msra.mxu0 %v521
    %1339 = vmatprep.subr.bf16.mxu0 %v526
    %1340 = vmatpush1.bf16.msra.mxu0 %v525
    %1341 = vmatprep.subr.bf16.mxu0 %v530
    %1342 = vmatpush1.bf16.msra.mxu0 %v529
    %1343 = vmatprep.subr.bf16.mxu0 %v534
    %1344 = vmatpush1.bf16.msra.mxu0 %v533
    %1345 = vmatprep.subr.bf16.mxu0 %v538
    %1346 = vmatpush1.bf16.msra.mxu0 %v537
    %1347 = vmatprep.subr.bf16.mxu0 0
    %1348 = vmatpush1.bf16.msra.mxu0 0
    %1349 = vmatprep.subr.bf16.mxu0 0
    %1350 = vmatpush1.bf16.msra.mxu0 0
    %1351 = vmatprep.subr.bf16.mxu0 0
    %1352 = vmatpush1.bf16.msra.mxu0 0
    %1353 = vmatprep.subr.bf16.mxu0 0
    %1354 = vmatpush1.bf16.msra.mxu0 0
    %1355 = vmatprep.subr.bf16.mxu0 0
    %1356 = vmatpush1.bf16.msra.mxu0 0
    %1357 = vmatprep.subr.bf16.mxu0 0
    %1358 = vmatpush1.bf16.msra.mxu0 0
    %1359 = vmatprep.subr.bf16.mxu0 0
    %1360 = vmatpush1.bf16.msra.mxu0 0
    %1361 = vmatprep.subr.bf16.mxu0 0
    %1362 = vmatpush1.bf16.msra.mxu0 0
    %1363 = vmatprep.mubr.bf16.mxu0 0
    %1364 = vmatmul.mubr.bf16.gmra.mrb[0].mxu0 %v1289
    %v1365 = vpop.f32.mrb[0].mxu0
    %v1366 = vadd.f32 0.0, %v1365
    %v1367 = vpop.f32.mrb[0].mxu0
    %v1368 = vadd.f32 0.0, %v1367
    %v1369 = vpop.f32.mrb[0].mxu0
    %v1370 = vpop.f32.mrb[0].mxu0
    %1371 = vdwg.mxu0
    %v1372 = vadd.f32 %v1285, %v1325
    %v1373 = vadd.f32 %v1286, %v1327
    %v1374 = vadd.f32 %v1287, %v1366
    %v1375 = vadd.f32 %v1288, %v1368
    %v1376 = vxor.u32 %v1372, 2147483648
    %v1377 = vmul.f32 %v1376, 1.442695
    %v1378 = vpow.pop %v1377
    %v1379 = vadd.f32 %v1378, 1.0
    %v1380 = vrcp.pop %v1379
    %v1381 = vmul.f32 1.0, %v1380
    %v1382 = vxor.u32 %v1373, 2147483648
    %v1383 = vmul.f32 %v1382, 1.442695
    %v1384 = vpow.pop %v1383
    %v1385 = vadd.f32 %v1384, 1.0
    %v1386 = vrcp.pop %v1385
    %v1387 = vmul.f32 1.0, %v1386
    %v1388 = vtanh.pop %v1374
    %v1389 = vxor.u32 %v1375, 2147483648
    %v1390 = vmul.f32 %v1389, 1.442695
    %v1391 = vpow.pop %v1390
    %v1392 = vadd.f32 %v1391, 1.0
    %v1393 = vrcp.pop %v1392
    %v1394 = vmul.f32 1.0, %v1393
    %v1395 = vmul.f32 %v1387, %v1277
    %v1396 = vmul.f32 %v1381, %v1388
    %v1397 = vadd.f32 %v1395, %v1396
    %v1398 = vtanh.pop %v1397
    %v1399 = vmul.f32 %v1394, %v1398
    %s1400 = scalar_lea.vmem [#allocation2], 48
    %1401 = vst [vmem:[%s1400] sm:$0xff] %v1399
    %s1402 = smul.u32 7, 4
    %s1403 = smul.addr %s1402, 8
    %s1404 = scalar_lea.vmem [#allocation4], %s1403
    %v1405 = vld [vmem:[%s1404] sm:$0xff]
    %v1406 = vld [vmem:[%s1404 + $0x8] sm:$0xff]
    %v1407 = vld [vmem:[%s1404 + $0x10] sm:$0xff]
    %v1408 = vld [vmem:[%s1404 + $0x18] sm:$0xff]
    %v1409 = vpack.c.bf16 %v1399, %v1399
    %1410 = vmatprep.subr.bf16.mxu0 %v508
    %1411 = vmatpush1.bf16.msra.mxu0 %v507
    %1412 = vmatprep.subr.bf16.mxu0 %v512
    %1413 = vmatpush1.bf16.msra.mxu0 %v511
    %1414 = vmatprep.subr.bf16.mxu0 %v516
    %1415 = vmatpush1.bf16.msra.mxu0 %v515
    %1416 = vmatprep.subr.bf16.mxu0 %v520
    %1417 = vmatpush1.bf16.msra.mxu0 %v519
    %1418 = vmatprep.subr.bf16.mxu0 %v524
    %1419 = vmatpush1.bf16.msra.mxu0 %v523
    %1420 = vmatprep.subr.bf16.mxu0 %v528
    %1421 = vmatpush1.bf16.msra.mxu0 %v527
    %1422 = vmatprep.subr.bf16.mxu0 %v532
    %1423 = vmatpush1.bf16.msra.mxu0 %v531
    %1424 = vmatprep.subr.bf16.mxu0 %v536
    %1425 = vmatpush1.bf16.msra.mxu0 %v535
    %1426 = vmatprep.subr.bf16.mxu0 0
    %1427 = vmatpush1.bf16.msra.mxu0 0
    %1428 = vmatprep.subr.bf16.mxu0 0
    %1429 = vmatpush1.bf16.msra.mxu0 0
    %1430 = vmatprep.subr.bf16.mxu0 0
    %1431 = vmatpush1.bf16.msra.mxu0 0
    %1432 = vmatprep.subr.bf16.mxu0 0
    %1433 = vmatpush1.bf16.msra.mxu0 0
    %1434 = vmatprep.subr.bf16.mxu0 0
    %1435 = vmatpush1.bf16.msra.mxu0 0
    %1436 = vmatprep.subr.bf16.mxu0 0
    %1437 = vmatpush1.bf16.msra.mxu0 0
    %1438 = vmatprep.subr.bf16.mxu0 0
    %1439 = vmatpush1.bf16.msra.mxu0 0
    %1440 = vmatprep.subr.bf16.mxu0 0
    %1441 = vmatpush1.bf16.msra.mxu0 0
    %1442 = vmatprep.mubr.bf16.mxu0 0
    %1443 = vmatmul.mubr.bf16.gmra.mrb[0].mxu0 %v1409
    %v1444 = vpop.f32.mrb[0].mxu0
    %v1445 = vadd.f32 0.0, %v1444
    %v1446 = vpop.f32.mrb[0].mxu0
    %v1447 = vadd.f32 0.0, %v1446
    %v1448 = vpop.f32.mrb[0].mxu0
    %v1449 = vpop.f32.mrb[0].mxu0
    %1450 = vdwg.mxu0
    %1451 = vmatprep.subr.bf16.mxu0 %v510
    %1452 = vmatpush1.bf16.msra.mxu0 %v509
    %1453 = vmatprep.subr.bf16.mxu0 %v514
    %1454 = vmatpush1.bf16.msra.mxu0 %v513
    %1455 = vmatprep.subr.bf16.mxu0 %v518
    %1456 = vmatpush1.bf16.msra.mxu0 %v517
    %1457 = vmatprep.subr.bf16.mxu0 %v522
    %1458 = vmatpush1.bf16.msra.mxu0 %v521
    %1459 = vmatprep.subr.bf16.mxu0 %v526
    %1460 = vmatpush1.bf16.msra.mxu0 %v525
    %1461 = vmatprep.subr.bf16.mxu0 %v530
    %1462 = vmatpush1.bf16.msra.mxu0 %v529
    %1463 = vmatprep.subr.bf16.mxu0 %v534
    %1464 = vmatpush1.bf16.msra.mxu0 %v533
    %1465 = vmatprep.subr.bf16.mxu0 %v538
    %1466 = vmatpush1.bf16.msra.mxu0 %v537
    %1467 = vmatprep.subr.bf16.mxu0 0
    %1468 = vmatpush1.bf16.msra.mxu0 0
    %1469 = vmatprep.subr.bf16.mxu0 0
    %1470 = vmatpush1.bf16.msra.mxu0 0
    %1471 = vmatprep.subr.bf16.mxu0 0
    %1472 = vmatpush1.bf16.msra.mxu0 0
    %1473 = vmatprep.subr.bf16.mxu0 0
    %1474 = vmatpush1.bf16.msra.mxu0 0
    %1475 = vmatprep.subr.bf16.mxu0 0
    %1476 = vmatpush1.bf16.msra.mxu0 0
    %1477 = vmatprep.subr.bf16.mxu0 0
    %1478 = vmatpush1.bf16.msra.mxu0 0
    %1479 = vmatprep.subr.bf16.mxu0 0
    %1480 = vmatpush1.bf16.msra.mxu0 0
    %1481 = vmatprep.subr.bf16.mxu0 0
    %1482 = vmatpush1.bf16.msra.mxu0 0
    %1483 = vmatprep.mubr.bf16.mxu0 0
    %1484 = vmatmul.mubr.bf16.gmra.mrb[0].mxu0 %v1409
    %v1485 = vpop.f32.mrb[0].mxu0
    %v1486 = vadd.f32 0.0, %v1485
    %v1487 = vpop.f32.mrb[0].mxu0
    %v1488 = vadd.f32 0.0, %v1487
    %v1489 = vpop.f32.mrb[0].mxu0
    %v1490 = vpop.f32.mrb[0].mxu0
    %1491 = vdwg.mxu0
    %v1492 = vadd.f32 %v1405, %v1445
    %v1493 = vadd.f32 %v1406, %v1447
    %v1494 = vadd.f32 %v1407, %v1486
    %v1495 = vadd.f32 %v1408, %v1488
    %v1496 = vxor.u32 %v1492, 2147483648
    %v1497 = vmul.f32 %v1496, 1.442695
    %v1498 = vpow.pop %v1497
    %v1499 = vadd.f32 %v1498, 1.0
    %v1500 = vrcp.pop %v1499
    %v1501 = vmul.f32 1.0, %v1500
    %v1502 = vxor.u32 %v1493, 2147483648
    %v1503 = vmul.f32 %v1502, 1.442695
    %v1504 = vpow.pop %v1503
    %v1505 = vadd.f32 %v1504, 1.0
    %v1506 = vrcp.pop %v1505
    %v1507 = vmul.f32 1.0, %v1506
    %v1508 = vtanh.pop %v1494
    %v1509 = vxor.u32 %v1495, 2147483648
    %v1510 = vmul.f32 %v1509, 1.442695
    %v1511 = vpow.pop %v1510
    %v1512 = vadd.f32 %v1511, 1.0
    %v1513 = vrcp.pop %v1512
    %v1514 = vmul.f32 1.0, %v1513
    %v1515 = vmul.f32 %v1507, %v1397
    %v1516 = vmul.f32 %v1501, %v1508
    %v1517 = vadd.f32 %v1515, %v1516
    %v1518 = vtanh.pop %v1517
    %v1519 = vmul.f32 %v1514, %v1518
    %s1520 = scalar_lea.vmem [#allocation2], 56
    %1521 = vst [vmem:[%s1520] sm:$0xff] %v1519
    %v1522 = vld [vmem:[#allocation7] sm:$0xff]
    %v1523 = vld [vmem:[#allocation7 + $0x8] sm:$0xff]
    %v1524 = vld [vmem:[#allocation7 + $0x10] sm:$0xff]
    %v1525 = vld [vmem:[#allocation7 + $0x18] sm:$0xff]
    %v1526 = vld [vmem:[#allocation7 + $0x20] sm:$0xff]
    %v1527 = vld [vmem:[#allocation7 + $0x28] sm:$0xff]
    %v1528 = vld [vmem:[#allocation7 + $0x30] sm:$0xff]
    %v1529 = vld [vmem:[#allocation7 + $0x38] sm:$0xff]
    %v1530 = vld [vmem:[#allocation7 + $0x40] sm:$0xff]
    %v1531 = vld [vmem:[#allocation7 + $0x48] sm:$0xff]
    %v1532 = vld [vmem:[#allocation7 + $0x50] sm:$0xff]
    %v1533 = vld [vmem:[#allocation7 + $0x58] sm:$0xff]
    %v1534 = vld [vmem:[#allocation7 + $0x60] sm:$0xff]
    %v1535 = vld [vmem:[#allocation7 + $0x68] sm:$0xff]
    %v1536 = vld [vmem:[#allocation7 + $0x70] sm:$0xff]
    %v1537 = vld [vmem:[#allocation7 + $0x78] sm:$0xff]
    %v1538 = vld [vmem:[#allocation7 + $0x80] sm:$0xff]
    %v1539 = vld [vmem:[#allocation7 + $0x88] sm:$0xff]
    %v1540 = vld [vmem:[#allocation7 + $0x90] sm:$0xff]
    %v1541 = vld [vmem:[#allocation7 + $0x98] sm:$0xff]
    %v1542 = vld [vmem:[#allocation7 + $0xa0] sm:$0xff]
    %v1543 = vld [vmem:[#allocation7 + $0xa8] sm:$0xff]
    %v1544 = vld [vmem:[#allocation7 + $0xb0] sm:$0xff]
    %v1545 = vld [vmem:[#allocation7 + $0xb8] sm:$0xff]
    %v1546 = vld [vmem:[#allocation7 + $0xc0] sm:$0xff]
    %v1547 = vld [vmem:[#allocation7 + $0xc8] sm:$0xff]
    %v1548 = vld [vmem:[#allocation7 + $0xd0] sm:$0xff]
    %v1549 = vld [vmem:[#allocation7 + $0xd8] sm:$0xff]
    %v1550 = vld [vmem:[#allocation7 + $0xe0] sm:$0xff]
    %v1551 = vld [vmem:[#allocation7 + $0xe8] sm:$0xff]
    %v1552 = vld [vmem:[#allocation7 + $0xf0] sm:$0xff]
    %v1553 = vld [vmem:[#allocation7 + $0xf8] sm:$0xff]
    %v1554 = vld [vmem:[#allocation9] sm:$0xff]
    %v1555 = vld [vmem:[#allocation9 + $0x8] sm:$0xff]
    %v1556 = vld [vmem:[#allocation9 + $0x10] sm:$0xff]
    %v1557 = vld [vmem:[#allocation9 + $0x18] sm:$0xff]
    %v1558 = vld [vmem:[#allocation9 + $0x20] sm:$0xff]
    %v1559 = vld [vmem:[#allocation9 + $0x28] sm:$0xff]
    %v1560 = vld [vmem:[#allocation9 + $0x30] sm:$0xff]
    %v1561 = vld [vmem:[#allocation9 + $0x38] sm:$0xff]
    %v1562 = vld [vmem:[#allocation9 + $0x40] sm:$0xff]
    %v1563 = vld [vmem:[#allocation9 + $0x48] sm:$0xff]
    %v1564 = vld [vmem:[#allocation9 + $0x50] sm:$0xff]
    %v1565 = vld [vmem:[#allocation9 + $0x58] sm:$0xff]
    %v1566 = vld [vmem:[#allocation9 + $0x60] sm:$0xff]
    %v1567 = vld [vmem:[#allocation9 + $0x68] sm:$0xff]
    %v1568 = vld [vmem:[#allocation9 + $0x70] sm:$0xff]
    %v1569 = vld [vmem:[#allocation9 + $0x78] sm:$0xff]
    %v1570 = vld [vmem:[#allocation9 + $0x80] sm:$0xff]
    %v1571 = vld [vmem:[#allocation9 + $0x88] sm:$0xff]
    %v1572 = vld [vmem:[#allocation9 + $0x90] sm:$0xff]
    %v1573 = vld [vmem:[#allocation9 + $0x98] sm:$0xff]
    %v1574 = vld [vmem:[#allocation9 + $0xa0] sm:$0xff]
    %v1575 = vld [vmem:[#allocation9 + $0xa8] sm:$0xff]
    %v1576 = vld [vmem:[#allocation9 + $0xb0] sm:$0xff]
    %v1577 = vld [vmem:[#allocation9 + $0xb8] sm:$0xff]
    %v1578 = vld [vmem:[#allocation9 + $0xc0] sm:$0xff]
    %v1579 = vld [vmem:[#allocation9 + $0xc8] sm:$0xff]
    %v1580 = vld [vmem:[#allocation9 + $0xd0] sm:$0xff]
    %v1581 = vld [vmem:[#allocation9 + $0xd8] sm:$0xff]
    %v1582 = vld [vmem:[#allocation9 + $0xe0] sm:$0xff]
    %v1583 = vld [vmem:[#allocation9 + $0xe8] sm:$0xff]
    %v1584 = vld [vmem:[#allocation9 + $0xf0] sm:$0xff]
    %v1585 = vld [vmem:[#allocation9 + $0xf8] sm:$0xff]
    %v1586 = vld [vmem:[%s6] sm:$0xf]
    %v1587 = vld [vmem:[#allocation2] sm:$0xff]
    %v1588 = vld [vmem:[#allocation2 + $0x8] sm:$0xff]
    %v1589 = vld [vmem:[#allocation2 + $0x10] sm:$0xff]
    %v1590 = vld [vmem:[#allocation2 + $0x18] sm:$0xff]
    %v1591 = vld [vmem:[#allocation2 + $0x20] sm:$0xff]
    %v1592 = vld [vmem:[#allocation2 + $0x28] sm:$0xff]
    %v1593 = vld [vmem:[#allocation2 + $0x30] sm:$0xff]
    %v1594 = vld [vmem:[#allocation2 + $0x38] sm:$0xff]
    %v1595 = vpack.c.bf16 %v1588, %v1587
    %v1596 = vpack.c.bf16 %v1590, %v1589
    %v1597 = vpack.c.bf16 %v1592, %v1591
    %v1598 = vpack.c.bf16 %v1594, %v1593
    %v1600 = vlaneseq
    %v1601 = vshrl.u32 %v1600, 7
    %v1602 = vsub.s32 0, %v1601
    %v1603 = vrot.slane %v1586, %v1602
    %v1604 = vlaneseq
    %v1605 = vshrl.u32 %v1604, 7
    %v1606 = vsub.s32 1, %v1605
    %v1607 = vrot.slane %v1586, %v1606
    %v1608 = vlaneseq
    %v1609 = vshrl.u32 %v1608, 7
    %v1610 = vsub.s32 2, %v1609
    %v1611 = vrot.slane %v1586, %v1610
    %v1612 = vlaneseq
    %v1613 = vshrl.u32 %v1612, 7
    %v1614 = vsub.s32 3, %v1613
    %v1615 = vrot.slane %v1586, %v1614
    %v1652 = vunpack.c.l.b16 %v1522
    %v1653 = vunpack.c.h.b16 %v1522
    %v1654 = vunpack.c.l.b16 %v1523
    %v1655 = vunpack.c.h.b16 %v1523
    %v1656 = vunpack.c.l.b16 %v1524
    %v1657 = vunpack.c.h.b16 %v1524
    %v1658 = vunpack.c.l.b16 %v1525
    %v1659 = vunpack.c.h.b16 %v1525
    %v1660 = vunpack.c.l.b16 %v1526
    %v1661 = vunpack.c.h.b16 %v1526
    %v1662 = vunpack.c.l.b16 %v1527
    %v1663 = vunpack.c.h.b16 %v1527
    %v1664 = vunpack.c.l.b16 %v1528
    %v1665 = vunpack.c.h.b16 %v1528
    %v1666 = vunpack.c.l.b16 %v1529
    %v1667 = vunpack.c.h.b16 %v1529
    %v1668 = vunpack.c.l.b16 %v1530
    %v1669 = vunpack.c.h.b16 %v1530
    %v1670 = vunpack.c.l.b16 %v1531
    %v1671 = vunpack.c.h.b16 %v1531
    %v1672 = vunpack.c.l.b16 %v1532
    %v1673 = vunpack.c.h.b16 %v1532
    %v1674 = vunpack.c.l.b16 %v1533
    %v1675 = vunpack.c.h.b16 %v1533
    %v1676 = vunpack.c.l.b16 %v1534
    %v1677 = vunpack.c.h.b16 %v1534
    %v1678 = vunpack.c.l.b16 %v1535
    %v1679 = vunpack.c.h.b16 %v1535
    %v1680 = vunpack.c.l.b16 %v1536
    %v1681 = vunpack.c.h.b16 %v1536
    %v1682 = vunpack.c.l.b16 %v1537
    %v1683 = vunpack.c.h.b16 %v1537
    %v1684 = vunpack.c.l.b16 %v1538
    %v1685 = vunpack.c.h.b16 %v1538
    %v1686 = vunpack.c.l.b16 %v1539
    %v1687 = vunpack.c.h.b16 %v1539
    %v1688 = vunpack.c.l.b16 %v1540
    %v1689 = vunpack.c.h.b16 %v1540
    %v1690 = vunpack.c.l.b16 %v1541
    %v1691 = vunpack.c.h.b16 %v1541
    %v1692 = vunpack.c.l.b16 %v1542
    %v1693 = vunpack.c.h.b16 %v1542
    %v1694 = vunpack.c.l.b16 %v1543
    %v1695 = vunpack.c.h.b16 %v1543
    %v1696 = vunpack.c.l.b16 %v1544
    %v1697 = vunpack.c.h.b16 %v1544
    %v1698 = vunpack.c.l.b16 %v1545
    %v1699 = vunpack.c.h.b16 %v1545
    %v1700 = vunpack.c.l.b16 %v1546
    %v1701 = vunpack.c.h.b16 %v1546
    %v1702 = vunpack.c.l.b16 %v1547
    %v1703 = vunpack.c.h.b16 %v1547
    %v1704 = vunpack.c.l.b16 %v1548
    %v1705 = vunpack.c.h.b16 %v1548
    %v1706 = vunpack.c.l.b16 %v1549
    %v1707 = vunpack.c.h.b16 %v1549
    %v1708 = vunpack.c.l.b16 %v1550
    %v1709 = vunpack.c.h.b16 %v1550
    %v1710 = vunpack.c.l.b16 %v1551
    %v1711 = vunpack.c.h.b16 %v1551
    %v1712 = vunpack.c.l.b16 %v1552
    %v1713 = vunpack.c.h.b16 %v1552
    %v1714 = vunpack.c.l.b16 %v1553
    %v1715 = vunpack.c.h.b16 %v1553
    %v1716 = vpack.c.b16 %v1656, %v1652
    %v1717 = vpack.c.b16 %v1657, %v1653
    %v1718 = vpack.c.b16 %v1658, %v1654
    %v1719 = vpack.c.b16 %v1659, %v1655
    %v1720 = vpack.c.b16 %v1664, %v1660
    %v1721 = vpack.c.b16 %v1665, %v1661
    %v1722 = vpack.c.b16 %v1666, %v1662
    %v1723 = vpack.c.b16 %v1667, %v1663
    %v1724 = vpack.c.b16 %v1672, %v1668
    %v1725 = vpack.c.b16 %v1673, %v1669
    %v1726 = vpack.c.b16 %v1674, %v1670
    %v1727 = vpack.c.b16 %v1675, %v1671
    %v1728 = vpack.c.b16 %v1680, %v1676
    %v1729 = vpack.c.b16 %v1681, %v1677
    %v1730 = vpack.c.b16 %v1682, %v1678
    %v1731 = vpack.c.b16 %v1683, %v1679
    %v1732 = vpack.c.b16 %v1688, %v1684
    %v1733 = vpack.c.b16 %v1689, %v1685
    %v1734 = vpack.c.b16 %v1690, %v1686
    %v1735 = vpack.c.b16 %v1691, %v1687
    %v1736 = vpack.c.b16 %v1696, %v1692
    %v1737 = vpack.c.b16 %v1697, %v1693
    %v1738 = vpack.c.b16 %v1698, %v1694
    %v1739 = vpack.c.b16 %v1699, %v1695
    %v1740 = vpack.c.b16 %v1704, %v1700
    %v1741 = vpack.c.b16 %v1705, %v1701
    %v1742 = vpack.c.b16 %v1706, %v1702
    %v1743 = vpack.c.b16 %v1707, %v1703
    %v1744 = vpack.c.b16 %v1712, %v1708
    %v1745 = vpack.c.b16 %v1713, %v1709
    %v1746 = vpack.c.b16 %v1714, %v1710
    %v1747 = vpack.c.b16 %v1715, %v1711
    %1780 = vmatprep.subr.bf16.mxu0 %v1717
    %1781 = vmatpush1.bf16.msra.mxu0 %v1716
    %1782 = vmatprep.subr.bf16.mxu0 %v1721
    %1783 = vmatpush1.bf16.msra.mxu0 %v1720
    %1784 = vmatprep.subr.bf16.mxu0 %v1725
    %1785 = vmatpush1.bf16.msra.mxu0 %v1724
    %1786 = vmatprep.subr.bf16.mxu0 %v1729
    %1787 = vmatpush1.bf16.msra.mxu0 %v1728
    %1788 = vmatprep.subr.bf16.mxu0 %v1733
    %1789 = vmatpush1.bf16.msra.mxu0 %v1732
    %1790 = vmatprep.subr.bf16.mxu0 %v1737
    %1791 = vmatpush1.bf16.msra.mxu0 %v1736
    %1792 = vmatprep.subr.bf16.mxu0 %v1741
    %1793 = vmatpush1.bf16.msra.mxu0 %v1740
    %1794 = vmatprep.subr.bf16.mxu0 %v1745
    %1795 = vmatpush1.bf16.msra.mxu0 %v1744
    %1796 = vmatprep.subr.bf16.mxu0 0
    %1797 = vmatpush1.bf16.msra.mxu0 0
    %1798 = vmatprep.subr.bf16.mxu0 0
    %1799 = vmatpush1.bf16.msra.mxu0 0
    %1800 = vmatprep.subr.bf16.mxu0 0
    %1801 = vmatpush1.bf16.msra.mxu0 0
    %1802 = vmatprep.subr.bf16.mxu0 0
    %1803 = vmatpush1.bf16.msra.mxu0 0
    %1804 = vmatprep.subr.bf16.mxu0 0
    %1805 = vmatpush1.bf16.msra.mxu0 0
    %1806 = vmatprep.subr.bf16.mxu0 0
    %1807 = vmatpush1.bf16.msra.mxu0 0
    %1808 = vmatprep.subr.bf16.mxu0 0
    %1809 = vmatpush1.bf16.msra.mxu0 0
    %1810 = vmatprep.subr.bf16.mxu0 0
    %1811 = vmatpush1.bf16.msra.mxu0 0
    %1812 = vmatprep.mubr.bf16.mxu0 0
    %1813 = vmatmul.mubr.bf16.gmra.mrb[0].mxu0 %v1595
    %v1814 = vpop.f32.mrb[0].mxu0
    %v1815 = vadd.f32 %v1603, %v1814
    %v1816 = vpop.f32.mrb[0].mxu0
    %v1817 = vadd.f32 %v1607, %v1816
    %v1818 = vpop.f32.mrb[0].mxu0
    %v1819 = vadd.f32 %v1603, %v1818
    %v1820 = vpop.f32.mrb[0].mxu0
    %v1821 = vadd.f32 %v1607, %v1820
    %1822 = vmatprep.mubr.bf16.mxu0 0
    %1823 = vmatmul.mubr.bf16.gmra.mrb[0].mxu0 %v1596
    %v1824 = vpop.f32.mrb[0].mxu0
    %v1825 = vadd.f32 %v1603, %v1824
    %v1826 = vpop.f32.mrb[0].mxu0
    %v1827 = vadd.f32 %v1607, %v1826
    %v1828 = vpop.f32.mrb[0].mxu0
    %v1829 = vadd.f32 %v1603, %v1828
    %v1830 = vpop.f32.mrb[0].mxu0
    %v1831 = vadd.f32 %v1607, %v1830
    %1832 = vmatprep.mubr.bf16.mxu0 0
    %1833 = vmatmul.mubr.bf16.gmra.mrb[0].mxu0 %v1597
    %v1834 = vpop.f32.mrb[0].mxu0
    %v1835 = vadd.f32 %v1603, %v1834
    %v1836 = vpop.f32.mrb[0].mxu0
    %v1837 = vadd.f32 %v1607, %v1836
    %v1838 = vpop.f32.mrb[0].mxu0
    %v1839 = vadd.f32 %v1603, %v1838
    %v1840 = vpop.f32.mrb[0].mxu0
    %v1841 = vadd.f32 %v1607, %v1840
    %1842 = vmatprep.mubr.bf16.mxu0 0
    %1843 = vmatmul.mubr.bf16.gmra.mrb[0].mxu0 %v1598
    %v1844 = vpop.f32.mrb[0].mxu0
    %v1845 = vadd.f32 %v1603, %v1844
    %v1846 = vpop.f32.mrb[0].mxu0
    %v1847 = vadd.f32 %v1607, %v1846
    %v1848 = vpop.f32.mrb[0].mxu0
    %v1849 = vadd.f32 %v1603, %v1848
    %v1850 = vpop.f32.mrb[0].mxu0
    %v1851 = vadd.f32 %v1607, %v1850
    %1852 = vdwg.mxu0
    %1853 = vmatprep.subr.bf16.mxu0 %v1719
    %1854 = vmatpush1.bf16.msra.mxu0 %v1718
    %1855 = vmatprep.subr.bf16.mxu0 %v1723
    %1856 = vmatpush1.bf16.msra.mxu0 %v1722
    %1857 = vmatprep.subr.bf16.mxu0 %v1727
    %1858 = vmatpush1.bf16.msra.mxu0 %v1726
    %1859 = vmatprep.subr.bf16.mxu0 %v1731
    %1860 = vmatpush1.bf16.msra.mxu0 %v1730
    %1861 = vmatprep.subr.bf16.mxu0 %v1735
    %1862 = vmatpush1.bf16.msra.mxu0 %v1734
    %1863 = vmatprep.subr.bf16.mxu0 %v1739
    %1864 = vmatpush1.bf16.msra.mxu0 %v1738
    %1865 = vmatprep.subr.bf16.mxu0 %v1743
    %1866 = vmatpush1.bf16.msra.mxu0 %v1742
    %1867 = vmatprep.subr.bf16.mxu0 %v1747
    %1868 = vmatpush1.bf16.msra.mxu0 %v1746
    %1869 = vmatprep.subr.bf16.mxu0 0
    %1870 = vmatpush1.bf16.msra.mxu0 0
    %1871 = vmatprep.subr.bf16.mxu0 0
    %1872 = vmatpush1.bf16.msra.mxu0 0
    %1873 = vmatprep.subr.bf16.mxu0 0
    %1874 = vmatpush1.bf16.msra.mxu0 0
    %1875 = vmatprep.subr.bf16.mxu0 0
    %1876 = vmatpush1.bf16.msra.mxu0 0
    %1877 = vmatprep.subr.bf16.mxu0 0
    %1878 = vmatpush1.bf16.msra.mxu0 0
    %1879 = vmatprep.subr.bf16.mxu0 0
    %1880 = vmatpush1.bf16.msra.mxu0 0
    %1881 = vmatprep.subr.bf16.mxu0 0
    %1882 = vmatpush1.bf16.msra.mxu0 0
    %1883 = vmatprep.subr.bf16.mxu0 0
    %1884 = vmatpush1.bf16.msra.mxu0 0
    %1885 = vmatprep.mubr.bf16.mxu0 0
    %1886 = vmatmul.mubr.bf16.gmra.mrb[0].mxu0 %v1595
    %v1887 = vpop.f32.mrb[0].mxu0
    %v1888 = vadd.f32 %v1611, %v1887
    %v1889 = vpop.f32.mrb[0].mxu0
    %v1890 = vadd.f32 %v1615, %v1889
    %v1891 = vpop.f32.mrb[0].mxu0
    %v1892 = vadd.f32 %v1611, %v1891
    %v1893 = vpop.f32.mrb[0].mxu0
    %v1894 = vadd.f32 %v1615, %v1893
    %1895 = vmatprep.mubr.bf16.mxu0 0
    %1896 = vmatmul.mubr.bf16.gmra.mrb[0].mxu0 %v1596
    %v1897 = vpop.f32.mrb[0].mxu0
    %v1898 = vadd.f32 %v1611, %v1897
    %v1899 = vpop.f32.mrb[0].mxu0
    %v1900 = vadd.f32 %v1615, %v1899
    %v1901 = vpop.f32.mrb[0].mxu0
    %v1902 = vadd.f32 %v1611, %v1901
    %v1903 = vpop.f32.mrb[0].mxu0
    %v1904 = vadd.f32 %v1615, %v1903
    %1905 = vmatprep.mubr.bf16.mxu0 0
    %1906 = vmatmul.mubr.bf16.gmra.mrb[0].mxu0 %v1597
    %v1907 = vpop.f32.mrb[0].mxu0
    %v1908 = vadd.f32 %v1611, %v1907
    %v1909 = vpop.f32.mrb[0].mxu0
    %v1910 = vadd.f32 %v1615, %v1909
    %v1911 = vpop.f32.mrb[0].mxu0
    %v1912 = vadd.f32 %v1611, %v1911
    %v1913 = vpop.f32.mrb[0].mxu0
    %v1914 = vadd.f32 %v1615, %v1913
    %1915 = vmatprep.mubr.bf16.mxu0 0
    %1916 = vmatmul.mubr.bf16.gmra.mrb[0].mxu0 %v1598
    %v1917 = vpop.f32.mrb[0].mxu0
    %v1918 = vadd.f32 %v1611, %v1917
    %v1919 = vpop.f32.mrb[0].mxu0
    %v1920 = vadd.f32 %v1615, %v1919
    %v1921 = vpop.f32.mrb[0].mxu0
    %v1922 = vadd.f32 %v1611, %v1921
    %v1923 = vpop.f32.mrb[0].mxu0
    %v1924 = vadd.f32 %v1615, %v1923
    %1925 = vdwg.mxu0
    %1926 = vst [vmem:[#allocation4] sm:$0xff] %v1815
    %1927 = vst [vmem:[#allocation4 + $0x8] sm:$0xff] %v1817
    %1928 = vst [vmem:[#allocation4 + $0x10] sm:$0xff] %v1888
    %1929 = vst [vmem:[#allocation4 + $0x18] sm:$0xff] %v1890
    %1930 = vst [vmem:[#allocation4 + $0x20] sm:$0xff] %v1819
    %1931 = vst [vmem:[#allocation4 + $0x28] sm:$0xff] %v1821
    %1932 = vst [vmem:[#allocation4 + $0x30] sm:$0xff] %v1892
    %1933 = vst [vmem:[#allocation4 + $0x38] sm:$0xff] %v1894
    %1934 = vst [vmem:[#allocation4 + $0x40] sm:$0xff] %v1825
    %1935 = vst [vmem:[#allocation4 + $0x48] sm:$0xff] %v1827
    %1936 = vst [vmem:[#allocation4 + $0x50] sm:$0xff] %v1898
    %1937 = vst [vmem:[#allocation4 + $0x58] sm:$0xff] %v1900
    %1938 = vst [vmem:[#allocation4 + $0x60] sm:$0xff] %v1829
    %1939 = vst [vmem:[#allocation4 + $0x68] sm:$0xff] %v1831
    %1940 = vst [vmem:[#allocation4 + $0x70] sm:$0xff] %v1902
    %1941 = vst [vmem:[#allocation4 + $0x78] sm:$0xff] %v1904
    %1942 = vst [vmem:[#allocation4 + $0x80] sm:$0xff] %v1835
    %1943 = vst [vmem:[#allocation4 + $0x88] sm:$0xff] %v1837
    %1944 = vst [vmem:[#allocation4 + $0x90] sm:$0xff] %v1908
    %1945 = vst [vmem:[#allocation4 + $0x98] sm:$0xff] %v1910
    %1946 = vst [vmem:[#allocation4 + $0xa0] sm:$0xff] %v1839
    %1947 = vst [vmem:[#allocation4 + $0xa8] sm:$0xff] %v1841
    %1948 = vst [vmem:[#allocation4 + $0xb0] sm:$0xff] %v1912
    %1949 = vst [vmem:[#allocation4 + $0xb8] sm:$0xff] %v1914
    %1950 = vst [vmem:[#allocation4 + $0xc0] sm:$0xff] %v1845
    %1951 = vst [vmem:[#allocation4 + $0xc8] sm:$0xff] %v1847
    %1952 = vst [vmem:[#allocation4 + $0xd0] sm:$0xff] %v1918
    %1953 = vst [vmem:[#allocation4 + $0xd8] sm:$0xff] %v1920
    %1954 = vst [vmem:[#allocation4 + $0xe0] sm:$0xff] %v1849
    %1955 = vst [vmem:[#allocation4 + $0xe8] sm:$0xff] %v1851
    %1956 = vst [vmem:[#allocation4 + $0xf0] sm:$0xff] %v1922
    %1957 = vst [vmem:[#allocation4 + $0xf8] sm:$0xff] %v1924
    %v1958 = vld [vmem:[%s406] sm:$0xff]
    %v1959 = vld [vmem:[%s406 + $0x8] sm:$0xff]
    %v1960 = vld [vmem:[%s406 + $0x10] sm:$0xff]
    %v1961 = vld [vmem:[%s406 + $0x18] sm:$0xff]
    %v1994 = vunpack.c.l.b16 %v1554
    %v1995 = vunpack.c.h.b16 %v1554
    %v1996 = vunpack.c.l.b16 %v1555
    %v1997 = vunpack.c.h.b16 %v1555
    %v1998 = vunpack.c.l.b16 %v1556
    %v1999 = vunpack.c.h.b16 %v1556
    %v2000 = vunpack.c.l.b16 %v1557
    %v2001 = vunpack.c.h.b16 %v1557
    %v2002 = vunpack.c.l.b16 %v1558
    %v2003 = vunpack.c.h.b16 %v1558
    %v2004 = vunpack.c.l.b16 %v1559
    %v2005 = vunpack.c.h.b16 %v1559
    %v2006 = vunpack.c.l.b16 %v1560
    %v2007 = vunpack.c.h.b16 %v1560
    %v2008 = vunpack.c.l.b16 %v1561
    %v2009 = vunpack.c.h.b16 %v1561
    %v2010 = vunpack.c.l.b16 %v1562
    %v2011 = vunpack.c.h.b16 %v1562
    %v2012 = vunpack.c.l.b16 %v1563
    %v2013 = vunpack.c.h.b16 %v1563
    %v2014 = vunpack.c.l.b16 %v1564
    %v2015 = vunpack.c.h.b16 %v1564
    %v2016 = vunpack.c.l.b16 %v1565
    %v2017 = vunpack.c.h.b16 %v1565
    %v2018 = vunpack.c.l.b16 %v1566
    %v2019 = vunpack.c.h.b16 %v1566
    %v2020 = vunpack.c.l.b16 %v1567
    %v2021 = vunpack.c.h.b16 %v1567
    %v2022 = vunpack.c.l.b16 %v1568
    %v2023 = vunpack.c.h.b16 %v1568
    %v2024 = vunpack.c.l.b16 %v1569
    %v2025 = vunpack.c.h.b16 %v1569
    %v2026 = vunpack.c.l.b16 %v1570
    %v2027 = vunpack.c.h.b16 %v1570
    %v2028 = vunpack.c.l.b16 %v1571
    %v2029 = vunpack.c.h.b16 %v1571
    %v2030 = vunpack.c.l.b16 %v1572
    %v2031 = vunpack.c.h.b16 %v1572
    %v2032 = vunpack.c.l.b16 %v1573
    %v2033 = vunpack.c.h.b16 %v1573
    %v2034 = vunpack.c.l.b16 %v1574
    %v2035 = vunpack.c.h.b16 %v1574
    %v2036 = vunpack.c.l.b16 %v1575
    %v2037 = vunpack.c.h.b16 %v1575
    %v2038 = vunpack.c.l.b16 %v1576
    %v2039 = vunpack.c.h.b16 %v1576
    %v2040 = vunpack.c.l.b16 %v1577
    %v2041 = vunpack.c.h.b16 %v1577
    %v2042 = vunpack.c.l.b16 %v1578
    %v2043 = vunpack.c.h.b16 %v1578
    %v2044 = vunpack.c.l.b16 %v1579
    %v2045 = vunpack.c.h.b16 %v1579
    %v2046 = vunpack.c.l.b16 %v1580
    %v2047 = vunpack.c.h.b16 %v1580
    %v2048 = vunpack.c.l.b16 %v1581
    %v2049 = vunpack.c.h.b16 %v1581
    %v2050 = vunpack.c.l.b16 %v1582
    %v2051 = vunpack.c.h.b16 %v1582
    %v2052 = vunpack.c.l.b16 %v1583
    %v2053 = vunpack.c.h.b16 %v1583
    %v2054 = vunpack.c.l.b16 %v1584
    %v2055 = vunpack.c.h.b16 %v1584
    %v2056 = vunpack.c.l.b16 %v1585
    %v2057 = vunpack.c.h.b16 %v1585
    %v2058 = vpack.c.b16 %v1998, %v1994
    %v2059 = vpack.c.b16 %v1999, %v1995
    %v2060 = vpack.c.b16 %v2000, %v1996
    %v2061 = vpack.c.b16 %v2001, %v1997
    %v2062 = vpack.c.b16 %v2006, %v2002
    %v2063 = vpack.c.b16 %v2007, %v2003
    %v2064 = vpack.c.b16 %v2008, %v2004
    %v2065 = vpack.c.b16 %v2009, %v2005
    %v2066 = vpack.c.b16 %v2014, %v2010
    %v2067 = vpack.c.b16 %v2015, %v2011
    %v2068 = vpack.c.b16 %v2016, %v2012
    %v2069 = vpack.c.b16 %v2017, %v2013
    %v2070 = vpack.c.b16 %v2022, %v2018
    %v2071 = vpack.c.b16 %v2023, %v2019
    %v2072 = vpack.c.b16 %v2024, %v2020
    %v2073 = vpack.c.b16 %v2025, %v2021
    %v2074 = vpack.c.b16 %v2030, %v2026
    %v2075 = vpack.c.b16 %v2031, %v2027
    %v2076 = vpack.c.b16 %v2032, %v2028
    %v2077 = vpack.c.b16 %v2033, %v2029
    %v2078 = vpack.c.b16 %v2038, %v2034
    %v2079 = vpack.c.b16 %v2039, %v2035
    %v2080 = vpack.c.b16 %v2040, %v2036
    %v2081 = vpack.c.b16 %v2041, %v2037
    %v2082 = vpack.c.b16 %v2046, %v2042
    %v2083 = vpack.c.b16 %v2047, %v2043
    %v2084 = vpack.c.b16 %v2048, %v2044
    %v2085 = vpack.c.b16 %v2049, %v2045
    %v2086 = vpack.c.b16 %v2054, %v2050
    %v2087 = vpack.c.b16 %v2055, %v2051
    %v2088 = vpack.c.b16 %v2056, %v2052
    %v2089 = vpack.c.b16 %v2057, %v2053
    %2122 = vmatprep.subr.bf16.mxu0 %v2059
    %2123 = vmatpush1.bf16.msra.mxu0 %v2058
    %2124 = vmatprep.subr.bf16.mxu0 %v2063
    %2125 = vmatpush1.bf16.msra.mxu0 %v2062
    %2126 = vmatprep.subr.bf16.mxu0 %v2067
    %2127 = vmatpush1.bf16.msra.mxu0 %v2066
    %2128 = vmatprep.subr.bf16.mxu0 %v2071
    %2129 = vmatpush1.bf16.msra.mxu0 %v2070
    %2130 = vmatprep.subr.bf16.mxu0 %v2075
    %2131 = vmatpush1.bf16.msra.mxu0 %v2074
    %2132 = vmatprep.subr.bf16.mxu0 %v2079
    %2133 = vmatpush1.bf16.msra.mxu0 %v2078
    %2134 = vmatprep.subr.bf16.mxu0 %v2083
    %2135 = vmatpush1.bf16.msra.mxu0 %v2082
    %2136 = vmatprep.subr.bf16.mxu0 %v2087
    %2137 = vmatpush1.bf16.msra.mxu0 %v2086
    %2138 = vmatprep.subr.bf16.mxu0 0
    %2139 = vmatpush1.bf16.msra.mxu0 0
    %2140 = vmatprep.subr.bf16.mxu0 0
    %2141 = vmatpush1.bf16.msra.mxu0 0
    %2142 = vmatprep.subr.bf16.mxu0 0
    %2143 = vmatpush1.bf16.msra.mxu0 0
    %2144 = vmatprep.subr.bf16.mxu0 0
    %2145 = vmatpush1.bf16.msra.mxu0 0
    %2146 = vmatprep.subr.bf16.mxu0 0
    %2147 = vmatpush1.bf16.msra.mxu0 0
    %2148 = vmatprep.subr.bf16.mxu0 0
    %2149 = vmatpush1.bf16.msra.mxu0 0
    %2150 = vmatprep.subr.bf16.mxu0 0
    %2151 = vmatpush1.bf16.msra.mxu0 0
    %2152 = vmatprep.subr.bf16.mxu0 0
    %2153 = vmatpush1.bf16.msra.mxu0 0
    %2154 = vmatprep.mubr.bf16.mxu0 0
    %2155 = vmatmul.mubr.bf16.gmra.mrb[0].mxu0 0
    %v2156 = vpop.f32.mrb[0].mxu0
    %v2157 = vadd.f32 0.0, %v2156
    %v2158 = vpop.f32.mrb[0].mxu0
    %v2159 = vadd.f32 0.0, %v2158
    %v2160 = vpop.f32.mrb[0].mxu0
    %v2161 = vpop.f32.mrb[0].mxu0
    %2162 = vdwg.mxu0
    %2163 = vmatprep.subr.bf16.mxu0 %v2061
    %2164 = vmatpush1.bf16.msra.mxu0 %v2060
    %2165 = vmatprep.subr.bf16.mxu0 %v2065
    %2166 = vmatpush1.bf16.msra.mxu0 %v2064
    %2167 = vmatprep.subr.bf16.mxu0 %v2069
    %2168 = vmatpush1.bf16.msra.mxu0 %v2068
    %2169 = vmatprep.subr.bf16.mxu0 %v2073
    %2170 = vmatpush1.bf16.msra.mxu0 %v2072
    %2171 = vmatprep.subr.bf16.mxu0 %v2077
    %2172 = vmatpush1.bf16.msra.mxu0 %v2076
    %2173 = vmatprep.subr.bf16.mxu0 %v2081
    %2174 = vmatpush1.bf16.msra.mxu0 %v2080
    %2175 = vmatprep.subr.bf16.mxu0 %v2085
    %2176 = vmatpush1.bf16.msra.mxu0 %v2084
    %2177 = vmatprep.subr.bf16.mxu0 %v2089
    %2178 = vmatpush1.bf16.msra.mxu0 %v2088
    %2179 = vmatprep.subr.bf16.mxu0 0
    %2180 = vmatpush1.bf16.msra.mxu0 0
    %2181 = vmatprep.subr.bf16.mxu0 0
    %2182 = vmatpush1.bf16.msra.mxu0 0
    %2183 = vmatprep.subr.bf16.mxu0 0
    %2184 = vmatpush1.bf16.msra.mxu0 0
    %2185 = vmatprep.subr.bf16.mxu0 0
    %2186 = vmatpush1.bf16.msra.mxu0 0
    %2187 = vmatprep.subr.bf16.mxu0 0
    %2188 = vmatpush1.bf16.msra.mxu0 0
    %2189 = vmatprep.subr.bf16.mxu0 0
    %2190 = vmatpush1.bf16.msra.mxu0 0
    %2191 = vmatprep.subr.bf16.mxu0 0
    %2192 = vmatpush1.bf16.msra.mxu0 0
    %2193 = vmatprep.subr.bf16.mxu0 0
    %2194 = vmatpush1.bf16.msra.mxu0 0
    %2195 = vmatprep.mubr.bf16.mxu0 0
    %2196 = vmatmul.mubr.bf16.gmra.mrb[0].mxu0 0
    %v2197 = vpop.f32.mrb[0].mxu0
    %v2198 = vadd.f32 0.0, %v2197
    %v2199 = vpop.f32.mrb[0].mxu0
    %v2200 = vadd.f32 0.0, %v2199
    %v2201 = vpop.f32.mrb[0].mxu0
    %v2202 = vpop.f32.mrb[0].mxu0
    %2203 = vdwg.mxu0
    %v2204 = vadd.f32 %v1958, %v2157
    %v2205 = vadd.f32 %v1959, %v2159
    %v2206 = vadd.f32 %v1960, %v2198
    %v2207 = vadd.f32 %v1961, %v2200
    %v2208 = vxor.u32 %v2204, 2147483648
    %v2209 = vmul.f32 %v2208, 1.442695
    %v2210 = vpow.pop %v2209
    %v2211 = vadd.f32 %v2210, 1.0
    %v2212 = vrcp.pop %v2211
    %v2213 = vmul.f32 1.0, %v2212
    %v2214 = vxor.u32 %v2205, 2147483648
    %v2215 = vmul.f32 %v2214, 1.442695
    %v2216 = vpow.pop %v2215
    %v2217 = vadd.f32 %v2216, 1.0
    %v2218 = vrcp.pop %v2217
    %v2219 = vmul.f32 1.0, %v2218
    %v2220 = vtanh.pop %v2206
    %v2221 = vxor.u32 %v2207, 2147483648
    %v2222 = vmul.f32 %v2221, 1.442695
    %v2223 = vpow.pop %v2222
    %v2224 = vadd.f32 %v2223, 1.0
    %v2225 = vrcp.pop %v2224
    %v2226 = vmul.f32 1.0, %v2225
    %v2227 = vmul.f32 %v2219, 0.0
    %v2228 = vmul.f32 %v2213, %v2220
    %v2229 = vadd.f32 %v2227, %v2228
    %v2230 = vtanh.pop %v2229
    %v2231 = vmul.f32 %v2226, %v2230
    %v2232 = vld [vmem:[%s684] sm:$0xff]
    %v2233 = vld [vmem:[%s684 + $0x8] sm:$0xff]
    %v2234 = vld [vmem:[%s684 + $0x10] sm:$0xff]
    %v2235 = vld [vmem:[%s684 + $0x18] sm:$0xff]
    %v2236 = vpack.c.bf16 %v2231, %v2231
    %2237 = vmatprep.subr.bf16.mxu0 %v2059
    %2238 = vmatpush1.bf16.msra.mxu0 %v2058
    %2239 = vmatprep.subr.bf16.mxu0 %v2063
    %2240 = vmatpush1.bf16.msra.mxu0 %v2062
    %2241 = vmatprep.subr.bf16.mxu0 %v2067
    %2242 = vmatpush1.bf16.msra.mxu0 %v2066
    %2243 = vmatprep.subr.bf16.mxu0 %v2071
    %2244 = vmatpush1.bf16.msra.mxu0 %v2070
    %2245 = vmatprep.subr.bf16.mxu0 %v2075
    %2246 = vmatpush1.bf16.msra.mxu0 %v2074
    %2247 = vmatprep.subr.bf16.mxu0 %v2079
    %2248 = vmatpush1.bf16.msra.mxu0 %v2078
    %2249 = vmatprep.subr.bf16.mxu0 %v2083
    %2250 = vmatpush1.bf16.msra.mxu0 %v2082
    %2251 = vmatprep.subr.bf16.mxu0 %v2087
    %2252 = vmatpush1.bf16.msra.mxu0 %v2086
    %2253 = vmatprep.subr.bf16.mxu0 0
    %2254 = vmatpush1.bf16.msra.mxu0 0
    %2255 = vmatprep.subr.bf16.mxu0 0
    %2256 = vmatpush1.bf16.msra.mxu0 0
    %2257 = vmatprep.subr.bf16.mxu0 0
    %2258 = vmatpush1.bf16.msra.mxu0 0
    %2259 = vmatprep.subr.bf16.mxu0 0
    %2260 = vmatpush1.bf16.msra.mxu0 0
    %2261 = vmatprep.subr.bf16.mxu0 0
    %2262 = vmatpush1.bf16.msra.mxu0 0
    %2263 = vmatprep.subr.bf16.mxu0 0
    %2264 = vmatpush1.bf16.msra.mxu0 0
    %2265 = vmatprep.subr.bf16.mxu0 0
    %2266 = vmatpush1.bf16.msra.mxu0 0
    %2267 = vmatprep.subr.bf16.mxu0 0
    %2268 = vmatpush1.bf16.msra.mxu0 0
    %2269 = vmatprep.mubr.bf16.mxu0 0
    %2270 = vmatmul.mubr.bf16.gmra.mrb[0].mxu0 %v2236
    %v2271 = vpop.f32.mrb[0].mxu0
    %v2272 = vadd.f32 0.0, %v2271
    %v2273 = vpop.f32.mrb[0].mxu0
    %v2274 = vadd.f32 0.0, %v2273
    %v2275 = vpop.f32.mrb[0].mxu0
    %v2276 = vpop.f32.mrb[0].mxu0
    %2277 = vdwg.mxu0
    %2278 = vmatprep.subr.bf16.mxu0 %v2061
    %2279 = vmatpush1.bf16.msra.mxu0 %v2060
    %2280 = vmatprep.subr.bf16.mxu0 %v2065
    %2281 = vmatpush1.bf16.msra.mxu0 %v2064
    %2282 = vmatprep.subr.bf16.mxu0 %v2069
    %2283 = vmatpush1.bf16.msra.mxu0 %v2068
    %2284 = vmatprep.subr.bf16.mxu0 %v2073
    %2285 = vmatpush1.bf16.msra.mxu0 %v2072
    %2286 = vmatprep.subr.bf16.mxu0 %v2077
    %2287 = vmatpush1.bf16.msra.mxu0 %v2076
    %2288 = vmatprep.subr.bf16.mxu0 %v2081
    %2289 = vmatpush1.bf16.msra.mxu0 %v2080
    %2290 = vmatprep.subr.bf16.mxu0 %v2085
    %2291 = vmatpush1.bf16.msra.mxu0 %v2084
    %2292 = vmatprep.subr.bf16.mxu0 %v2089
    %2293 = vmatpush1.bf16.msra.mxu0 %v2088
    %2294 = vmatprep.subr.bf16.mxu0 0
    %2295 = vmatpush1.bf16.msra.mxu0 0
    %2296 = vmatprep.subr.bf16.mxu0 0
    %2297 = vmatpush1.bf16.msra.mxu0 0
    %2298 = vmatprep.subr.bf16.mxu0 0
    %2299 = vmatpush1.bf16.msra.mxu0 0
    %2300 = vmatprep.subr.bf16.mxu0 0
    %2301 = vmatpush1.bf16.msra.mxu0 0
    %2302 = vmatprep.subr.bf16.mxu0 0
    %2303 = vmatpush1.bf16.msra.mxu0 0
    %2304 = vmatprep.subr.bf16.mxu0 0
    %2305 = vmatpush1.bf16.msra.mxu0 0
    %2306 = vmatprep.subr.bf16.mxu0 0
    %2307 = vmatpush1.bf16.msra.mxu0 0
    %2308 = vmatprep.subr.bf16.mxu0 0
    %2309 = vmatpush1.bf16.msra.mxu0 0
    %2310 = vmatprep.mubr.bf16.mxu0 0
    %2311 = vmatmul.mubr.bf16.gmra.mrb[0].mxu0 %v2236
    %v2312 = vpop.f32.mrb[0].mxu0
    %v2313 = vadd.f32 0.0, %v2312
    %v2314 = vpop.f32.mrb[0].mxu0
    %v2315 = vadd.f32 0.0, %v2314
    %v2316 = vpop.f32.mrb[0].mxu0
    %v2317 = vpop.f32.mrb[0].mxu0
    %2318 = vdwg.mxu0
    %v2319 = vadd.f32 %v2232, %v2272
    %v2320 = vadd.f32 %v2233, %v2274
    %v2321 = vadd.f32 %v2234, %v2313
    %v2322 = vadd.f32 %v2235, %v2315
    %v2323 = vxor.u32 %v2319, 2147483648
    %v2324 = vmul.f32 %v2323, 1.442695
    %v2325 = vpow.pop %v2324
    %v2326 = vadd.f32 %v2325, 1.0
    %v2327 = vrcp.pop %v2326
    %v2328 = vmul.f32 1.0, %v2327
    %v2329 = vxor.u32 %v2320, 2147483648
    %v2330 = vmul.f32 %v2329, 1.442695
    %v2331 = vpow.pop %v2330
    %v2332 = vadd.f32 %v2331, 1.0
    %v2333 = vrcp.pop %v2332
    %v2334 = vmul.f32 1.0, %v2333
    %v2335 = vtanh.pop %v2321
    %v2336 = vxor.u32 %v2322, 2147483648
    %v2337 = vmul.f32 %v2336, 1.442695
    %v2338 = vpow.pop %v2337
    %v2339 = vadd.f32 %v2338, 1.0
    %v2340 = vrcp.pop %v2339
    %v2341 = vmul.f32 1.0, %v2340
    %v2342 = vmul.f32 %v2334, %v2229
    %v2343 = vmul.f32 %v2328, %v2335
    %v2344 = vadd.f32 %v2342, %v2343
    %v2345 = vtanh.pop %v2344
    %v2346 = vmul.f32 %v2341, %v2345
    %v2347 = vld [vmem:[%s804] sm:$0xff]
    %v2348 = vld [vmem:[%s804 + $0x8] sm:$0xff]
    %v2349 = vld [vmem:[%s804 + $0x10] sm:$0xff]
    %v2350 = vld [vmem:[%s804 + $0x18] sm:$0xff]
    %v2351 = vpack.c.bf16 %v2346, %v2346
    %2352 = vmatprep.subr.bf16.mxu0 %v2059
    %2353 = vmatpush1.bf16.msra.mxu0 %v2058
    %2354 = vmatprep.subr.bf16.mxu0 %v2063
    %2355 = vmatpush1.bf16.msra.mxu0 %v2062
    %2356 = vmatprep.subr.bf16.mxu0 %v2067
    %2357 = vmatpush1.bf16.msra.mxu0 %v2066
    %2358 = vmatprep.subr.bf16.mxu0 %v2071
    %2359 = vmatpush1.bf16.msra.mxu0 %v2070
    %2360 = vmatprep.subr.bf16.mxu0 %v2075
    %2361 = vmatpush1.bf16.msra.mxu0 %v2074
    %2362 = vmatprep.subr.bf16.mxu0 %v2079
    %2363 = vmatpush1.bf16.msra.mxu0 %v2078
    %2364 = vmatprep.subr.bf16.mxu0 %v2083
    %2365 = vmatpush1.bf16.msra.mxu0 %v2082
    %2366 = vmatprep.subr.bf16.mxu0 %v2087
    %2367 = vmatpush1.bf16.msra.mxu0 %v2086
    %2368 = vmatprep.subr.bf16.mxu0 0
    %2369 = vmatpush1.bf16.msra.mxu0 0
    %2370 = vmatprep.subr.bf16.mxu0 0
    %2371 = vmatpush1.bf16.msra.mxu0 0
    %2372 = vmatprep.subr.bf16.mxu0 0
    %2373 = vmatpush1.bf16.msra.mxu0 0
    %2374 = vmatprep.subr.bf16.mxu0 0
    %2375 = vmatpush1.bf16.msra.mxu0 0
    %2376 = vmatprep.subr.bf16.mxu0 0
    %2377 = vmatpush1.bf16.msra.mxu0 0
    %2378 = vmatprep.subr.bf16.mxu0 0
    %2379 = vmatpush1.bf16.msra.mxu0 0
    %2380 = vmatprep.subr.bf16.mxu0 0
    %2381 = vmatpush1.bf16.msra.mxu0 0
    %2382 = vmatprep.subr.bf16.mxu0 0
    %2383 = vmatpush1.bf16.msra.mxu0 0
    %2384 = vmatprep.mubr.bf16.mxu0 0
    %2385 = vmatmul.mubr.bf16.gmra.mrb[0].mxu0 %v2351
    %v2386 = vpop.f32.mrb[0].mxu0
    %v2387 = vadd.f32 0.0, %v2386
    %v2388 = vpop.f32.mrb[0].mxu0
    %v2389 = vadd.f32 0.0, %v2388
    %v2390 = vpop.f32.mrb[0].mxu0
    %v2391 = vpop.f32.mrb[0].mxu0
    %2392 = vdwg.mxu0
    %2393 = vmatprep.subr.bf16.mxu0 %v2061
    %2394 = vmatpush1.bf16.msra.mxu0 %v2060
    %2395 = vmatprep.subr.bf16.mxu0 %v2065
    %2396 = vmatpush1.bf16.msra.mxu0 %v2064
    %2397 = vmatprep.subr.bf16.mxu0 %v2069
    %2398 = vmatpush1.bf16.msra.mxu0 %v2068
    %2399 = vmatprep.subr.bf16.mxu0 %v2073
    %2400 = vmatpush1.bf16.msra.mxu0 %v2072
    %2401 = vmatprep.subr.bf16.mxu0 %v2077
    %2402 = vmatpush1.bf16.msra.mxu0 %v2076
    %2403 = vmatprep.subr.bf16.mxu0 %v2081
    %2404 = vmatpush1.bf16.msra.mxu0 %v2080
    %2405 = vmatprep.subr.bf16.mxu0 %v2085
    %2406 = vmatpush1.bf16.msra.mxu0 %v2084
    %2407 = vmatprep.subr.bf16.mxu0 %v2089
    %2408 = vmatpush1.bf16.msra.mxu0 %v2088
    %2409 = vmatprep.subr.bf16.mxu0 0
    %2410 = vmatpush1.bf16.msra.mxu0 0
    %2411 = vmatprep.subr.bf16.mxu0 0
    %2412 = vmatpush1.bf16.msra.mxu0 0
    %2413 = vmatprep.subr.bf16.mxu0 0
    %2414 = vmatpush1.bf16.msra.mxu0 0
    %2415 = vmatprep.subr.bf16.mxu0 0
    %2416 = vmatpush1.bf16.msra.mxu0 0
    %2417 = vmatprep.subr.bf16.mxu0 0
    %2418 = vmatpush1.bf16.msra.mxu0 0
    %2419 = vmatprep.subr.bf16.mxu0 0
    %2420 = vmatpush1.bf16.msra.mxu0 0
    %2421 = vmatprep.subr.bf16.mxu0 0
    %2422 = vmatpush1.bf16.msra.mxu0 0
    %2423 = vmatprep.subr.bf16.mxu0 0
    %2424 = vmatpush1.bf16.msra.mxu0 0
    %2425 = vmatprep.mubr.bf16.mxu0 0
    %2426 = vmatmul.mubr.bf16.gmra.mrb[0].mxu0 %v2351
    %v2427 = vpop.f32.mrb[0].mxu0
    %v2428 = vadd.f32 0.0, %v2427
    %v2429 = vpop.f32.mrb[0].mxu0
    %v2430 = vadd.f32 0.0, %v2429
    %v2431 = vpop.f32.mrb[0].mxu0
    %v2432 = vpop.f32.mrb[0].mxu0
    %2433 = vdwg.mxu0
    %v2434 = vadd.f32 %v2347, %v2387
    %v2435 = vadd.f32 %v2348, %v2389
    %v2436 = vadd.f32 %v2349, %v2428
    %v2437 = vadd.f32 %v2350, %v2430
    %v2438 = vxor.u32 %v2434, 2147483648
    %v2439 = vmul.f32 %v2438, 1.442695
    %v2440 = vpow.pop %v2439
    %v2441 = vadd.f32 %v2440, 1.0
    %v2442 = vrcp.pop %v2441
    %v2443 = vmul.f32 1.0, %v2442
    %v2444 = vxor.u32 %v2435, 2147483648
    %v2445 = vmul.f32 %v2444, 1.442695
    %v2446 = vpow.pop %v2445
    %v2447 = vadd.f32 %v2446, 1.0
    %v2448 = vrcp.pop %v2447
    %v2449 = vmul.f32 1.0, %v2448
    %v2450 = vtanh.pop %v2436
    %v2451 = vxor.u32 %v2437, 2147483648
    %v2452 = vmul.f32 %v2451, 1.442695
    %v2453 = vpow.pop %v2452
    %v2454 = vadd.f32 %v2453, 1.0
    %v2455 = vrcp.pop %v2454
    %v2456 = vmul.f32 1.0, %v2455
    %v2457 = vmul.f32 %v2449, %v2344
    %v2458 = vmul.f32 %v2443, %v2450
    %v2459 = vadd.f32 %v2457, %v2458
    %v2460 = vtanh.pop %v2459
    %v2461 = vmul.f32 %v2456, %v2460
    %v2462 = vld [vmem:[%s924] sm:$0xff]
    %v2463 = vld [vmem:[%s924 + $0x8] sm:$0xff]
    %v2464 = vld [vmem:[%s924 + $0x10] sm:$0xff]
    %v2465 = vld [vmem:[%s924 + $0x18] sm:$0xff]
    %v2466 = vpack.c.bf16 %v2461, %v2461
    %2467 = vmatprep.subr.bf16.mxu0 %v2059
    %2468 = vmatpush1.bf16.msra.mxu0 %v2058
    %2469 = vmatprep.subr.bf16.mxu0 %v2063
    %2470 = vmatpush1.bf16.msra.mxu0 %v2062
    %2471 = vmatprep.subr.bf16.mxu0 %v2067
    %2472 = vmatpush1.bf16.msra.mxu0 %v2066
    %2473 = vmatprep.subr.bf16.mxu0 %v2071
    %2474 = vmatpush1.bf16.msra.mxu0 %v2070
    %2475 = vmatprep.subr.bf16.mxu0 %v2075
    %2476 = vmatpush1.bf16.msra.mxu0 %v2074
    %2477 = vmatprep.subr.bf16.mxu0 %v2079
    %2478 = vmatpush1.bf16.msra.mxu0 %v2078
    %2479 = vmatprep.subr.bf16.mxu0 %v2083
    %2480 = vmatpush1.bf16.msra.mxu0 %v2082
    %2481 = vmatprep.subr.bf16.mxu0 %v2087
    %2482 = vmatpush1.bf16.msra.mxu0 %v2086
    %2483 = vmatprep.subr.bf16.mxu0 0
    %2484 = vmatpush1.bf16.msra.mxu0 0
    %2485 = vmatprep.subr.bf16.mxu0 0
    %2486 = vmatpush1.bf16.msra.mxu0 0
    %2487 = vmatprep.subr.bf16.mxu0 0
    %2488 = vmatpush1.bf16.msra.mxu0 0
    %2489 = vmatprep.subr.bf16.mxu0 0
    %2490 = vmatpush1.bf16.msra.mxu0 0
    %2491 = vmatprep.subr.bf16.mxu0 0
    %2492 = vmatpush1.bf16.msra.mxu0 0
    %2493 = vmatprep.subr.bf16.mxu0 0
    %2494 = vmatpush1.bf16.msra.mxu0 0
    %2495 = vmatprep.subr.bf16.mxu0 0
    %2496 = vmatpush1.bf16.msra.mxu0 0
    %2497 = vmatprep.subr.bf16.mxu0 0
    %2498 = vmatpush1.bf16.msra.mxu0 0
    %2499 = vmatprep.mubr.bf16.mxu0 0
    %2500 = vmatmul.mubr.bf16.gmra.mrb[0].mxu0 %v2466
    %v2501 = vpop.f32.mrb[0].mxu0
    %v2502 = vadd.f32 0.0, %v2501
    %v2503 = vpop.f32.mrb[0].mxu0
    %v2504 = vadd.f32 0.0, %v2503
    %v2505 = vpop.f32.mrb[0].mxu0
    %v2506 = vpop.f32.mrb[0].mxu0
    %2507 = vdwg.mxu0
    %2508 = vmatprep.subr.bf16.mxu0 %v2061
    %2509 = vmatpush1.bf16.msra.mxu0 %v2060
    %2510 = vmatprep.subr.bf16.mxu0 %v2065
    %2511 = vmatpush1.bf16.msra.mxu0 %v2064
    %2512 = vmatprep.subr.bf16.mxu0 %v2069
    %2513 = vmatpush1.bf16.msra.mxu0 %v2068
    %2514 = vmatprep.subr.bf16.mxu0 %v2073
    %2515 = vmatpush1.bf16.msra.mxu0 %v2072
    %2516 = vmatprep.subr.bf16.mxu0 %v2077
    %2517 = vmatpush1.bf16.msra.mxu0 %v2076
    %2518 = vmatprep.subr.bf16.mxu0 %v2081
    %2519 = vmatpush1.bf16.msra.mxu0 %v2080
    %2520 = vmatprep.subr.bf16.mxu0 %v2085
    %2521 = vmatpush1.bf16.msra.mxu0 %v2084
    %2522 = vmatprep.subr.bf16.mxu0 %v2089
    %2523 = vmatpush1.bf16.msra.mxu0 %v2088
    %2524 = vmatprep.subr.bf16.mxu0 0
    %2525 = vmatpush1.bf16.msra.mxu0 0
    %2526 = vmatprep.subr.bf16.mxu0 0
    %2527 = vmatpush1.bf16.msra.mxu0 0
    %2528 = vmatprep.subr.bf16.mxu0 0
    %2529 = vmatpush1.bf16.msra.mxu0 0
    %2530 = vmatprep.subr.bf16.mxu0 0
    %2531 = vmatpush1.bf16.msra.mxu0 0
    %2532 = vmatprep.subr.bf16.mxu0 0
    %2533 = vmatpush1.bf16.msra.mxu0 0
    %2534 = vmatprep.subr.bf16.mxu0 0
    %2535 = vmatpush1.bf16.msra.mxu0 0
    %2536 = vmatprep.subr.bf16.mxu0 0
    %2537 = vmatpush1.bf16.msra.mxu0 0
    %2538 = vmatprep.subr.bf16.mxu0 0
    %2539 = vmatpush1.bf16.msra.mxu0 0
    %2540 = vmatprep.mubr.bf16.mxu0 0
    %2541 = vmatmul.mubr.bf16.gmra.mrb[0].mxu0 %v2466
    %v2542 = vpop.f32.mrb[0].mxu0
    %v2543 = vadd.f32 0.0, %v2542
    %v2544 = vpop.f32.mrb[0].mxu0
    %v2545 = vadd.f32 0.0, %v2544
    %v2546 = vpop.f32.mrb[0].mxu0
    %v2547 = vpop.f32.mrb[0].mxu0
    %2548 = vdwg.mxu0
    %v2549 = vadd.f32 %v2462, %v2502
    %v2550 = vadd.f32 %v2463, %v2504
    %v2551 = vadd.f32 %v2464, %v2543
    %v2552 = vadd.f32 %v2465, %v2545
    %v2553 = vxor.u32 %v2549, 2147483648
    %v2554 = vmul.f32 %v2553, 1.442695
    %v2555 = vpow.pop %v2554
    %v2556 = vadd.f32 %v2555, 1.0
    %v2557 = vrcp.pop %v2556
    %v2558 = vmul.f32 1.0, %v2557
    %v2559 = vxor.u32 %v2550, 2147483648
    %v2560 = vmul.f32 %v2559, 1.442695
    %v2561 = vpow.pop %v2560
    %v2562 = vadd.f32 %v2561, 1.0
    %v2563 = vrcp.pop %v2562
    %v2564 = vmul.f32 1.0, %v2563
    %v2565 = vtanh.pop %v2551
    %v2566 = vxor.u32 %v2552, 2147483648
    %v2567 = vmul.f32 %v2566, 1.442695
    %v2568 = vpow.pop %v2567
    %v2569 = vadd.f32 %v2568, 1.0
    %v2570 = vrcp.pop %v2569
    %v2571 = vmul.f32 1.0, %v2570
    %v2572 = vmul.f32 %v2564, %v2459
    %v2573 = vmul.f32 %v2558, %v2565
    %v2574 = vadd.f32 %v2572, %v2573
    %v2575 = vtanh.pop %v2574
    %v2576 = vmul.f32 %v2571, %v2575
    %v2577 = vld [vmem:[%s1044] sm:$0xff]
    %v2578 = vld [vmem:[%s1044 + $0x8] sm:$0xff]
    %v2579 = vld [vmem:[%s1044 + $0x10] sm:$0xff]
    %v2580 = vld [vmem:[%s1044 + $0x18] sm:$0xff]
    %v2581 = vpack.c.bf16 %v2576, %v2576
    %2582 = vmatprep.subr.bf16.mxu0 %v2059
    %2583 = vmatpush1.bf16.msra.mxu0 %v2058
    %2584 = vmatprep.subr.bf16.mxu0 %v2063
    %2585 = vmatpush1.bf16.msra.mxu0 %v2062
    %2586 = vmatprep.subr.bf16.mxu0 %v2067
    %2587 = vmatpush1.bf16.msra.mxu0 %v2066
    %2588 = vmatprep.subr.bf16.mxu0 %v2071
    %2589 = vmatpush1.bf16.msra.mxu0 %v2070
    %2590 = vmatprep.subr.bf16.mxu0 %v2075
    %2591 = vmatpush1.bf16.msra.mxu0 %v2074
    %2592 = vmatprep.subr.bf16.mxu0 %v2079
    %2593 = vmatpush1.bf16.msra.mxu0 %v2078
    %2594 = vmatprep.subr.bf16.mxu0 %v2083
    %2595 = vmatpush1.bf16.msra.mxu0 %v2082
    %2596 = vmatprep.subr.bf16.mxu0 %v2087
    %2597 = vmatpush1.bf16.msra.mxu0 %v2086
    %2598 = vmatprep.subr.bf16.mxu0 0
    %2599 = vmatpush1.bf16.msra.mxu0 0
    %2600 = vmatprep.subr.bf16.mxu0 0
    %2601 = vmatpush1.bf16.msra.mxu0 0
    %2602 = vmatprep.subr.bf16.mxu0 0
    %2603 = vmatpush1.bf16.msra.mxu0 0
    %2604 = vmatprep.subr.bf16.mxu0 0
    %2605 = vmatpush1.bf16.msra.mxu0 0
    %2606 = vmatprep.subr.bf16.mxu0 0
    %2607 = vmatpush1.bf16.msra.mxu0 0
    %2608 = vmatprep.subr.bf16.mxu0 0
    %2609 = vmatpush1.bf16.msra.mxu0 0
    %2610 = vmatprep.subr.bf16.mxu0 0
    %2611 = vmatpush1.bf16.msra.mxu0 0
    %2612 = vmatprep.subr.bf16.mxu0 0
    %2613 = vmatpush1.bf16.msra.mxu0 0
    %2614 = vmatprep.mubr.bf16.mxu0 0
    %2615 = vmatmul.mubr.bf16.gmra.mrb[0].mxu0 %v2581
    %v2616 = vpop.f32.mrb[0].mxu0
    %v2617 = vadd.f32 0.0, %v2616
    %v2618 = vpop.f32.mrb[0].mxu0
    %v2619 = vadd.f32 0.0, %v2618
    %v2620 = vpop.f32.mrb[0].mxu0
    %v2621 = vpop.f32.mrb[0].mxu0
    %2622 = vdwg.mxu0
    %2623 = vmatprep.subr.bf16.mxu0 %v2061
    %2624 = vmatpush1.bf16.msra.mxu0 %v2060
    %2625 = vmatprep.subr.bf16.mxu0 %v2065
    %2626 = vmatpush1.bf16.msra.mxu0 %v2064
    %2627 = vmatprep.subr.bf16.mxu0 %v2069
    %2628 = vmatpush1.bf16.msra.mxu0 %v2068
    %2629 = vmatprep.subr.bf16.mxu0 %v2073
    %2630 = vmatpush1.bf16.msra.mxu0 %v2072
    %2631 = vmatprep.subr.bf16.mxu0 %v2077
    %2632 = vmatpush1.bf16.msra.mxu0 %v2076
    %2633 = vmatprep.subr.bf16.mxu0 %v2081
    %2634 = vmatpush1.bf16.msra.mxu0 %v2080
    %2635 = vmatprep.subr.bf16.mxu0 %v2085
    %2636 = vmatpush1.bf16.msra.mxu0 %v2084
    %2637 = vmatprep.subr.bf16.mxu0 %v2089
    %2638 = vmatpush1.bf16.msra.mxu0 %v2088
    %2639 = vmatprep.subr.bf16.mxu0 0
    %2640 = vmatpush1.bf16.msra.mxu0 0
    %2641 = vmatprep.subr.bf16.mxu0 0
    %2642 = vmatpush1.bf16.msra.mxu0 0
    %2643 = vmatprep.subr.bf16.mxu0 0
    %2644 = vmatpush1.bf16.msra.mxu0 0
    %2645 = vmatprep.subr.bf16.mxu0 0
    %2646 = vmatpush1.bf16.msra.mxu0 0
    %2647 = vmatprep.subr.bf16.mxu0 0
    %2648 = vmatpush1.bf16.msra.mxu0 0
    %2649 = vmatprep.subr.bf16.mxu0 0
    %2650 = vmatpush1.bf16.msra.mxu0 0
    %2651 = vmatprep.subr.bf16.mxu0 0
    %2652 = vmatpush1.bf16.msra.mxu0 0
    %2653 = vmatprep.subr.bf16.mxu0 0
    %2654 = vmatpush1.bf16.msra.mxu0 0
    %2655 = vmatprep.mubr.bf16.mxu0 0
    %2656 = vmatmul.mubr.bf16.gmra.mrb[0].mxu0 %v2581
    %v2657 = vpop.f32.mrb[0].mxu0
    %v2658 = vadd.f32 0.0, %v2657
    %v2659 = vpop.f32.mrb[0].mxu0
    %v2660 = vadd.f32 0.0, %v2659
    %v2661 = vpop.f32.mrb[0].mxu0
    %v2662 = vpop.f32.mrb[0].mxu0
    %2663 = vdwg.mxu0
    %v2664 = vadd.f32 %v2577, %v2617
    %v2665 = vadd.f32 %v2578, %v2619
    %v2666 = vadd.f32 %v2579, %v2658
    %v2667 = vadd.f32 %v2580, %v2660
    %v2668 = vxor.u32 %v2664, 2147483648
    %v2669 = vmul.f32 %v2668, 1.442695
    %v2670 = vpow.pop %v2669
    %v2671 = vadd.f32 %v2670, 1.0
    %v2672 = vrcp.pop %v2671
    %v2673 = vmul.f32 1.0, %v2672
    %v2674 = vxor.u32 %v2665, 2147483648
    %v2675 = vmul.f32 %v2674, 1.442695
    %v2676 = vpow.pop %v2675
    %v2677 = vadd.f32 %v2676, 1.0
    %v2678 = vrcp.pop %v2677
    %v2679 = vmul.f32 1.0, %v2678
    %v2680 = vtanh.pop %v2666
    %v2681 = vxor.u32 %v2667, 2147483648
    %v2682 = vmul.f32 %v2681, 1.442695
    %v2683 = vpow.pop %v2682
    %v2684 = vadd.f32 %v2683, 1.0
    %v2685 = vrcp.pop %v2684
    %v2686 = vmul.f32 1.0, %v2685
    %v2687 = vmul.f32 %v2679, %v2574
    %v2688 = vmul.f32 %v2673, %v2680
    %v2689 = vadd.f32 %v2687, %v2688
    %v2690 = vtanh.pop %v2689
    %v2691 = vmul.f32 %v2686, %v2690
    %v2692 = vld [vmem:[%s1164] sm:$0xff]
    %v2693 = vld [vmem:[%s1164 + $0x8] sm:$0xff]
    %v2694 = vld [vmem:[%s1164 + $0x10] sm:$0xff]
    %v2695 = vld [vmem:[%s1164 + $0x18] sm:$0xff]
    %v2696 = vpack.c.bf16 %v2691, %v2691
    %2697 = vmatprep.subr.bf16.mxu0 %v2059
    %2698 = vmatpush1.bf16.msra.mxu0 %v2058
    %2699 = vmatprep.subr.bf16.mxu0 %v2063
    %2700 = vmatpush1.bf16.msra.mxu0 %v2062
    %2701 = vmatprep.subr.bf16.mxu0 %v2067
    %2702 = vmatpush1.bf16.msra.mxu0 %v2066
    %2703 = vmatprep.subr.bf16.mxu0 %v2071
    %2704 = vmatpush1.bf16.msra.mxu0 %v2070
    %2705 = vmatprep.subr.bf16.mxu0 %v2075
    %2706 = vmatpush1.bf16.msra.mxu0 %v2074
    %2707 = vmatprep.subr.bf16.mxu0 %v2079
    %2708 = vmatpush1.bf16.msra.mxu0 %v2078
    %2709 = vmatprep.subr.bf16.mxu0 %v2083
    %2710 = vmatpush1.bf16.msra.mxu0 %v2082
    %2711 = vmatprep.subr.bf16.mxu0 %v2087
    %2712 = vmatpush1.bf16.msra.mxu0 %v2086
    %2713 = vmatprep.subr.bf16.mxu0 0
    %2714 = vmatpush1.bf16.msra.mxu0 0
    %2715 = vmatprep.subr.bf16.mxu0 0
    %2716 = vmatpush1.bf16.msra.mxu0 0
    %2717 = vmatprep.subr.bf16.mxu0 0
    %2718 = vmatpush1.bf16.msra.mxu0 0
    %2719 = vmatprep.subr.bf16.mxu0 0
    %2720 = vmatpush1.bf16.msra.mxu0 0
    %2721 = vmatprep.subr.bf16.mxu0 0
    %2722 = vmatpush1.bf16.msra.mxu0 0
    %2723 = vmatprep.subr.bf16.mxu0 0
    %2724 = vmatpush1.bf16.msra.mxu0 0
    %2725 = vmatprep.subr.bf16.mxu0 0
    %2726 = vmatpush1.bf16.msra.mxu0 0
    %2727 = vmatprep.subr.bf16.mxu0 0
    %2728 = vmatpush1.bf16.msra.mxu0 0
    %2729 = vmatprep.mubr.bf16.mxu0 0
    %2730 = vmatmul.mubr.bf16.gmra.mrb[0].mxu0 %v2696
    %v2731 = vpop.f32.mrb[0].mxu0
    %v2732 = vadd.f32 0.0, %v2731
    %v2733 = vpop.f32.mrb[0].mxu0
    %v2734 = vadd.f32 0.0, %v2733
    %v2735 = vpop.f32.mrb[0].mxu0
    %v2736 = vpop.f32.mrb[0].mxu0
    %2737 = vdwg.mxu0
    %2738 = vmatprep.subr.bf16.mxu0 %v2061
    %2739 = vmatpush1.bf16.msra.mxu0 %v2060
    %2740 = vmatprep.subr.bf16.mxu0 %v2065
    %2741 = vmatpush1.bf16.msra.mxu0 %v2064
    %2742 = vmatprep.subr.bf16.mxu0 %v2069
    %2743 = vmatpush1.bf16.msra.mxu0 %v2068
    %2744 = vmatprep.subr.bf16.mxu0 %v2073
    %2745 = vmatpush1.bf16.msra.mxu0 %v2072
    %2746 = vmatprep.subr.bf16.mxu0 %v2077
    %2747 = vmatpush1.bf16.msra.mxu0 %v2076
    %2748 = vmatprep.subr.bf16.mxu0 %v2081
    %2749 = vmatpush1.bf16.msra.mxu0 %v2080
    %2750 = vmatprep.subr.bf16.mxu0 %v2085
    %2751 = vmatpush1.bf16.msra.mxu0 %v2084
    %2752 = vmatprep.subr.bf16.mxu0 %v2089
    %2753 = vmatpush1.bf16.msra.mxu0 %v2088
    %2754 = vmatprep.subr.bf16.mxu0 0
    %2755 = vmatpush1.bf16.msra.mxu0 0
    %2756 = vmatprep.subr.bf16.mxu0 0
    %2757 = vmatpush1.bf16.msra.mxu0 0
    %2758 = vmatprep.subr.bf16.mxu0 0
    %2759 = vmatpush1.bf16.msra.mxu0 0
    %2760 = vmatprep.subr.bf16.mxu0 0
    %2761 = vmatpush1.bf16.msra.mxu0 0
    %2762 = vmatprep.subr.bf16.mxu0 0
    %2763 = vmatpush1.bf16.msra.mxu0 0
    %2764 = vmatprep.subr.bf16.mxu0 0
    %2765 = vmatpush1.bf16.msra.mxu0 0
    %2766 = vmatprep.subr.bf16.mxu0 0
    %2767 = vmatpush1.bf16.msra.mxu0 0
    %2768 = vmatprep.subr.bf16.mxu0 0
    %2769 = vmatpush1.bf16.msra.mxu0 0
    %2770 = vmatprep.mubr.bf16.mxu0 0
    %2771 = vmatmul.mubr.bf16.gmra.mrb[0].mxu0 %v2696
    %v2772 = vpop.f32.mrb[0].mxu0
    %v2773 = vadd.f32 0.0, %v2772
    %v2774 = vpop.f32.mrb[0].mxu0
    %v2775 = vadd.f32 0.0, %v2774
    %v2776 = vpop.f32.mrb[0].mxu0
    %v2777 = vpop.f32.mrb[0].mxu0
    %2778 = vdwg.mxu0
    %v2779 = vadd.f32 %v2692, %v2732
    %v2780 = vadd.f32 %v2693, %v2734
    %v2781 = vadd.f32 %v2694, %v2773
    %v2782 = vadd.f32 %v2695, %v2775
    %v2783 = vxor.u32 %v2779, 2147483648
    %v2784 = vmul.f32 %v2783, 1.442695
    %v2785 = vpow.pop %v2784
    %v2786 = vadd.f32 %v2785, 1.0
    %v2787 = vrcp.pop %v2786
    %v2788 = vmul.f32 1.0, %v2787
    %v2789 = vxor.u32 %v2780, 2147483648
    %v2790 = vmul.f32 %v2789, 1.442695
    %v2791 = vpow.pop %v2790
    %v2792 = vadd.f32 %v2791, 1.0
    %v2793 = vrcp.pop %v2792
    %v2794 = vmul.f32 1.0, %v2793
    %v2795 = vtanh.pop %v2781
    %v2796 = vxor.u32 %v2782, 2147483648
    %v2797 = vmul.f32 %v2796, 1.442695
    %v2798 = vpow.pop %v2797
    %v2799 = vadd.f32 %v2798, 1.0
    %v2800 = vrcp.pop %v2799
    %v2801 = vmul.f32 1.0, %v2800
    %v2802 = vmul.f32 %v2794, %v2689
    %v2803 = vmul.f32 %v2788, %v2795
    %v2804 = vadd.f32 %v2802, %v2803
    %v2805 = vtanh.pop %v2804
    %v2806 = vmul.f32 %v2801, %v2805
    %v2807 = vld [vmem:[%s1284] sm:$0xff]
    %v2808 = vld [vmem:[%s1284 + $0x8] sm:$0xff]
    %v2809 = vld [vmem:[%s1284 + $0x10] sm:$0xff]
    %v2810 = vld [vmem:[%s1284 + $0x18] sm:$0xff]
    %v2811 = vpack.c.bf16 %v2806, %v2806
    %2812 = vmatprep.subr.bf16.mxu0 %v2059
    %2813 = vmatpush1.bf16.msra.mxu0 %v2058
    %2814 = vmatprep.subr.bf16.mxu0 %v2063
    %2815 = vmatpush1.bf16.msra.mxu0 %v2062
    %2816 = vmatprep.subr.bf16.mxu0 %v2067
    %2817 = vmatpush1.bf16.msra.mxu0 %v2066
    %2818 = vmatprep.subr.bf16.mxu0 %v2071
    %2819 = vmatpush1.bf16.msra.mxu0 %v2070
    %2820 = vmatprep.subr.bf16.mxu0 %v2075
    %2821 = vmatpush1.bf16.msra.mxu0 %v2074
    %2822 = vmatprep.subr.bf16.mxu0 %v2079
    %2823 = vmatpush1.bf16.msra.mxu0 %v2078
    %2824 = vmatprep.subr.bf16.mxu0 %v2083
    %2825 = vmatpush1.bf16.msra.mxu0 %v2082
    %2826 = vmatprep.subr.bf16.mxu0 %v2087
    %2827 = vmatpush1.bf16.msra.mxu0 %v2086
    %2828 = vmatprep.subr.bf16.mxu0 0
    %2829 = vmatpush1.bf16.msra.mxu0 0
    %2830 = vmatprep.subr.bf16.mxu0 0
    %2831 = vmatpush1.bf16.msra.mxu0 0
    %2832 = vmatprep.subr.bf16.mxu0 0
    %2833 = vmatpush1.bf16.msra.mxu0 0
    %2834 = vmatprep.subr.bf16.mxu0 0
    %2835 = vmatpush1.bf16.msra.mxu0 0
    %2836 = vmatprep.subr.bf16.mxu0 0
    %2837 = vmatpush1.bf16.msra.mxu0 0
    %2838 = vmatprep.subr.bf16.mxu0 0
    %2839 = vmatpush1.bf16.msra.mxu0 0
    %2840 = vmatprep.subr.bf16.mxu0 0
    %2841 = vmatpush1.bf16.msra.mxu0 0
    %2842 = vmatprep.subr.bf16.mxu0 0
    %2843 = vmatpush1.bf16.msra.mxu0 0
    %2844 = vmatprep.mubr.bf16.mxu0 0
    %2845 = vmatmul.mubr.bf16.gmra.mrb[0].mxu0 %v2811
    %v2846 = vpop.f32.mrb[0].mxu0
    %v2847 = vadd.f32 0.0, %v2846
    %v2848 = vpop.f32.mrb[0].mxu0
    %v2849 = vadd.f32 0.0, %v2848
    %v2850 = vpop.f32.mrb[0].mxu0
    %v2851 = vpop.f32.mrb[0].mxu0
    %2852 = vdwg.mxu0
    %2853 = vmatprep.subr.bf16.mxu0 %v2061
    %2854 = vmatpush1.bf16.msra.mxu0 %v2060
    %2855 = vmatprep.subr.bf16.mxu0 %v2065
    %2856 = vmatpush1.bf16.msra.mxu0 %v2064
    %2857 = vmatprep.subr.bf16.mxu0 %v2069
    %2858 = vmatpush1.bf16.msra.mxu0 %v2068
    %2859 = vmatprep.subr.bf16.mxu0 %v2073
    %2860 = vmatpush1.bf16.msra.mxu0 %v2072
    %2861 = vmatprep.subr.bf16.mxu0 %v2077
    %2862 = vmatpush1.bf16.msra.mxu0 %v2076
    %2863 = vmatprep.subr.bf16.mxu0 %v2081
    %2864 = vmatpush1.bf16.msra.mxu0 %v2080
    %2865 = vmatprep.subr.bf16.mxu0 %v2085
    %2866 = vmatpush1.bf16.msra.mxu0 %v2084
    %2867 = vmatprep.subr.bf16.mxu0 %v2089
    %2868 = vmatpush1.bf16.msra.mxu0 %v2088
    %2869 = vmatprep.subr.bf16.mxu0 0
    %2870 = vmatpush1.bf16.msra.mxu0 0
    %2871 = vmatprep.subr.bf16.mxu0 0
    %2872 = vmatpush1.bf16.msra.mxu0 0
    %2873 = vmatprep.subr.bf16.mxu0 0
    %2874 = vmatpush1.bf16.msra.mxu0 0
    %2875 = vmatprep.subr.bf16.mxu0 0
    %2876 = vmatpush1.bf16.msra.mxu0 0
    %2877 = vmatprep.subr.bf16.mxu0 0
    %2878 = vmatpush1.bf16.msra.mxu0 0
    %2879 = vmatprep.subr.bf16.mxu0 0
    %2880 = vmatpush1.bf16.msra.mxu0 0
    %2881 = vmatprep.subr.bf16.mxu0 0
    %2882 = vmatpush1.bf16.msra.mxu0 0
    %2883 = vmatprep.subr.bf16.mxu0 0
    %2884 = vmatpush1.bf16.msra.mxu0 0
    %2885 = vmatprep.mubr.bf16.mxu0 0
    %2886 = vmatmul.mubr.bf16.gmra.mrb[0].mxu0 %v2811
    %v2887 = vpop.f32.mrb[0].mxu0
    %v2888 = vadd.f32 0.0, %v2887
    %v2889 = vpop.f32.mrb[0].mxu0
    %v2890 = vadd.f32 0.0, %v2889
    %v2891 = vpop.f32.mrb[0].mxu0
    %v2892 = vpop.f32.mrb[0].mxu0
    %2893 = vdwg.mxu0
    %v2894 = vadd.f32 %v2807, %v2847
    %v2895 = vadd.f32 %v2808, %v2849
    %v2896 = vadd.f32 %v2809, %v2888
    %v2897 = vadd.f32 %v2810, %v2890
    %v2898 = vxor.u32 %v2894, 2147483648
    %v2899 = vmul.f32 %v2898, 1.442695
    %v2900 = vpow.pop %v2899
    %v2901 = vadd.f32 %v2900, 1.0
    %v2902 = vrcp.pop %v2901
    %v2903 = vmul.f32 1.0, %v2902
    %v2904 = vxor.u32 %v2895, 2147483648
    %v2905 = vmul.f32 %v2904, 1.442695
    %v2906 = vpow.pop %v2905
    %v2907 = vadd.f32 %v2906, 1.0
    %v2908 = vrcp.pop %v2907
    %v2909 = vmul.f32 1.0, %v2908
    %v2910 = vtanh.pop %v2896
    %v2911 = vxor.u32 %v2897, 2147483648
    %v2912 = vmul.f32 %v2911, 1.442695
    %v2913 = vpow.pop %v2912
    %v2914 = vadd.f32 %v2913, 1.0
    %v2915 = vrcp.pop %v2914
    %v2916 = vmul.f32 1.0, %v2915
    %v2917 = vmul.f32 %v2909, %v2804
    %v2918 = vmul.f32 %v2903, %v2910
    %v2919 = vadd.f32 %v2917, %v2918
    %v2920 = vtanh.pop %v2919
    %v2921 = vmul.f32 %v2916, %v2920
    %v2922 = vld [vmem:[%s1404] sm:$0xff]
    %v2923 = vld [vmem:[%s1404 + $0x8] sm:$0xff]
    %v2924 = vld [vmem:[%s1404 + $0x10] sm:$0xff]
    %v2925 = vld [vmem:[%s1404 + $0x18] sm:$0xff]
    %v2926 = vpack.c.bf16 %v2921, %v2921
    %2927 = vmatprep.subr.bf16.mxu0 %v2059
    %2928 = vmatpush1.bf16.msra.mxu0 %v2058
    %2929 = vmatprep.subr.bf16.mxu0 %v2063
    %2930 = vmatpush1.bf16.msra.mxu0 %v2062
    %2931 = vmatprep.subr.bf16.mxu0 %v2067
    %2932 = vmatpush1.bf16.msra.mxu0 %v2066
    %2933 = vmatprep.subr.bf16.mxu0 %v2071
    %2934 = vmatpush1.bf16.msra.mxu0 %v2070
    %2935 = vmatprep.subr.bf16.mxu0 %v2075
    %2936 = vmatpush1.bf16.msra.mxu0 %v2074
    %2937 = vmatprep.subr.bf16.mxu0 %v2079
    %2938 = vmatpush1.bf16.msra.mxu0 %v2078
    %2939 = vmatprep.subr.bf16.mxu0 %v2083
    %2940 = vmatpush1.bf16.msra.mxu0 %v2082
    %2941 = vmatprep.subr.bf16.mxu0 %v2087
    %2942 = vmatpush1.bf16.msra.mxu0 %v2086
    %2943 = vmatprep.subr.bf16.mxu0 0
    %2944 = vmatpush1.bf16.msra.mxu0 0
    %2945 = vmatprep.subr.bf16.mxu0 0
    %2946 = vmatpush1.bf16.msra.mxu0 0
    %2947 = vmatprep.subr.bf16.mxu0 0
    %2948 = vmatpush1.bf16.msra.mxu0 0
    %2949 = vmatprep.subr.bf16.mxu0 0
    %2950 = vmatpush1.bf16.msra.mxu0 0
    %2951 = vmatprep.subr.bf16.mxu0 0
    %2952 = vmatpush1.bf16.msra.mxu0 0
    %2953 = vmatprep.subr.bf16.mxu0 0
    %2954 = vmatpush1.bf16.msra.mxu0 0
    %2955 = vmatprep.subr.bf16.mxu0 0
    %2956 = vmatpush1.bf16.msra.mxu0 0
    %2957 = vmatprep.subr.bf16.mxu0 0
    %2958 = vmatpush1.bf16.msra.mxu0 0
    %2959 = vmatprep.mubr.bf16.mxu0 0
    %2960 = vmatmul.mubr.bf16.gmra.mrb[0].mxu0 %v2926
    %v2961 = vpop.f32.mrb[0].mxu0
    %v2962 = vadd.f32 0.0, %v2961
    %v2963 = vpop.f32.mrb[0].mxu0
    %v2964 = vadd.f32 0.0, %v2963
    %v2965 = vpop.f32.mrb[0].mxu0
    %v2966 = vpop.f32.mrb[0].mxu0
    %2967 = vdwg.mxu0
    %2968 = vmatprep.subr.bf16.mxu0 %v2061
    %2969 = vmatpush1.bf16.msra.mxu0 %v2060
    %2970 = vmatprep.subr.bf16.mxu0 %v2065
    %2971 = vmatpush1.bf16.msra.mxu0 %v2064
    %2972 = vmatprep.subr.bf16.mxu0 %v2069
    %2973 = vmatpush1.bf16.msra.mxu0 %v2068
    %2974 = vmatprep.subr.bf16.mxu0 %v2073
    %2975 = vmatpush1.bf16.msra.mxu0 %v2072
    %2976 = vmatprep.subr.bf16.mxu0 %v2077
    %2977 = vmatpush1.bf16.msra.mxu0 %v2076
    %2978 = vmatprep.subr.bf16.mxu0 %v2081
    %2979 = vmatpush1.bf16.msra.mxu0 %v2080
    %2980 = vmatprep.subr.bf16.mxu0 %v2085
    %2981 = vmatpush1.bf16.msra.mxu0 %v2084
    %2982 = vmatprep.subr.bf16.mxu0 %v2089
    %2983 = vmatpush1.bf16.msra.mxu0 %v2088
    %2984 = vmatprep.subr.bf16.mxu0 0
    %2985 = vmatpush1.bf16.msra.mxu0 0
    %2986 = vmatprep.subr.bf16.mxu0 0
    %2987 = vmatpush1.bf16.msra.mxu0 0
    %2988 = vmatprep.subr.bf16.mxu0 0
    %2989 = vmatpush1.bf16.msra.mxu0 0
    %2990 = vmatprep.subr.bf16.mxu0 0
    %2991 = vmatpush1.bf16.msra.mxu0 0
    %2992 = vmatprep.subr.bf16.mxu0 0
    %2993 = vmatpush1.bf16.msra.mxu0 0
    %2994 = vmatprep.subr.bf16.mxu0 0
    %2995 = vmatpush1.bf16.msra.mxu0 0
    %2996 = vmatprep.subr.bf16.mxu0 0
    %2997 = vmatpush1.bf16.msra.mxu0 0
    %2998 = vmatprep.subr.bf16.mxu0 0
    %2999 = vmatpush1.bf16.msra.mxu0 0
    %3000 = vmatprep.mubr.bf16.mxu0 0
    %3001 = vmatmul.mubr.bf16.gmra.mrb[0].mxu0 %v2926
    %v3002 = vpop.f32.mrb[0].mxu0
    %v3003 = vadd.f32 0.0, %v3002
    %v3004 = vpop.f32.mrb[0].mxu0
    %v3005 = vadd.f32 0.0, %v3004
    %v3006 = vpop.f32.mrb[0].mxu0
    %v3007 = vpop.f32.mrb[0].mxu0
    %3008 = vdwg.mxu0
    %v3009 = vadd.f32 %v2922, %v2962
    %v3010 = vadd.f32 %v2923, %v2964
    %v3011 = vadd.f32 %v2924, %v3003
    %v3012 = vadd.f32 %v2925, %v3005
    %v3013 = vxor.u32 %v3009, 2147483648
    %v3014 = vmul.f32 %v3013, 1.442695
    %v3015 = vpow.pop %v3014
    %v3016 = vadd.f32 %v3015, 1.0
    %v3017 = vrcp.pop %v3016
    %v3018 = vmul.f32 1.0, %v3017
    %v3019 = vxor.u32 %v3010, 2147483648
    %v3020 = vmul.f32 %v3019, 1.442695
    %v3021 = vpow.pop %v3020
    %v3022 = vadd.f32 %v3021, 1.0
    %v3023 = vrcp.pop %v3022
    %v3024 = vmul.f32 1.0, %v3023
    %v3025 = vtanh.pop %v3011
    %v3026 = vxor.u32 %v3012, 2147483648
    %v3027 = vmul.f32 %v3026, 1.442695
    %v3028 = vpow.pop %v3027
    %v3029 = vadd.f32 %v3028, 1.0
    %v3030 = vrcp.pop %v3029
    %v3031 = vmul.f32 1.0, %v3030
    %v3032 = vmul.f32 %v3024, %v2919
    %v3033 = vmul.f32 %v3018, %v3025
    %v3034 = vadd.f32 %v3032, %v3033
    %v3035 = vtanh.pop %v3034
    %v3036 = vmul.f32 %v3031, %v3035
    %v3037 = vpack.c.bf16 %v3036, %v3036
    %v3038 = vld [vmem:[#allocation10] sm:$0xff]
    %v3039 = vld [vmem:[#allocation10 + $0x8] sm:$0xff]
    %v3040 = vld [vmem:[#allocation10 + $0x10] sm:$0xff]
    %v3041 = vld [vmem:[#allocation10 + $0x18] sm:$0xff]
    %v3042 = vld [vmem:[#allocation10 + $0x20] sm:$0xff]
    %v3043 = vld [vmem:[#allocation10 + $0x28] sm:$0xff]
    %v3044 = vld [vmem:[#allocation10 + $0x30] sm:$0xff]
    %v3045 = vld [vmem:[#allocation10 + $0x38] sm:$0xff]
    %v3046 = vld [vmem:[#allocation10 + $0x40] sm:$0xff]
    %v3047 = vld [vmem:[#allocation10 + $0x48] sm:$0xff]
    %v3048 = vld [vmem:[#allocation10 + $0x50] sm:$0xff]
    %v3049 = vld [vmem:[#allocation10 + $0x58] sm:$0xff]
    %v3050 = vld [vmem:[#allocation10 + $0x60] sm:$0xff]
    %v3051 = vld [vmem:[#allocation10 + $0x68] sm:$0xff]
    %v3052 = vld [vmem:[#allocation10 + $0x70] sm:$0xff]
    %v3053 = vld [vmem:[#allocation10 + $0x78] sm:$0xff]
    %v3054 = vld [vmem:[#allocation10 + $0x80] sm:$0xff]
    %v3055 = vld [vmem:[#allocation10 + $0x88] sm:$0xff]
    %v3056 = vld [vmem:[#allocation10 + $0x90] sm:$0xff]
    %v3057 = vld [vmem:[#allocation10 + $0x98] sm:$0xff]
    %v3058 = vld [vmem:[#allocation10 + $0xa0] sm:$0xff]
    %v3059 = vld [vmem:[#allocation10 + $0xa8] sm:$0xff]
    %v3060 = vld [vmem:[#allocation10 + $0xb0] sm:$0xff]
    %v3061 = vld [vmem:[#allocation10 + $0xb8] sm:$0xff]
    %v3062 = vld [vmem:[#allocation10 + $0xc0] sm:$0xff]
    %v3063 = vld [vmem:[#allocation10 + $0xc8] sm:$0xff]
    %v3064 = vld [vmem:[#allocation10 + $0xd0] sm:$0xff]
    %v3065 = vld [vmem:[#allocation10 + $0xd8] sm:$0xff]
    %v3066 = vld [vmem:[#allocation10 + $0xe0] sm:$0xff]
    %v3067 = vld [vmem:[#allocation10 + $0xe8] sm:$0xff]
    %v3068 = vld [vmem:[#allocation10 + $0xf0] sm:$0xff]
    %v3069 = vld [vmem:[#allocation10 + $0xf8] sm:$0xff]
    %v3070 = vld [vmem:[#allocation10 + $0x100] sm:$0xff]
    %v3071 = vld [vmem:[#allocation10 + $0x108] sm:$0xff]
    %v3072 = vld [vmem:[#allocation10 + $0x110] sm:$0xff]
    %v3073 = vld [vmem:[#allocation10 + $0x118] sm:$0xff]
    %v3074 = vld [vmem:[#allocation10 + $0x120] sm:$0xff]
    %v3075 = vld [vmem:[#allocation10 + $0x128] sm:$0xff]
    %v3076 = vld [vmem:[#allocation10 + $0x130] sm:$0xff]
    %v3077 = vld [vmem:[#allocation10 + $0x138] sm:$0xff]
    %v3078 = vld [vmem:[#allocation10 + $0x140] sm:$0xff]
    %v3079 = vld [vmem:[#allocation10 + $0x148] sm:$0xff]
    %v3080 = vld [vmem:[#allocation10 + $0x150] sm:$0xff]
    %v3081 = vld [vmem:[#allocation10 + $0x158] sm:$0xff]
    %v3082 = vld [vmem:[#allocation10 + $0x160] sm:$0xff]
    %v3083 = vld [vmem:[#allocation10 + $0x168] sm:$0xff]
    %v3084 = vld [vmem:[#allocation10 + $0x170] sm:$0xff]
    %v3085 = vld [vmem:[#allocation10 + $0x178] sm:$0xff]
    %v3086 = vld [vmem:[#allocation10 + $0x180] sm:$0xff]
    %v3087 = vld [vmem:[#allocation10 + $0x188] sm:$0xff]
    %v3088 = vld [vmem:[#allocation10 + $0x190] sm:$0xff]
    %v3089 = vld [vmem:[#allocation10 + $0x198] sm:$0xff]
    %v3090 = vld [vmem:[#allocation10 + $0x1a0] sm:$0xff]
    %v3091 = vld [vmem:[#allocation10 + $0x1a8] sm:$0xff]
    %v3092 = vld [vmem:[#allocation10 + $0x1b0] sm:$0xff]
    %v3093 = vld [vmem:[#allocation10 + $0x1b8] sm:$0xff]
    %v3094 = vld [vmem:[#allocation10 + $0x1c0] sm:$0xff]
    %v3095 = vld [vmem:[#allocation10 + $0x1c8] sm:$0xff]
    %v3096 = vld [vmem:[#allocation10 + $0x1d0] sm:$0xff]
    %v3097 = vld [vmem:[#allocation10 + $0x1d8] sm:$0xff]
    %v3098 = vld [vmem:[#allocation10 + $0x1e0] sm:$0xff]
    %v3099 = vld [vmem:[#allocation10 + $0x1e8] sm:$0xff]
    %v3100 = vld [vmem:[#allocation10 + $0x1f0] sm:$0xff]
    %v3101 = vld [vmem:[#allocation10 + $0x1f8] sm:$0xff]
    %v3102 = vld [vmem:[%s8] sm:$0xff]
    %v3104 = vlaneseq
    %v3105 = vshrl.u32 %v3104, 7
    %v3106 = vsub.s32 0, %v3105
    %v3107 = vrot.slane %v3102, %v3106
    %v3108 = vlaneseq
    %v3109 = vshrl.u32 %v3108, 7
    %v3110 = vsub.s32 1, %v3109
    %v3111 = vrot.slane %v3102, %v3110
    %v3112 = vlaneseq
    %v3113 = vshrl.u32 %v3112, 7
    %v3114 = vsub.s32 2, %v3113
    %v3115 = vrot.slane %v3102, %v3114
    %v3116 = vlaneseq
    %v3117 = vshrl.u32 %v3116, 7
    %v3118 = vsub.s32 3, %v3117
    %v3119 = vrot.slane %v3102, %v3118
    %v3120 = vlaneseq
    %v3121 = vshrl.u32 %v3120, 7
    %v3122 = vsub.s32 4, %v3121
    %v3123 = vrot.slane %v3102, %v3122
    %v3124 = vlaneseq
    %v3125 = vshrl.u32 %v3124, 7
    %v3126 = vsub.s32 5, %v3125
    %v3127 = vrot.slane %v3102, %v3126
    %v3128 = vlaneseq
    %v3129 = vshrl.u32 %v3128, 7
    %v3130 = vsub.s32 6, %v3129
    %v3131 = vrot.slane %v3102, %v3130
    %v3132 = vlaneseq
    %v3133 = vshrl.u32 %v3132, 7
    %v3134 = vsub.s32 7, %v3133
    %v3135 = vrot.slane %v3102, %v3134
    %v3208 = vunpack.c.l.b16 %v3038
    %v3209 = vunpack.c.h.b16 %v3038
    %v3210 = vunpack.c.l.b16 %v3039
    %v3211 = vunpack.c.h.b16 %v3039
    %v3212 = vunpack.c.l.b16 %v3040
    %v3213 = vunpack.c.h.b16 %v3040
    %v3214 = vunpack.c.l.b16 %v3041
    %v3215 = vunpack.c.h.b16 %v3041
    %v3216 = vunpack.c.l.b16 %v3042
    %v3217 = vunpack.c.h.b16 %v3042
    %v3218 = vunpack.c.l.b16 %v3043
    %v3219 = vunpack.c.h.b16 %v3043
    %v3220 = vunpack.c.l.b16 %v3044
    %v3221 = vunpack.c.h.b16 %v3044
    %v3222 = vunpack.c.l.b16 %v3045
    %v3223 = vunpack.c.h.b16 %v3045
    %v3224 = vunpack.c.l.b16 %v3046
    %v3225 = vunpack.c.h.b16 %v3046
    %v3226 = vunpack.c.l.b16 %v3047
    %v3227 = vunpack.c.h.b16 %v3047
    %v3228 = vunpack.c.l.b16 %v3048
    %v3229 = vunpack.c.h.b16 %v3048
    %v3230 = vunpack.c.l.b16 %v3049
    %v3231 = vunpack.c.h.b16 %v3049
    %v3232 = vunpack.c.l.b16 %v3050
    %v3233 = vunpack.c.h.b16 %v3050
    %v3234 = vunpack.c.l.b16 %v3051
    %v3235 = vunpack.c.h.b16 %v3051
    %v3236 = vunpack.c.l.b16 %v3052
    %v3237 = vunpack.c.h.b16 %v3052
    %v3238 = vunpack.c.l.b16 %v3053
    %v3239 = vunpack.c.h.b16 %v3053
    %v3240 = vunpack.c.l.b16 %v3054
    %v3241 = vunpack.c.h.b16 %v3054
    %v3242 = vunpack.c.l.b16 %v3055
    %v3243 = vunpack.c.h.b16 %v3055
    %v3244 = vunpack.c.l.b16 %v3056
    %v3245 = vunpack.c.h.b16 %v3056
    %v3246 = vunpack.c.l.b16 %v3057
    %v3247 = vunpack.c.h.b16 %v3057
    %v3248 = vunpack.c.l.b16 %v3058
    %v3249 = vunpack.c.h.b16 %v3058
    %v3250 = vunpack.c.l.b16 %v3059
    %v3251 = vunpack.c.h.b16 %v3059
    %v3252 = vunpack.c.l.b16 %v3060
    %v3253 = vunpack.c.h.b16 %v3060
    %v3254 = vunpack.c.l.b16 %v3061
    %v3255 = vunpack.c.h.b16 %v3061
    %v3256 = vunpack.c.l.b16 %v3062
    %v3257 = vunpack.c.h.b16 %v3062
    %v3258 = vunpack.c.l.b16 %v3063
    %v3259 = vunpack.c.h.b16 %v3063
    %v3260 = vunpack.c.l.b16 %v3064
    %v3261 = vunpack.c.h.b16 %v3064
    %v3262 = vunpack.c.l.b16 %v3065
    %v3263 = vunpack.c.h.b16 %v3065
    %v3264 = vunpack.c.l.b16 %v3066
    %v3265 = vunpack.c.h.b16 %v3066
    %v3266 = vunpack.c.l.b16 %v3067
    %v3267 = vunpack.c.h.b16 %v3067
    %v3268 = vunpack.c.l.b16 %v3068
    %v3269 = vunpack.c.h.b16 %v3068
    %v3270 = vunpack.c.l.b16 %v3069
    %v3271 = vunpack.c.h.b16 %v3069
    %v3272 = vunpack.c.l.b16 %v3070
    %v3273 = vunpack.c.h.b16 %v3070
    %v3274 = vunpack.c.l.b16 %v3071
    %v3275 = vunpack.c.h.b16 %v3071
    %v3276 = vunpack.c.l.b16 %v3072
    %v3277 = vunpack.c.h.b16 %v3072
    %v3278 = vunpack.c.l.b16 %v3073
    %v3279 = vunpack.c.h.b16 %v3073
    %v3280 = vunpack.c.l.b16 %v3074
    %v3281 = vunpack.c.h.b16 %v3074
    %v3282 = vunpack.c.l.b16 %v3075
    %v3283 = vunpack.c.h.b16 %v3075
    %v3284 = vunpack.c.l.b16 %v3076
    %v3285 = vunpack.c.h.b16 %v3076
    %v3286 = vunpack.c.l.b16 %v3077
    %v3287 = vunpack.c.h.b16 %v3077
    %v3288 = vunpack.c.l.b16 %v3078
    %v3289 = vunpack.c.h.b16 %v3078
    %v3290 = vunpack.c.l.b16 %v3079
    %v3291 = vunpack.c.h.b16 %v3079
    %v3292 = vunpack.c.l.b16 %v3080
    %v3293 = vunpack.c.h.b16 %v3080
    %v3294 = vunpack.c.l.b16 %v3081
    %v3295 = vunpack.c.h.b16 %v3081
    %v3296 = vunpack.c.l.b16 %v3082
    %v3297 = vunpack.c.h.b16 %v3082
    %v3298 = vunpack.c.l.b16 %v3083
    %v3299 = vunpack.c.h.b16 %v3083
    %v3300 = vunpack.c.l.b16 %v3084
    %v3301 = vunpack.c.h.b16 %v3084
    %v3302 = vunpack.c.l.b16 %v3085
    %v3303 = vunpack.c.h.b16 %v3085
    %v3304 = vunpack.c.l.b16 %v3086
    %v3305 = vunpack.c.h.b16 %v3086
    %v3306 = vunpack.c.l.b16 %v3087
    %v3307 = vunpack.c.h.b16 %v3087
    %v3308 = vunpack.c.l.b16 %v3088
    %v3309 = vunpack.c.h.b16 %v3088
    %v3310 = vunpack.c.l.b16 %v3089
    %v3311 = vunpack.c.h.b16 %v3089
    %v3312 = vunpack.c.l.b16 %v3090
    %v3313 = vunpack.c.h.b16 %v3090
    %v3314 = vunpack.c.l.b16 %v3091
    %v3315 = vunpack.c.h.b16 %v3091
    %v3316 = vunpack.c.l.b16 %v3092
    %v3317 = vunpack.c.h.b16 %v3092
    %v3318 = vunpack.c.l.b16 %v3093
    %v3319 = vunpack.c.h.b16 %v3093
    %v3320 = vunpack.c.l.b16 %v3094
    %v3321 = vunpack.c.h.b16 %v3094
    %v3322 = vunpack.c.l.b16 %v3095
    %v3323 = vunpack.c.h.b16 %v3095
    %v3324 = vunpack.c.l.b16 %v3096
    %v3325 = vunpack.c.h.b16 %v3096
    %v3326 = vunpack.c.l.b16 %v3097
    %v3327 = vunpack.c.h.b16 %v3097
    %v3328 = vunpack.c.l.b16 %v3098
    %v3329 = vunpack.c.h.b16 %v3098
    %v3330 = vunpack.c.l.b16 %v3099
    %v3331 = vunpack.c.h.b16 %v3099
    %v3332 = vunpack.c.l.b16 %v3100
    %v3333 = vunpack.c.h.b16 %v3100
    %v3334 = vunpack.c.l.b16 %v3101
    %v3335 = vunpack.c.h.b16 %v3101
    %v3336 = vpack.c.b16 %v3216, %v3208
    %v3337 = vpack.c.b16 %v3217, %v3209
    %v3338 = vpack.c.b16 %v3218, %v3210
    %v3339 = vpack.c.b16 %v3219, %v3211
    %v3340 = vpack.c.b16 %v3220, %v3212
    %v3341 = vpack.c.b16 %v3221, %v3213
    %v3342 = vpack.c.b16 %v3222, %v3214
    %v3343 = vpack.c.b16 %v3223, %v3215
    %v3344 = vpack.c.b16 %v3232, %v3224
    %v3345 = vpack.c.b16 %v3233, %v3225
    %v3346 = vpack.c.b16 %v3234, %v3226
    %v3347 = vpack.c.b16 %v3235, %v3227
    %v3348 = vpack.c.b16 %v3236, %v3228
    %v3349 = vpack.c.b16 %v3237, %v3229
    %v3350 = vpack.c.b16 %v3238, %v3230
    %v3351 = vpack.c.b16 %v3239, %v3231
    %v3352 = vpack.c.b16 %v3248, %v3240
    %v3353 = vpack.c.b16 %v3249, %v3241
    %v3354 = vpack.c.b16 %v3250, %v3242
    %v3355 = vpack.c.b16 %v3251, %v3243
    %v3356 = vpack.c.b16 %v3252, %v3244
    %v3357 = vpack.c.b16 %v3253, %v3245
    %v3358 = vpack.c.b16 %v3254, %v3246
    %v3359 = vpack.c.b16 %v3255, %v3247
    %v3360 = vpack.c.b16 %v3264, %v3256
    %v3361 = vpack.c.b16 %v3265, %v3257
    %v3362 = vpack.c.b16 %v3266, %v3258
    %v3363 = vpack.c.b16 %v3267, %v3259
    %v3364 = vpack.c.b16 %v3268, %v3260
    %v3365 = vpack.c.b16 %v3269, %v3261
    %v3366 = vpack.c.b16 %v3270, %v3262
    %v3367 = vpack.c.b16 %v3271, %v3263
    %v3368 = vpack.c.b16 %v3280, %v3272
    %v3369 = vpack.c.b16 %v3281, %v3273
    %v3370 = vpack.c.b16 %v3282, %v3274
    %v3371 = vpack.c.b16 %v3283, %v3275
    %v3372 = vpack.c.b16 %v3284, %v3276
    %v3373 = vpack.c.b16 %v3285, %v3277
    %v3374 = vpack.c.b16 %v3286, %v3278
    %v3375 = vpack.c.b16 %v3287, %v3279
    %v3376 = vpack.c.b16 %v3296, %v3288
    %v3377 = vpack.c.b16 %v3297, %v3289
    %v3378 = vpack.c.b16 %v3298, %v3290
    %v3379 = vpack.c.b16 %v3299, %v3291
    %v3380 = vpack.c.b16 %v3300, %v3292
    %v3381 = vpack.c.b16 %v3301, %v3293
    %v3382 = vpack.c.b16 %v3302, %v3294
    %v3383 = vpack.c.b16 %v3303, %v3295
    %v3384 = vpack.c.b16 %v3312, %v3304
    %v3385 = vpack.c.b16 %v3313, %v3305
    %v3386 = vpack.c.b16 %v3314, %v3306
    %v3387 = vpack.c.b16 %v3315, %v3307
    %v3388 = vpack.c.b16 %v3316, %v3308
    %v3389 = vpack.c.b16 %v3317, %v3309
    %v3390 = vpack.c.b16 %v3318, %v3310
    %v3391 = vpack.c.b16 %v3319, %v3311
    %v3392 = vpack.c.b16 %v3328, %v3320
    %v3393 = vpack.c.b16 %v3329, %v3321
    %v3394 = vpack.c.b16 %v3330, %v3322
    %v3395 = vpack.c.b16 %v3331, %v3323
    %v3396 = vpack.c.b16 %v3332, %v3324
    %v3397 = vpack.c.b16 %v3333, %v3325
    %v3398 = vpack.c.b16 %v3334, %v3326
    %v3399 = vpack.c.b16 %v3335, %v3327
    %3464 = vmatprep.subr.bf16.mxu0 %v3337
    %3465 = vmatpush1.bf16.msra.mxu0 %v3336
    %3466 = vmatprep.subr.bf16.mxu0 %v3345
    %3467 = vmatpush1.bf16.msra.mxu0 %v3344
    %3468 = vmatprep.subr.bf16.mxu0 %v3353
    %3469 = vmatpush1.bf16.msra.mxu0 %v3352
    %3470 = vmatprep.subr.bf16.mxu0 %v3361
    %3471 = vmatpush1.bf16.msra.mxu0 %v3360
    %3472 = vmatprep.subr.bf16.mxu0 %v3369
    %3473 = vmatpush1.bf16.msra.mxu0 %v3368
    %3474 = vmatprep.subr.bf16.mxu0 %v3377
    %3475 = vmatpush1.bf16.msra.mxu0 %v3376
    %3476 = vmatprep.subr.bf16.mxu0 %v3385
    %3477 = vmatpush1.bf16.msra.mxu0 %v3384
    %3478 = vmatprep.subr.bf16.mxu0 %v3393
    %3479 = vmatpush1.bf16.msra.mxu0 %v3392
    %3480 = vmatprep.subr.bf16.mxu0 0
    %3481 = vmatpush1.bf16.msra.mxu0 0
    %3482 = vmatprep.subr.bf16.mxu0 0
    %3483 = vmatpush1.bf16.msra.mxu0 0
    %3484 = vmatprep.subr.bf16.mxu0 0
    %3485 = vmatpush1.bf16.msra.mxu0 0
    %3486 = vmatprep.subr.bf16.mxu0 0
    %3487 = vmatpush1.bf16.msra.mxu0 0
    %3488 = vmatprep.subr.bf16.mxu0 0
    %3489 = vmatpush1.bf16.msra.mxu0 0
    %3490 = vmatprep.subr.bf16.mxu0 0
    %3491 = vmatpush1.bf16.msra.mxu0 0
    %3492 = vmatprep.subr.bf16.mxu0 0
    %3493 = vmatpush1.bf16.msra.mxu0 0
    %3494 = vmatprep.subr.bf16.mxu0 0
    %3495 = vmatpush1.bf16.msra.mxu0 0
    %3496 = vmatprep.mubr.bf16.mxu0 0
    %3497 = vmatmul.mubr.bf16.gmra.mrb[0].mxu0 %v3037
    %v3498 = vpop.f32.mrb[0].mxu0
    %v3499 = vadd.f32 %v3107, %v3498
    %v3500 = vpop.f32.mrb[0].mxu0
    %v3501 = vadd.f32 %v3111, %v3500
    %v3502 = vpop.f32.mrb[0].mxu0
    %v3503 = vpop.f32.mrb[0].mxu0
    %3504 = vdwg.mxu0
    %3505 = vmatprep.subr.bf16.mxu0 %v3339
    %3506 = vmatpush1.bf16.msra.mxu0 %v3338
    %3507 = vmatprep.subr.bf16.mxu0 %v3347
    %3508 = vmatpush1.bf16.msra.mxu0 %v3346
    %3509 = vmatprep.subr.bf16.mxu0 %v3355
    %3510 = vmatpush1.bf16.msra.mxu0 %v3354
    %3511 = vmatprep.subr.bf16.mxu0 %v3363
    %3512 = vmatpush1.bf16.msra.mxu0 %v3362
    %3513 = vmatprep.subr.bf16.mxu0 %v3371
    %3514 = vmatpush1.bf16.msra.mxu0 %v3370
    %3515 = vmatprep.subr.bf16.mxu0 %v3379
    %3516 = vmatpush1.bf16.msra.mxu0 %v3378
    %3517 = vmatprep.subr.bf16.mxu0 %v3387
    %3518 = vmatpush1.bf16.msra.mxu0 %v3386
    %3519 = vmatprep.subr.bf16.mxu0 %v3395
    %3520 = vmatpush1.bf16.msra.mxu0 %v3394
    %3521 = vmatprep.subr.bf16.mxu0 0
    %3522 = vmatpush1.bf16.msra.mxu0 0
    %3523 = vmatprep.subr.bf16.mxu0 0
    %3524 = vmatpush1.bf16.msra.mxu0 0
    %3525 = vmatprep.subr.bf16.mxu0 0
    %3526 = vmatpush1.bf16.msra.mxu0 0
    %3527 = vmatprep.subr.bf16.mxu0 0
    %3528 = vmatpush1.bf16.msra.mxu0 0
    %3529 = vmatprep.subr.bf16.mxu0 0
    %3530 = vmatpush1.bf16.msra.mxu0 0
    %3531 = vmatprep.subr.bf16.mxu0 0
    %3532 = vmatpush1.bf16.msra.mxu0 0
    %3533 = vmatprep.subr.bf16.mxu0 0
    %3534 = vmatpush1.bf16.msra.mxu0 0
    %3535 = vmatprep.subr.bf16.mxu0 0
    %3536 = vmatpush1.bf16.msra.mxu0 0
    %3537 = vmatprep.mubr.bf16.mxu0 0
    %3538 = vmatmul.mubr.bf16.gmra.mrb[0].mxu0 %v3037
    %v3539 = vpop.f32.mrb[0].mxu0
    %v3540 = vadd.f32 %v3115, %v3539
    %v3541 = vpop.f32.mrb[0].mxu0
    %v3542 = vadd.f32 %v3119, %v3541
    %v3543 = vpop.f32.mrb[0].mxu0
    %v3544 = vpop.f32.mrb[0].mxu0
    %3545 = vdwg.mxu0
    %3546 = vmatprep.subr.bf16.mxu0 %v3341
    %3547 = vmatpush1.bf16.msra.mxu0 %v3340
    %3548 = vmatprep.subr.bf16.mxu0 %v3349
    %3549 = vmatpush1.bf16.msra.mxu0 %v3348
    %3550 = vmatprep.subr.bf16.mxu0 %v3357
    %3551 = vmatpush1.bf16.msra.mxu0 %v3356
    %3552 = vmatprep.subr.bf16.mxu0 %v3365
    %3553 = vmatpush1.bf16.msra.mxu0 %v3364
    %3554 = vmatprep.subr.bf16.mxu0 %v3373
    %3555 = vmatpush1.bf16.msra.mxu0 %v3372
    %3556 = vmatprep.subr.bf16.mxu0 %v3381
    %3557 = vmatpush1.bf16.msra.mxu0 %v3380
    %3558 = vmatprep.subr.bf16.mxu0 %v3389
    %3559 = vmatpush1.bf16.msra.mxu0 %v3388
    %3560 = vmatprep.subr.bf16.mxu0 %v3397
    %3561 = vmatpush1.bf16.msra.mxu0 %v3396
    %3562 = vmatprep.subr.bf16.mxu0 0
    %3563 = vmatpush1.bf16.msra.mxu0 0
    %3564 = vmatprep.subr.bf16.mxu0 0
    %3565 = vmatpush1.bf16.msra.mxu0 0
    %3566 = vmatprep.subr.bf16.mxu0 0
    %3567 = vmatpush1.bf16.msra.mxu0 0
    %3568 = vmatprep.subr.bf16.mxu0 0
    %3569 = vmatpush1.bf16.msra.mxu0 0
    %3570 = vmatprep.subr.bf16.mxu0 0
    %3571 = vmatpush1.bf16.msra.mxu0 0
    %3572 = vmatprep.subr.bf16.mxu0 0
    %3573 = vmatpush1.bf16.msra.mxu0 0
    %3574 = vmatprep.subr.bf16.mxu0 0
    %3575 = vmatpush1.bf16.msra.mxu0 0
    %3576 = vmatprep.subr.bf16.mxu0 0
    %3577 = vmatpush1.bf16.msra.mxu0 0
    %3578 = vmatprep.mubr.bf16.mxu0 0
    %3579 = vmatmul.mubr.bf16.gmra.mrb[0].mxu0 %v3037
    %v3580 = vpop.f32.mrb[0].mxu0
    %v3581 = vadd.f32 %v3123, %v3580
    %v3582 = vpop.f32.mrb[0].mxu0
    %v3583 = vadd.f32 %v3127, %v3582
    %v3584 = vpop.f32.mrb[0].mxu0
    %v3585 = vpop.f32.mrb[0].mxu0
    %3586 = vdwg.mxu0
    %3587 = vmatprep.subr.bf16.mxu0 %v3343
    %3588 = vmatpush1.bf16.msra.mxu0 %v3342
    %3589 = vmatprep.subr.bf16.mxu0 %v3351
    %3590 = vmatpush1.bf16.msra.mxu0 %v3350
    %3591 = vmatprep.subr.bf16.mxu0 %v3359
    %3592 = vmatpush1.bf16.msra.mxu0 %v3358
    %3593 = vmatprep.subr.bf16.mxu0 %v3367
    %3594 = vmatpush1.bf16.msra.mxu0 %v3366
    %3595 = vmatprep.subr.bf16.mxu0 %v3375
    %3596 = vmatpush1.bf16.msra.mxu0 %v3374
    %3597 = vmatprep.subr.bf16.mxu0 %v3383
    %3598 = vmatpush1.bf16.msra.mxu0 %v3382
    %3599 = vmatprep.subr.bf16.mxu0 %v3391
    %3600 = vmatpush1.bf16.msra.mxu0 %v3390
    %3601 = vmatprep.subr.bf16.mxu0 %v3399
    %3602 = vmatpush1.bf16.msra.mxu0 %v3398
    %3603 = vmatprep.subr.bf16.mxu0 0
    %3604 = vmatpush1.bf16.msra.mxu0 0
    %3605 = vmatprep.subr.bf16.mxu0 0
    %3606 = vmatpush1.bf16.msra.mxu0 0
    %3607 = vmatprep.subr.bf16.mxu0 0
    %3608 = vmatpush1.bf16.msra.mxu0 0
    %3609 = vmatprep.subr.bf16.mxu0 0
    %3610 = vmatpush1.bf16.msra.mxu0 0
    %3611 = vmatprep.subr.bf16.mxu0 0
    %3612 = vmatpush1.bf16.msra.mxu0 0
    %3613 = vmatprep.subr.bf16.mxu0 0
    %3614 = vmatpush1.bf16.msra.mxu0 0
    %3615 = vmatprep.subr.bf16.mxu0 0
    %3616 = vmatpush1.bf16.msra.mxu0 0
    %3617 = vmatprep.subr.bf16.mxu0 0
    %3618 = vmatpush1.bf16.msra.mxu0 0
    %3619 = vmatprep.mubr.bf16.mxu0 0
    %3620 = vmatmul.mubr.bf16.gmra.mrb[0].mxu0 %v3037
    %v3621 = vpop.f32.mrb[0].mxu0
    %v3622 = vadd.f32 %v3131, %v3621
    %v3623 = vpop.f32.mrb[0].mxu0
    %v3624 = vadd.f32 %v3135, %v3623
    %v3625 = vpop.f32.mrb[0].mxu0
    %v3626 = vpop.f32.mrb[0].mxu0
    %3627 = vdwg.mxu0
    %v3628 = vmax.f32 %v3499, 0.0
    %v3629 = vmax.f32 %v3501, 0.0
    %v3630 = vmax.f32 %v3540, 0.0
    %v3631 = vmax.f32 %v3542, 0.0
    %v3632 = vmax.f32 %v3581, 0.0
    %v3633 = vmax.f32 %v3583, 0.0
    %v3634 = vmax.f32 %v3622, 0.0
    %v3635 = vmax.f32 %v3624, 0.0
    %v3636 = vpack.c.bf16 %v3628, %v3628
    %v3637 = vpack.c.bf16 %v3629, %v3629
    %v3638 = vpack.c.bf16 %v3630, %v3630
    %v3639 = vpack.c.bf16 %v3631, %v3631
    %v3640 = vpack.c.bf16 %v3632, %v3632
    %v3641 = vpack.c.bf16 %v3633, %v3633
    %v3642 = vpack.c.bf16 %v3634, %v3634
    %v3643 = vpack.c.bf16 %v3635, %v3635
    %v3644 = vld [vmem:[#allocation12] sm:$0xf]
    %v3645 = vld [vmem:[#allocation12 + $0x4] sm:$0xf]
    %v3646 = vld [vmem:[#allocation12 + $0x8] sm:$0xf]
    %v3647 = vld [vmem:[#allocation12 + $0xc] sm:$0xf]
    %v3648 = vld [vmem:[#allocation12 + $0x10] sm:$0xf]
    %v3649 = vld [vmem:[#allocation12 + $0x14] sm:$0xf]
    %v3650 = vld [vmem:[#allocation12 + $0x18] sm:$0xf]
    %v3651 = vld [vmem:[#allocation12 + $0x1c] sm:$0xf]
    %v3652 = vld [vmem:[#allocation12 + $0x20] sm:$0xf]
    %v3653 = vld [vmem:[#allocation12 + $0x24] sm:$0xf]
    %v3654 = vld [vmem:[#allocation12 + $0x28] sm:$0xf]
    %v3655 = vld [vmem:[#allocation12 + $0x2c] sm:$0xf]
    %v3656 = vld [vmem:[#allocation12 + $0x30] sm:$0xf]
    %v3657 = vld [vmem:[#allocation12 + $0x34] sm:$0xf]
    %v3658 = vld [vmem:[#allocation12 + $0x38] sm:$0xf]
    %v3659 = vld [vmem:[#allocation12 + $0x3c] sm:$0xf]
    %v3660 = vld [vmem:[#allocation12 + $0x40] sm:$0xf]
    %v3661 = vld [vmem:[#allocation12 + $0x44] sm:$0xf]
    %v3662 = vld [vmem:[#allocation12 + $0x48] sm:$0xf]
    %v3663 = vld [vmem:[#allocation12 + $0x4c] sm:$0xf]
    %v3664 = vld [vmem:[#allocation12 + $0x50] sm:$0xf]
    %v3665 = vld [vmem:[#allocation12 + $0x54] sm:$0xf]
    %v3666 = vld [vmem:[#allocation12 + $0x58] sm:$0xf]
    %v3667 = vld [vmem:[#allocation12 + $0x5c] sm:$0xf]
    %v3668 = vld [vmem:[#allocation12 + $0x60] sm:$0xf]
    %v3669 = vld [vmem:[#allocation12 + $0x64] sm:$0xf]
    %v3670 = vld [vmem:[#allocation12 + $0x68] sm:$0xf]
    %v3671 = vld [vmem:[#allocation12 + $0x6c] sm:$0xf]
    %v3672 = vld [vmem:[#allocation12 + $0x70] sm:$0xf]
    %v3673 = vld [vmem:[#allocation12 + $0x74] sm:$0xf]
    %v3674 = vld [vmem:[#allocation12 + $0x78] sm:$0xf]
    %v3675 = vld [vmem:[#allocation12 + $0x7c] sm:$0xf]
    %v3676 = vld [vmem:[#allocation12 + $0x80] sm:$0xf]
    %v3677 = vld [vmem:[#allocation12 + $0x84] sm:$0xf]
    %v3678 = vld [vmem:[#allocation12 + $0x88] sm:$0xf]
    %v3679 = vld [vmem:[#allocation12 + $0x8c] sm:$0xf]
    %v3680 = vld [vmem:[#allocation12 + $0x90] sm:$0xf]
    %v3681 = vld [vmem:[#allocation12 + $0x94] sm:$0xf]
    %v3682 = vld [vmem:[#allocation12 + $0x98] sm:$0xf]
    %v3683 = vld [vmem:[#allocation12 + $0x9c] sm:$0xf]
    %v3684 = vld [vmem:[#allocation12 + $0xa0] sm:$0xf]
    %v3685 = vld [vmem:[#allocation12 + $0xa4] sm:$0xf]
    %v3686 = vld [vmem:[#allocation12 + $0xa8] sm:$0xf]
    %v3687 = vld [vmem:[#allocation12 + $0xac] sm:$0xf]
    %v3688 = vld [vmem:[#allocation12 + $0xb0] sm:$0xf]
    %v3689 = vld [vmem:[#allocation12 + $0xb4] sm:$0xf]
    %v3690 = vld [vmem:[#allocation12 + $0xb8] sm:$0xf]
    %v3691 = vld [vmem:[#allocation12 + $0xbc] sm:$0xf]
    %v3692 = vld [vmem:[#allocation12 + $0xc0] sm:$0xf]
    %v3693 = vld [vmem:[#allocation12 + $0xc4] sm:$0xf]
    %v3694 = vld [vmem:[#allocation12 + $0xc8] sm:$0xf]
    %v3695 = vld [vmem:[#allocation12 + $0xcc] sm:$0xf]
    %v3696 = vld [vmem:[#allocation12 + $0xd0] sm:$0xf]
    %v3697 = vld [vmem:[#allocation12 + $0xd4] sm:$0xf]
    %v3698 = vld [vmem:[#allocation12 + $0xd8] sm:$0xf]
    %v3699 = vld [vmem:[#allocation12 + $0xdc] sm:$0xf]
    %v3700 = vld [vmem:[#allocation12 + $0xe0] sm:$0xf]
    %v3701 = vld [vmem:[#allocation12 + $0xe4] sm:$0xf]
    %v3702 = vld [vmem:[#allocation12 + $0xe8] sm:$0xf]
    %v3703 = vld [vmem:[#allocation12 + $0xec] sm:$0xf]
    %v3704 = vld [vmem:[#allocation12 + $0xf0] sm:$0xf]
    %v3705 = vld [vmem:[#allocation12 + $0xf4] sm:$0xf]
    %v3706 = vld [vmem:[#allocation12 + $0xf8] sm:$0xf]
    %v3707 = vld [vmem:[#allocation12 + $0xfc] sm:$0xf]
    %v3708 = vld [vmem:[#allocation12 + $0x100] sm:$0xf]
    %v3709 = vld [vmem:[#allocation12 + $0x104] sm:$0xf]
    %v3710 = vld [vmem:[#allocation12 + $0x108] sm:$0xf]
    %v3711 = vld [vmem:[#allocation12 + $0x10c] sm:$0xf]
    %v3712 = vld [vmem:[#allocation12 + $0x110] sm:$0xf]
    %v3713 = vld [vmem:[#allocation12 + $0x114] sm:$0xf]
    %v3714 = vld [vmem:[#allocation12 + $0x118] sm:$0xf]
    %v3715 = vld [vmem:[#allocation12 + $0x11c] sm:$0xf]
    %v3716 = vld [vmem:[#allocation12 + $0x120] sm:$0xf]
    %v3717 = vld [vmem:[#allocation12 + $0x124] sm:$0xf]
    %v3718 = vld [vmem:[#allocation12 + $0x128] sm:$0xf]
    %v3719 = vld [vmem:[#allocation12 + $0x12c] sm:$0xf]
    %v3720 = vld [vmem:[#allocation12 + $0x130] sm:$0xf]
    %v3721 = vld [vmem:[#allocation12 + $0x134] sm:$0xf]
    %v3722 = vld [vmem:[#allocation12 + $0x138] sm:$0xf]
    %v3723 = vld [vmem:[#allocation12 + $0x13c] sm:$0xf]
    %v3724 = vld [vmem:[#allocation12 + $0x140] sm:$0xf]
    %v3725 = vld [vmem:[#allocation12 + $0x144] sm:$0xf]
    %v3726 = vld [vmem:[#allocation12 + $0x148] sm:$0xf]
    %v3727 = vld [vmem:[#allocation12 + $0x14c] sm:$0xf]
    %v3728 = vld [vmem:[#allocation12 + $0x150] sm:$0xf]
    %v3729 = vld [vmem:[#allocation12 + $0x154] sm:$0xf]
    %v3730 = vld [vmem:[#allocation12 + $0x158] sm:$0xf]
    %v3731 = vld [vmem:[#allocation12 + $0x15c] sm:$0xf]
    %v3732 = vld [vmem:[#allocation12 + $0x160] sm:$0xf]
    %v3733 = vld [vmem:[#allocation12 + $0x164] sm:$0xf]
    %v3734 = vld [vmem:[#allocation12 + $0x168] sm:$0xf]
    %v3735 = vld [vmem:[#allocation12 + $0x16c] sm:$0xf]
    %v3736 = vld [vmem:[#allocation12 + $0x170] sm:$0xf]
    %v3737 = vld [vmem:[#allocation12 + $0x174] sm:$0xf]
    %v3738 = vld [vmem:[#allocation12 + $0x178] sm:$0xf]
    %v3739 = vld [vmem:[#allocation12 + $0x17c] sm:$0xf]
    %v3740 = vld [vmem:[#allocation12 + $0x180] sm:$0xf]
    %v3741 = vld [vmem:[#allocation12 + $0x184] sm:$0xf]
    %v3742 = vld [vmem:[#allocation12 + $0x188] sm:$0xf]
    %v3743 = vld [vmem:[#allocation12 + $0x18c] sm:$0xf]
    %v3744 = vld [vmem:[#allocation12 + $0x190] sm:$0xf]
    %v3745 = vld [vmem:[#allocation12 + $0x194] sm:$0xf]
    %v3746 = vld [vmem:[#allocation12 + $0x198] sm:$0xf]
    %v3747 = vld [vmem:[#allocation12 + $0x19c] sm:$0xf]
    %v3748 = vld [vmem:[#allocation12 + $0x1a0] sm:$0xf]
    %v3749 = vld [vmem:[#allocation12 + $0x1a4] sm:$0xf]
    %v3750 = vld [vmem:[#allocation12 + $0x1a8] sm:$0xf]
    %v3751 = vld [vmem:[#allocation12 + $0x1ac] sm:$0xf]
    %v3752 = vld [vmem:[#allocation12 + $0x1b0] sm:$0xf]
    %v3753 = vld [vmem:[#allocation12 + $0x1b4] sm:$0xf]
    %v3754 = vld [vmem:[#allocation12 + $0x1b8] sm:$0xf]
    %v3755 = vld [vmem:[#allocation12 + $0x1bc] sm:$0xf]
    %v3756 = vld [vmem:[#allocation12 + $0x1c0] sm:$0xf]
    %v3757 = vld [vmem:[#allocation12 + $0x1c4] sm:$0xf]
    %v3758 = vld [vmem:[#allocation12 + $0x1c8] sm:$0xf]
    %v3759 = vld [vmem:[#allocation12 + $0x1cc] sm:$0xf]
    %v3760 = vld [vmem:[#allocation12 + $0x1d0] sm:$0xf]
    %v3761 = vld [vmem:[#allocation12 + $0x1d4] sm:$0xf]
    %v3762 = vld [vmem:[#allocation12 + $0x1d8] sm:$0xf]
    %v3763 = vld [vmem:[#allocation12 + $0x1dc] sm:$0xf]
    %v3764 = vld [vmem:[#allocation12 + $0x1e0] sm:$0xf]
    %v3765 = vld [vmem:[#allocation12 + $0x1e4] sm:$0xf]
    %v3766 = vld [vmem:[#allocation12 + $0x1e8] sm:$0xf]
    %v3767 = vld [vmem:[#allocation12 + $0x1ec] sm:$0xf]
    %v3768 = vld [vmem:[#allocation12 + $0x1f0] sm:$0xf]
    %v3769 = vld [vmem:[#allocation12 + $0x1f4] sm:$0xf]
    %v3770 = vld [vmem:[#allocation12 + $0x1f8] sm:$0xf]
    %v3771 = vld [vmem:[#allocation12 + $0x1fc] sm:$0xf]
    %v3772 = vld [vmem:[%s10] sm:$0x1]
    %v3774 = vlaneseq
    %v3775 = vshrl.u32 %v3774, 7
    %v3776 = vsub.s32 0, %v3775
    %v3777 = vrot.slane %v3772, %v3776
    %v3907 = vunpack.c.l.b16 %v3644
    %v3908 = vunpack.c.l.b16 %v3645
    %v3909 = vunpack.c.l.b16 %v3646
    %v3910 = vunpack.c.l.b16 %v3647
    %v3911 = vunpack.c.l.b16 %v3648
    %v3912 = vunpack.c.l.b16 %v3649
    %v3913 = vunpack.c.l.b16 %v3650
    %v3914 = vunpack.c.l.b16 %v3651
    %v3915 = vunpack.c.l.b16 %v3652
    %v3916 = vunpack.c.l.b16 %v3653
    %v3917 = vunpack.c.l.b16 %v3654
    %v3918 = vunpack.c.l.b16 %v3655
    %v3919 = vunpack.c.l.b16 %v3656
    %v3920 = vunpack.c.l.b16 %v3657
    %v3921 = vunpack.c.l.b16 %v3658
    %v3922 = vunpack.c.l.b16 %v3659
    %v3923 = vunpack.c.l.b16 %v3660
    %v3924 = vunpack.c.l.b16 %v3661
    %v3925 = vunpack.c.l.b16 %v3662
    %v3926 = vunpack.c.l.b16 %v3663
    %v3927 = vunpack.c.l.b16 %v3664
    %v3928 = vunpack.c.l.b16 %v3665
    %v3929 = vunpack.c.l.b16 %v3666
    %v3930 = vunpack.c.l.b16 %v3667
    %v3931 = vunpack.c.l.b16 %v3668
    %v3932 = vunpack.c.l.b16 %v3669
    %v3933 = vunpack.c.l.b16 %v3670
    %v3934 = vunpack.c.l.b16 %v3671
    %v3935 = vunpack.c.l.b16 %v3672
    %v3936 = vunpack.c.l.b16 %v3673
    %v3937 = vunpack.c.l.b16 %v3674
    %v3938 = vunpack.c.l.b16 %v3675
    %v3939 = vunpack.c.l.b16 %v3676
    %v3940 = vunpack.c.l.b16 %v3677
    %v3941 = vunpack.c.l.b16 %v3678
    %v3942 = vunpack.c.l.b16 %v3679
    %v3943 = vunpack.c.l.b16 %v3680
    %v3944 = vunpack.c.l.b16 %v3681
    %v3945 = vunpack.c.l.b16 %v3682
    %v3946 = vunpack.c.l.b16 %v3683
    %v3947 = vunpack.c.l.b16 %v3684
    %v3948 = vunpack.c.l.b16 %v3685
    %v3949 = vunpack.c.l.b16 %v3686
    %v3950 = vunpack.c.l.b16 %v3687
    %v3951 = vunpack.c.l.b16 %v3688
    %v3952 = vunpack.c.l.b16 %v3689
    %v3953 = vunpack.c.l.b16 %v3690
    %v3954 = vunpack.c.l.b16 %v3691
    %v3955 = vunpack.c.l.b16 %v3692
    %v3956 = vunpack.c.l.b16 %v3693
    %v3957 = vunpack.c.l.b16 %v3694
    %v3958 = vunpack.c.l.b16 %v3695
    %v3959 = vunpack.c.l.b16 %v3696
    %v3960 = vunpack.c.l.b16 %v3697
    %v3961 = vunpack.c.l.b16 %v3698
    %v3962 = vunpack.c.l.b16 %v3699
    %v3963 = vunpack.c.l.b16 %v3700
    %v3964 = vunpack.c.l.b16 %v3701
    %v3965 = vunpack.c.l.b16 %v3702
    %v3966 = vunpack.c.l.b16 %v3703
    %v3967 = vunpack.c.l.b16 %v3704
    %v3968 = vunpack.c.l.b16 %v3705
    %v3969 = vunpack.c.l.b16 %v3706
    %v3970 = vunpack.c.l.b16 %v3707
    %v3971 = vunpack.c.l.b16 %v3708
    %v3972 = vunpack.c.l.b16 %v3709
    %v3973 = vunpack.c.l.b16 %v3710
    %v3974 = vunpack.c.l.b16 %v3711
    %v3975 = vunpack.c.l.b16 %v3712
    %v3976 = vunpack.c.l.b16 %v3713
    %v3977 = vunpack.c.l.b16 %v3714
    %v3978 = vunpack.c.l.b16 %v3715
    %v3979 = vunpack.c.l.b16 %v3716
    %v3980 = vunpack.c.l.b16 %v3717
    %v3981 = vunpack.c.l.b16 %v3718
    %v3982 = vunpack.c.l.b16 %v3719
    %v3983 = vunpack.c.l.b16 %v3720
    %v3984 = vunpack.c.l.b16 %v3721
    %v3985 = vunpack.c.l.b16 %v3722
    %v3986 = vunpack.c.l.b16 %v3723
    %v3987 = vunpack.c.l.b16 %v3724
    %v3988 = vunpack.c.l.b16 %v3725
    %v3989 = vunpack.c.l.b16 %v3726
    %v3990 = vunpack.c.l.b16 %v3727
    %v3991 = vunpack.c.l.b16 %v3728
    %v3992 = vunpack.c.l.b16 %v3729
    %v3993 = vunpack.c.l.b16 %v3730
    %v3994 = vunpack.c.l.b16 %v3731
    %v3995 = vunpack.c.l.b16 %v3732
    %v3996 = vunpack.c.l.b16 %v3733
    %v3997 = vunpack.c.l.b16 %v3734
    %v3998 = vunpack.c.l.b16 %v3735
    %v3999 = vunpack.c.l.b16 %v3736
    %v4000 = vunpack.c.l.b16 %v3737
    %v4001 = vunpack.c.l.b16 %v3738
    %v4002 = vunpack.c.l.b16 %v3739
    %v4003 = vunpack.c.l.b16 %v3740
    %v4004 = vunpack.c.l.b16 %v3741
    %v4005 = vunpack.c.l.b16 %v3742
    %v4006 = vunpack.c.l.b16 %v3743
    %v4007 = vunpack.c.l.b16 %v3744
    %v4008 = vunpack.c.l.b16 %v3745
    %v4009 = vunpack.c.l.b16 %v3746
    %v4010 = vunpack.c.l.b16 %v3747
    %v4011 = vunpack.c.l.b16 %v3748
    %v4012 = vunpack.c.l.b16 %v3749
    %v4013 = vunpack.c.l.b16 %v3750
    %v4014 = vunpack.c.l.b16 %v3751
    %v4015 = vunpack.c.l.b16 %v3752
    %v4016 = vunpack.c.l.b16 %v3753
    %v4017 = vunpack.c.l.b16 %v3754
    %v4018 = vunpack.c.l.b16 %v3755
    %v4019 = vunpack.c.l.b16 %v3756
    %v4020 = vunpack.c.l.b16 %v3757
    %v4021 = vunpack.c.l.b16 %v3758
    %v4022 = vunpack.c.l.b16 %v3759
    %v4023 = vunpack.c.l.b16 %v3760
    %v4024 = vunpack.c.l.b16 %v3761
    %v4025 = vunpack.c.l.b16 %v3762
    %v4026 = vunpack.c.l.b16 %v3763
    %v4027 = vunpack.c.l.b16 %v3764
    %v4028 = vunpack.c.l.b16 %v3765
    %v4029 = vunpack.c.l.b16 %v3766
    %v4030 = vunpack.c.l.b16 %v3767
    %v4031 = vunpack.c.l.b16 %v3768
    %v4032 = vunpack.c.l.b16 %v3769
    %v4033 = vunpack.c.l.b16 %v3770
    %v4034 = vunpack.c.l.b16 %v3771
    %v4035 = vpack.c.b16 %v3908, %v3907
    %v4036 = vpack.c.b16 %v3910, %v3909
    %v4037 = vpack.c.b16 %v3912, %v3911
    %v4038 = vpack.c.b16 %v3914, %v3913
    %v4039 = vpack.c.b16 %v3916, %v3915
    %v4040 = vpack.c.b16 %v3918, %v3917
    %v4041 = vpack.c.b16 %v3920, %v3919
    %v4042 = vpack.c.b16 %v3922, %v3921
    %v4043 = vpack.c.b16 %v3924, %v3923
    %v4044 = vpack.c.b16 %v3926, %v3925
    %v4045 = vpack.c.b16 %v3928, %v3927
    %v4046 = vpack.c.b16 %v3930, %v3929
    %v4047 = vpack.c.b16 %v3932, %v3931
    %v4048 = vpack.c.b16 %v3934, %v3933
    %v4049 = vpack.c.b16 %v3936, %v3935
    %v4050 = vpack.c.b16 %v3938, %v3937
    %v4051 = vpack.c.b16 %v3940, %v3939
    %v4052 = vpack.c.b16 %v3942, %v3941
    %v4053 = vpack.c.b16 %v3944, %v3943
    %v4054 = vpack.c.b16 %v3946, %v3945
    %v4055 = vpack.c.b16 %v3948, %v3947
    %v4056 = vpack.c.b16 %v3950, %v3949
    %v4057 = vpack.c.b16 %v3952, %v3951
    %v4058 = vpack.c.b16 %v3954, %v3953
    %v4059 = vpack.c.b16 %v3956, %v3955
    %v4060 = vpack.c.b16 %v3958, %v3957
    %v4061 = vpack.c.b16 %v3960, %v3959
    %v4062 = vpack.c.b16 %v3962, %v3961
    %v4063 = vpack.c.b16 %v3964, %v3963
    %v4064 = vpack.c.b16 %v3966, %v3965
    %v4065 = vpack.c.b16 %v3968, %v3967
    %v4066 = vpack.c.b16 %v3970, %v3969
    %v4067 = vpack.c.b16 %v3972, %v3971
    %v4068 = vpack.c.b16 %v3974, %v3973
    %v4069 = vpack.c.b16 %v3976, %v3975
    %v4070 = vpack.c.b16 %v3978, %v3977
    %v4071 = vpack.c.b16 %v3980, %v3979
    %v4072 = vpack.c.b16 %v3982, %v3981
    %v4073 = vpack.c.b16 %v3984, %v3983
    %v4074 = vpack.c.b16 %v3986, %v3985
    %v4075 = vpack.c.b16 %v3988, %v3987
    %v4076 = vpack.c.b16 %v3990, %v3989
    %v4077 = vpack.c.b16 %v3992, %v3991
    %v4078 = vpack.c.b16 %v3994, %v3993
    %v4079 = vpack.c.b16 %v3996, %v3995
    %v4080 = vpack.c.b16 %v3998, %v3997
    %v4081 = vpack.c.b16 %v4000, %v3999
    %v4082 = vpack.c.b16 %v4002, %v4001
    %v4083 = vpack.c.b16 %v4004, %v4003
    %v4084 = vpack.c.b16 %v4006, %v4005
    %v4085 = vpack.c.b16 %v4008, %v4007
    %v4086 = vpack.c.b16 %v4010, %v4009
    %v4087 = vpack.c.b16 %v4012, %v4011
    %v4088 = vpack.c.b16 %v4014, %v4013
    %v4089 = vpack.c.b16 %v4016, %v4015
    %v4090 = vpack.c.b16 %v4018, %v4017
    %v4091 = vpack.c.b16 %v4020, %v4019
    %v4092 = vpack.c.b16 %v4022, %v4021
    %v4093 = vpack.c.b16 %v4024, %v4023
    %v4094 = vpack.c.b16 %v4026, %v4025
    %v4095 = vpack.c.b16 %v4028, %v4027
    %v4096 = vpack.c.b16 %v4030, %v4029
    %v4097 = vpack.c.b16 %v4032, %v4031
    %v4098 = vpack.c.b16 %v4034, %v4033
    %4163 = vmatprep.subr.bf16.mxu0 0
    %4164 = vmatpush1.bf16.msra.mxu0 %v4035
    %4165 = vmatprep.subr.bf16.mxu0 0
    %4166 = vmatpush1.bf16.msra.mxu0 %v4036
    %4167 = vmatprep.subr.bf16.mxu0 0
    %4168 = vmatpush1.bf16.msra.mxu0 %v4037
    %4169 = vmatprep.subr.bf16.mxu0 0
    %4170 = vmatpush1.bf16.msra.mxu0 %v4038
    %4171 = vmatprep.subr.bf16.mxu0 0
    %4172 = vmatpush1.bf16.msra.mxu0 %v4039
    %4173 = vmatprep.subr.bf16.mxu0 0
    %4174 = vmatpush1.bf16.msra.mxu0 %v4040
    %4175 = vmatprep.subr.bf16.mxu0 0
    %4176 = vmatpush1.bf16.msra.mxu0 %v4041
    %4177 = vmatprep.subr.bf16.mxu0 0
    %4178 = vmatpush1.bf16.msra.mxu0 %v4042
    %4179 = vmatprep.subr.bf16.mxu0 0
    %4180 = vmatpush1.bf16.msra.mxu0 %v4043
    %4181 = vmatprep.subr.bf16.mxu0 0
    %4182 = vmatpush1.bf16.msra.mxu0 %v4044
    %4183 = vmatprep.subr.bf16.mxu0 0
    %4184 = vmatpush1.bf16.msra.mxu0 %v4045
    %4185 = vmatprep.subr.bf16.mxu0 0
    %4186 = vmatpush1.bf16.msra.mxu0 %v4046
    %4187 = vmatprep.subr.bf16.mxu0 0
    %4188 = vmatpush1.bf16.msra.mxu0 %v4047
    %4189 = vmatprep.subr.bf16.mxu0 0
    %4190 = vmatpush1.bf16.msra.mxu0 %v4048
    %4191 = vmatprep.subr.bf16.mxu0 0
    %4192 = vmatpush1.bf16.msra.mxu0 %v4049
    %4193 = vmatprep.subr.bf16.mxu0 0
    %4194 = vmatpush1.bf16.msra.mxu0 %v4050
    %4195 = vmatprep.mubr.bf16.mxu0 %v3637
    %4196 = vmatmul.mubr.bf16.gmra.mrb[0].mxu0 %v3636
    %v4197 = vpop.f32.mrb[0].mxu0
    %v4198 = vadd.f32 %v3777, %v4197
    %v4199 = vpop.f32.mrb[0].mxu0
    %v4200 = vpop.f32.mrb[0].mxu0
    %v4201 = vpop.f32.mrb[0].mxu0
    %4202 = vdwg.mxu0
    %4203 = vmatprep.subr.bf16.mxu0 0
    %4204 = vmatpush1.bf16.msra.mxu0 %v4051
    %4205 = vmatprep.subr.bf16.mxu0 0
    %4206 = vmatpush1.bf16.msra.mxu0 %v4052
    %4207 = vmatprep.subr.bf16.mxu0 0
    %4208 = vmatpush1.bf16.msra.mxu0 %v4053
    %4209 = vmatprep.subr.bf16.mxu0 0
    %4210 = vmatpush1.bf16.msra.mxu0 %v4054
    %4211 = vmatprep.subr.bf16.mxu0 0
    %4212 = vmatpush1.bf16.msra.mxu0 %v4055
    %4213 = vmatprep.subr.bf16.mxu0 0
    %4214 = vmatpush1.bf16.msra.mxu0 %v4056
    %4215 = vmatprep.subr.bf16.mxu0 0
    %4216 = vmatpush1.bf16.msra.mxu0 %v4057
    %4217 = vmatprep.subr.bf16.mxu0 0
    %4218 = vmatpush1.bf16.msra.mxu0 %v4058
    %4219 = vmatprep.subr.bf16.mxu0 0
    %4220 = vmatpush1.bf16.msra.mxu0 %v4059
    %4221 = vmatprep.subr.bf16.mxu0 0
    %4222 = vmatpush1.bf16.msra.mxu0 %v4060
    %4223 = vmatprep.subr.bf16.mxu0 0
    %4224 = vmatpush1.bf16.msra.mxu0 %v4061
    %4225 = vmatprep.subr.bf16.mxu0 0
    %4226 = vmatpush1.bf16.msra.mxu0 %v4062
    %4227 = vmatprep.subr.bf16.mxu0 0
    %4228 = vmatpush1.bf16.msra.mxu0 %v4063
    %4229 = vmatprep.subr.bf16.mxu0 0
    %4230 = vmatpush1.bf16.msra.mxu0 %v4064
    %4231 = vmatprep.subr.bf16.mxu0 0
    %4232 = vmatpush1.bf16.msra.mxu0 %v4065
    %4233 = vmatprep.subr.bf16.mxu0 0
    %4234 = vmatpush1.bf16.msra.mxu0 %v4066
    %4235 = vmatprep.mubr.bf16.mxu0 %v3639
    %4236 = vmatmul.mubr.bf16.gmra.mrb[0].mxu0 %v3638
    %v4237 = vpop.f32.mrb[0].mxu0
    %v4238 = vadd.f32 %v4198, %v4237
    %v4239 = vpop.f32.mrb[0].mxu0
    %v4240 = vpop.f32.mrb[0].mxu0
    %v4241 = vpop.f32.mrb[0].mxu0
    %4242 = vdwg.mxu0
    %4243 = vmatprep.subr.bf16.mxu0 0
    %4244 = vmatpush1.bf16.msra.mxu0 %v4067
    %4245 = vmatprep.subr.bf16.mxu0 0
    %4246 = vmatpush1.bf16.msra.mxu0 %v4068
    %4247 = vmatprep.subr.bf16.mxu0 0
    %4248 = vmatpush1.bf16.msra.mxu0 %v4069
    %4249 = vmatprep.subr.bf16.mxu0 0
    %4250 = vmatpush1.bf16.msra.mxu0 %v4070
    %4251 = vmatprep.subr.bf16.mxu0 0
    %4252 = vmatpush1.bf16.msra.mxu0 %v4071
    %4253 = vmatprep.subr.bf16.mxu0 0
    %4254 = vmatpush1.bf16.msra.mxu0 %v4072
    %4255 = vmatprep.subr.bf16.mxu0 0
    %4256 = vmatpush1.bf16.msra.mxu0 %v4073
    %4257 = vmatprep.subr.bf16.mxu0 0
    %4258 = vmatpush1.bf16.msra.mxu0 %v4074
    %4259 = vmatprep.subr.bf16.mxu0 0
    %4260 = vmatpush1.bf16.msra.mxu0 %v4075
    %4261 = vmatprep.subr.bf16.mxu0 0
    %4262 = vmatpush1.bf16.msra.mxu0 %v4076
    %4263 = vmatprep.subr.bf16.mxu0 0
    %4264 = vmatpush1.bf16.msra.mxu0 %v4077
    %4265 = vmatprep.subr.bf16.mxu0 0
    %4266 = vmatpush1.bf16.msra.mxu0 %v4078
    %4267 = vmatprep.subr.bf16.mxu0 0
    %4268 = vmatpush1.bf16.msra.mxu0 %v4079
    %4269 = vmatprep.subr.bf16.mxu0 0
    %4270 = vmatpush1.bf16.msra.mxu0 %v4080
    %4271 = vmatprep.subr.bf16.mxu0 0
    %4272 = vmatpush1.bf16.msra.mxu0 %v4081
    %4273 = vmatprep.subr.bf16.mxu0 0
    %4274 = vmatpush1.bf16.msra.mxu0 %v4082
    %4275 = vmatprep.mubr.bf16.mxu0 %v3641
    %4276 = vmatmul.mubr.bf16.gmra.mrb[0].mxu0 %v3640
    %v4277 = vpop.f32.mrb[0].mxu0
    %v4278 = vadd.f32 %v4238, %v4277
    %v4279 = vpop.f32.mrb[0].mxu0
    %v4280 = vpop.f32.mrb[0].mxu0
    %v4281 = vpop.f32.mrb[0].mxu0
    %4282 = vdwg.mxu0
    %4283 = vmatprep.subr.bf16.mxu0 0
    %4284 = vmatpush1.bf16.msra.mxu0 %v4083
    %4285 = vmatprep.subr.bf16.mxu0 0
    %4286 = vmatpush1.bf16.msra.mxu0 %v4084
    %4287 = vmatprep.subr.bf16.mxu0 0
    %4288 = vmatpush1.bf16.msra.mxu0 %v4085
    %4289 = vmatprep.subr.bf16.mxu0 0
    %4290 = vmatpush1.bf16.msra.mxu0 %v4086
    %4291 = vmatprep.subr.bf16.mxu0 0
    %4292 = vmatpush1.bf16.msra.mxu0 %v4087
    %4293 = vmatprep.subr.bf16.mxu0 0
    %4294 = vmatpush1.bf16.msra.mxu0 %v4088
    %4295 = vmatprep.subr.bf16.mxu0 0
    %4296 = vmatpush1.bf16.msra.mxu0 %v4089
    %4297 = vmatprep.subr.bf16.mxu0 0
    %4298 = vmatpush1.bf16.msra.mxu0 %v4090
    %4299 = vmatprep.subr.bf16.mxu0 0
    %4300 = vmatpush1.bf16.msra.mxu0 %v4091
    %4301 = vmatprep.subr.bf16.mxu0 0
    %4302 = vmatpush1.bf16.msra.mxu0 %v4092
    %4303 = vmatprep.subr.bf16.mxu0 0
    %4304 = vmatpush1.bf16.msra.mxu0 %v4093
    %4305 = vmatprep.subr.bf16.mxu0 0
    %4306 = vmatpush1.bf16.msra.mxu0 %v4094
    %4307 = vmatprep.subr.bf16.mxu0 0
    %4308 = vmatpush1.bf16.msra.mxu0 %v4095
    %4309 = vmatprep.subr.bf16.mxu0 0
    %4310 = vmatpush1.bf16.msra.mxu0 %v4096
    %4311 = vmatprep.subr.bf16.mxu0 0
    %4312 = vmatpush1.bf16.msra.mxu0 %v4097
    %4313 = vmatprep.subr.bf16.mxu0 0
    %4314 = vmatpush1.bf16.msra.mxu0 %v4098
    %4315 = vmatprep.mubr.bf16.mxu0 %v3643
    %4316 = vmatmul.mubr.bf16.gmra.mrb[0].mxu0 %v3642
    %v4317 = vpop.f32.mrb[0].mxu0
    %v4318 = vadd.f32 %v4278, %v4317
    %v4319 = vpop.f32.mrb[0].mxu0
    %v4320 = vpop.f32.mrb[0].mxu0
    %v4321 = vpop.f32.mrb[0].mxu0
    %4322 = vdwg.mxu0
    %4323 = vst [vmem:[%s11] sm:$0xff] %v4318
    // Predicated region
    $region66: #{lstm_model_forward.1} parent=1 // pred_check
      _
    $region67: #{lstm_model_forward.1} parent=1 // pred_check_branch
      %4325 = sbr.rel (0) target = $region69
    $region68: #{lstm_model_forward.1} parent=1 // pred_region
      _
    $region69: #{lstm_model_forward.1} parent=1 // pred_fallthru
      _
    // Predicated region
    $region70: #{lstm_model_forward.1} parent=1 // pred_check
      _
    $region71: #{lstm_model_forward.1} parent=1 // pred_check_branch
      %4327 = sbr.rel (0) target = $region73
    $region72: #{lstm_model_forward.1} parent=1 // pred_region
      _
    $region73: #{lstm_model_forward.1} parent=1 // pred_fallthru
      _
    %4328 = vsyncpa [#allocation6], 1
    %4329 = vsyncpa [#allocation8], 1
    %4330 = vsyncpa [#allocation11], 1

</llo_original>
